<compile_context>
chip_gen: v5e
topology: v5e:2x2
jax: 0.10.0
libtpu: 0.0.40
codegen_flags: <defaults>
</compile_context>

<pallas_src>
import functools
import math

import jax
import jax.numpy as jnp
from jax.experimental import pallas as pl
from jax.experimental.pallas import tpu as pltpu

LN_EPS = 1e-5                      # PyTorch nn.LayerNorm default eps
PREC = jax.lax.Precision.HIGHEST   # for the pure-JAX reference matmuls


# ----------------------------------------------------------------------------
# In-kernel math helpers (VPU / EUP / MXU friendly, no exotic primitives)
# ----------------------------------------------------------------------------
def _erf_f32(z):
    # Abramowitz & Stegun 7.1.26 — max abs error ~1.5e-7 (float32-exact).
    a1, a2, a3, a4, a5 = (0.254829592, -0.284496736, 1.421413741,
                          -1.453152027, 1.061405429)
    p = 0.3275911
    s = jnp.where(z >= 0.0, 1.0, -1.0)
    az = jnp.abs(z)
    t = 1.0 / (1.0 + p * az)
    poly = ((((a5 * t + a4) * t + a3) * t + a2) * t + a1) * t
    return s * (1.0 - poly * jnp.exp(-az * az))


def _gelu_exact(x):
    # PyTorch nn.GELU() default (erf form).
    return 0.5 * x * (1.0 + _erf_f32(x * (1.0 / math.sqrt(2.0))))


def _layer_norm(z, g, b):
    mu = jnp.mean(z, axis=-1, keepdims=True)
    c = z - mu
    var = jnp.mean(c * c, axis=-1, keepdims=True)
    return c * jax.lax.rsqrt(var + LN_EPS) * g + b


# ----------------------------------------------------------------------------
# Fused decoder-layer kernel
# ----------------------------------------------------------------------------
def decoder_layer_kernel(x_ref, m_ref, ln1g_ref, ln1b_ref, wq_ref, wkv_ref,
                         wo_ref, bo_ref, ln2g_ref, ln2b_ref, w1_ref, b1_ref,
                         w2_ref, b2_ref, o_ref, *, B, N, M, heads, dim_head,
                         scale):
    inner = heads * dim_head
    x = x_ref[...]      # (B*N, D)  lane-dense slab
    mm = m_ref[...]     # (B*M, D)

    # --- PreNorm2: ONE shared LayerNorm applied to both x and m -------------
    g1, b1n = ln1g_ref[...], ln1b_ref[...]
    xn = _layer_norm(x, g1, b1n)
    mn = _layer_norm(mm, g1, b1n)

    # --- Attention projections (K/V fused into one MXU matmul) --------------
    q = jnp.dot(xn, wq_ref[...], preferred_element_type=jnp.float32)   # (B*N, inner)
    kv = jnp.dot(mn, wkv_ref[...], preferred_element_type=jnp.float32)  # (B*M, 2*inner)
    k = kv[:, :inner]
    v = kv[:, inner:]

    q3 = q.reshape(B, N, inner)
    k3 = k.reshape(B, M, inner)
    v3 = v.reshape(B, M, inner)

    # --- Per-head scaled-dot-product attention, softmax over keys -----------
    head_outs = []
    for h in range(heads):
        lo, hi = h * dim_head, (h + 1) * dim_head
        qh, kh, vh = q3[:, :, lo:hi], k3[:, :, lo:hi], v3[:, :, lo:hi]
        dots = jnp.einsum("bnd,bmd->bnm", qh, kh,
                          preferred_element_type=jnp.float32) * scale
        dots = dots - jnp.max(dots, axis=-1, keepdims=True)
        e = jnp.exp(dots)
        attn = e / jnp.sum(e, axis=-1, keepdims=True)
        head_outs.append(jnp.einsum("bnm,bmd->bnd", attn, vh,
                                    preferred_element_type=jnp.float32))
    attn_out = jnp.concatenate(head_outs, axis=-1).reshape(B * N, inner)

    # --- Output projection + Residual2 ---------------------------------------
    attn_out = jnp.dot(attn_out, wo_ref[...],
                       preferred_element_type=jnp.float32) + bo_ref[...]
    x = x + attn_out

    # --- PreNorm + FeedForward (Linear -> exact GELU -> Linear) + Residual ---
    xn2 = _layer_norm(x, ln2g_ref[...], ln2b_ref[...])
    hdn = jnp.dot(xn2, w1_ref[...], preferred_element_type=jnp.float32) + b1_ref[...]
    hdn = _gelu_exact(hdn)
    ff = jnp.dot(hdn, w2_ref[...], preferred_element_type=jnp.float32) + b2_ref[...]

    o_ref[...] = (x + ff).astype(o_ref.dtype)


def decoder_layer(x2d, m2d, p, *, B, N, M, heads, dim_head, scale):
    D = x2d.shape[-1]
    inner = heads * dim_head
    mlp = p["w1"].shape[-1]
    bn, bm = B * N, B * M

    inputs = (x2d, m2d, p["ln1_g"], p["ln1_b"], p["wq"], p["wkv"], p["wo"],
              p["bo"], p["ln2_g"], p["ln2_b"], p["w1"], p["b1"], p["w2"],
              p["b2"])

    flops = 2 * (bn * D * inner            # q projection
                 + bm * D * 2 * inner      # fused k/v projection
                 + 2 * B * heads * N * M * dim_head  # qk^T and attn@v
                 + bn * inner * D          # output projection
                 + bn * D * mlp + bn * mlp * D)      # feed-forward
    transcendentals = B * heads * N * M + bn * mlp + (2 * bn + bm)
    bytes_accessed = 4 * (sum(int(a.size) for a in inputs) + bn * D)

    kernel = functools.partial(decoder_layer_kernel, B=B, N=N, M=M,
                               heads=heads, dim_head=dim_head, scale=scale)
    return pl.pallas_call(
        kernel,
        out_shape=jax.ShapeDtypeStruct((bn, D), x2d.dtype),
        in_specs=[pl.BlockSpec(memory_space=pltpu.MemorySpace.VMEM)
                  for _ in inputs],
        out_specs=pl.BlockSpec(memory_space=pltpu.MemorySpace.VMEM),
        cost_estimate=pl.CostEstimate(flops=int(flops),
                                      transcendentals=int(transcendentals),
                                      bytes_accessed=int(bytes_accessed)),
    )(*inputs)


def transformer_decoder(x, m, layers, *, heads, dim_head):
    B, N, D = x.shape
    M = m.shape[1]
    scale = D ** (-0.5)          # NB: module scales by dim, not dim_head
    x2d = x.reshape(B * N, D)    # lane-dense slabs (last dim = D = 128)
    m2d = m.reshape(B * M, D)
    for p in layers:
        x2d = decoder_layer(x2d, m2d, p, B=B, N=N, M=M, heads=heads,
                            dim_head=dim_head, scale=scale)
    return x2d.reshape(B, N, D)


# ----------------------------------------------------------------------------
# Pure-JAX reference (mirrors the PyTorch forward exactly; HIGHEST precision
# matmuls so the comparison is against true f32 math)
# ----------------------------------------------------------------------------
def transformer_decoder_ref(x, m, layers, *, heads, dim_head):
    B, N, D = x.shape
    M = m.shape[1]
    inner = heads * dim_head
    scale = D ** (-0.5)

    def ln(z, g, b):
        mu = z.mean(-1, keepdims=True)
        var = ((z - mu) ** 2).mean(-1, keepdims=True)
        return (z - mu) / jnp.sqrt(var + LN_EPS) * g + b

    def mm_(a, w):
        return jnp.matmul(a, w, precision=PREC)

    for p in layers:
        xn = ln(x, p["ln1_g"], p["ln1_b"])
        mn = ln(m, p["ln1_g"], p["ln1_b"])
        q = mm_(xn, p["wq"])
        kv = mm_(mn, p["wkv"])
        k, v = kv[..., :inner], kv[..., inner:]
        q = q.reshape(B, N, heads, dim_head).transpose(0, 2, 1, 3)
        k = k.reshape(B, M, heads, dim_head).transpose(0, 2, 1, 3)
        v = v.reshape(B, M, heads, dim_head).transpose(0, 2, 1, 3)
        dots = jnp.einsum("bhnd,bhmd->bhnm", q, k, precision=PREC) * scale
        attn = jax.nn.softmax(dots, axis=-1)
        o = jnp.einsum("bhnm,bhmd->bhnd", attn, v, precision=PREC)
        o = o.transpose(0, 2, 1, 3).reshape(B, N, inner)
        x = x + (mm_(o, p["wo"]) + p["bo"])
        xn2 = ln(x, p["ln2_g"], p["ln2_b"])
        h = jax.nn.gelu(mm_(xn2, p["w1"]) + p["b1"], approximate=False)
        x = x + (mm_(h, p["w2"]) + p["b2"])
    return x


# ----------------------------------------------------------------------------
# Parameter construction
# ----------------------------------------------------------------------------
def init_layer_params(key, dim, heads, dim_head, mlp_dim):
    inner = heads * dim_head
    ks = jax.random.split(key, 12)

    def w(k, din, dout):
        return (jax.random.normal(k, (din, dout), jnp.float32)
                * (1.0 / math.sqrt(din)))

    return {
        "ln1_g": 1.0 + 0.1 * jax.random.normal(ks[0], (1, dim), jnp.float32),
        "ln1_b": 0.1 * jax.random.normal(ks[1], (1, dim), jnp.float32),
        "wq": w(ks[2], dim, inner),
        "wkv": jnp.concatenate([w(ks[3], dim, inner), w(ks[4], dim, inner)],
                               axis=1),
        "wo": w(ks[5], inner, dim),
        "bo": 0.02 * jax.random.normal(ks[6], (1, dim), jnp.float32),
        "ln2_g": 1.0 + 0.1 * jax.random.normal(ks[7], (1, dim), jnp.float32),
        "ln2_b": 0.1 * jax.random.normal(ks[8], (1, dim), jnp.float32),
        "w1": w(ks[9], dim, mlp_dim),
        "b1": 0.02 * jax.random.normal(ks[10], (1, mlp_dim), jnp.float32),
        "w2": w(ks[11], mlp_dim, dim),
        "b2": jnp.zeros((1, dim), jnp.float32),
    }


if __name__ == "__main__":
    # Small but lane-dense config: dim = heads * dim_head = 128.
    B, N, M_seq = 2, 8, 8
    dim, heads, dim_head, mlp_dim, depth = 128, 4, 32, 256, 2

    key = jax.random.PRNGKey(0)
    kx, km, kp = jax.random.split(key, 3)
    x = jax.random.normal(kx, (B, N, dim), jnp.float32)
    m = jax.random.normal(km, (B, M_seq, dim), jnp.float32)
    layers = [init_layer_params(k, dim, heads, dim_head, mlp_dim)
              for k in jax.random.split(kp, depth)]

    run = jax.jit(functools.partial(transformer_decoder, heads=heads,
                                    dim_head=dim_head))
    out = jax.block_until_ready(run(x, m, layers))

    ref = transformer_decoder_ref(x, m, layers, heads=heads,
                                  dim_head=dim_head)
    assert out.shape == x.shape and out.dtype == x.dtype
    max_err = float(jnp.max(jnp.abs(out - ref)))
    assert max_err < 1e-3, f"max abs err {max_err}"

    print("KERNEL_OK")
</pallas_src>

<mosaic_0001>
module attributes {stable_mosaic.version = 11 : i64} {
  func.func @decoder_layer_kernel(%arg0: memref<16x128xf32, #tpu.memory_space<vmem>>, %arg1: memref<16x128xf32, #tpu.memory_space<vmem>>, %arg2: memref<1x128xf32, #tpu.memory_space<vmem>>, %arg3: memref<1x128xf32, #tpu.memory_space<vmem>>, %arg4: memref<128x128xf32, #tpu.memory_space<vmem>>, %arg5: memref<128x256xf32, #tpu.memory_space<vmem>>, %arg6: memref<128x128xf32, #tpu.memory_space<vmem>>, %arg7: memref<1x128xf32, #tpu.memory_space<vmem>>, %arg8: memref<1x128xf32, #tpu.memory_space<vmem>>, %arg9: memref<1x128xf32, #tpu.memory_space<vmem>>, %arg10: memref<128x256xf32, #tpu.memory_space<vmem>>, %arg11: memref<1x256xf32, #tpu.memory_space<vmem>>, %arg12: memref<256x128xf32, #tpu.memory_space<vmem>>, %arg13: memref<1x128xf32, #tpu.memory_space<vmem>>, %arg14: memref<16x128xf32, #tpu.memory_space<vmem>>) attributes {dimension_semantics = [], scalar_prefetch = 0 : i64, scratch_operands = 0 : i64, tpu.core_type = #tpu.core_type<tc>} {
    %c0 = arith.constant 0 : index
    %c0_0 = arith.constant 0 : index
    %0 = vector.load %arg0[%c0, %c0_0] : memref<16x128xf32, #tpu.memory_space<vmem>>, vector<16x128xf32>
    %c0_1 = arith.constant 0 : index
    %c0_2 = arith.constant 0 : index
    %1 = vector.load %arg1[%c0_1, %c0_2] : memref<16x128xf32, #tpu.memory_space<vmem>>, vector<16x128xf32>
    %c0_3 = arith.constant 0 : index
    %c0_4 = arith.constant 0 : index
    %2 = vector.load %arg2[%c0_3, %c0_4] : memref<1x128xf32, #tpu.memory_space<vmem>>, vector<1x128xf32>
    %c0_5 = arith.constant 0 : index
    %c0_6 = arith.constant 0 : index
    %3 = vector.load %arg3[%c0_5, %c0_6] : memref<1x128xf32, #tpu.memory_space<vmem>>, vector<1x128xf32>
    %cst = arith.constant dense<0.000000e+00> : vector<16xf32>
    %4 = vector.multi_reduction <add>, %0, %cst [1] : vector<16x128xf32> to vector<16xf32>
    %5 = vector.shape_cast %4 : vector<16xf32> to vector<16x1xf32>
    %cst_7 = arith.constant 1.280000e+02 : f32
    %6 = vector.broadcast %cst_7 : f32 to vector<16x1xf32>
    %7 = arith.divf %5, %6 : vector<16x1xf32>
    %8 = vector.broadcast %7 : vector<16x1xf32> to vector<16x128xf32>
    %9 = arith.subf %0, %8 : vector<16x128xf32>
    %10 = arith.mulf %9, %9 : vector<16x128xf32>
    %cst_8 = arith.constant dense<0.000000e+00> : vector<16xf32>
    %11 = vector.multi_reduction <add>, %10, %cst_8 [1] : vector<16x128xf32> to vector<16xf32>
    %12 = vector.shape_cast %11 : vector<16xf32> to vector<16x1xf32>
    %cst_9 = arith.constant 1.280000e+02 : f32
    %13 = vector.broadcast %cst_9 : f32 to vector<16x1xf32>
    %14 = arith.divf %12, %13 : vector<16x1xf32>
    %cst_10 = arith.constant 9.99999974E-6 : f32
    %15 = vector.broadcast %cst_10 : f32 to vector<16x1xf32>
    %16 = arith.addf %14, %15 : vector<16x1xf32>
    %17 = math.rsqrt %16 : vector<16x1xf32>
    %18 = vector.broadcast %17 : vector<16x1xf32> to vector<16x128xf32>
    %19 = arith.mulf %9, %18 : vector<16x128xf32>
    %20 = vector.broadcast %2 : vector<1x128xf32> to vector<16x128xf32>
    %21 = arith.mulf %19, %20 : vector<16x128xf32>
    %22 = vector.broadcast %3 : vector<1x128xf32> to vector<16x128xf32>
    %23 = arith.addf %21, %22 : vector<16x128xf32>
    %cst_11 = arith.constant dense<0.000000e+00> : vector<16xf32>
    %24 = vector.multi_reduction <add>, %1, %cst_11 [1] : vector<16x128xf32> to vector<16xf32>
    %25 = vector.shape_cast %24 : vector<16xf32> to vector<16x1xf32>
    %cst_12 = arith.constant 1.280000e+02 : f32
    %26 = vector.broadcast %cst_12 : f32 to vector<16x1xf32>
    %27 = arith.divf %25, %26 : vector<16x1xf32>
    %28 = vector.broadcast %27 : vector<16x1xf32> to vector<16x128xf32>
    %29 = arith.subf %1, %28 : vector<16x128xf32>
    %30 = arith.mulf %29, %29 : vector<16x128xf32>
    %cst_13 = arith.constant dense<0.000000e+00> : vector<16xf32>
    %31 = vector.multi_reduction <add>, %30, %cst_13 [1] : vector<16x128xf32> to vector<16xf32>
    %32 = vector.shape_cast %31 : vector<16xf32> to vector<16x1xf32>
    %cst_14 = arith.constant 1.280000e+02 : f32
    %33 = vector.broadcast %cst_14 : f32 to vector<16x1xf32>
    %34 = arith.divf %32, %33 : vector<16x1xf32>
    %cst_15 = arith.constant 9.99999974E-6 : f32
    %35 = vector.broadcast %cst_15 : f32 to vector<16x1xf32>
    %36 = arith.addf %34, %35 : vector<16x1xf32>
    %37 = math.rsqrt %36 : vector<16x1xf32>
    %38 = vector.broadcast %37 : vector<16x1xf32> to vector<16x128xf32>
    %39 = arith.mulf %29, %38 : vector<16x128xf32>
    %40 = vector.broadcast %2 : vector<1x128xf32> to vector<16x128xf32>
    %41 = arith.mulf %39, %40 : vector<16x128xf32>
    %42 = vector.broadcast %3 : vector<1x128xf32> to vector<16x128xf32>
    %43 = arith.addf %41, %42 : vector<16x128xf32>
    %c0_16 = arith.constant 0 : index
    %c0_17 = arith.constant 0 : index
    %44 = vector.load %arg4[%c0_16, %c0_17] : memref<128x128xf32, #tpu.memory_space<vmem>>, vector<128x128xf32>
    %cst_18 = arith.constant dense<0.000000e+00> : vector<16x128xf32>
    %45 = tpu.matmul %23, %44, %cst_18 {dimension_numbers = #tpu.dot_dimension_numbers<[1], [0], [0], [1], [0, 0, 1, 1], [], []>} : vector<16x128xf32>, vector<128x128xf32>, vector<16x128xf32> -> vector<16x128xf32>
    %c0_19 = arith.constant 0 : index
    %c0_20 = arith.constant 0 : index
    %46 = vector.load %arg5[%c0_19, %c0_20] : memref<128x256xf32, #tpu.memory_space<vmem>>, vector<128x256xf32>
    %cst_21 = arith.constant dense<0.000000e+00> : vector<16x256xf32>
    %47 = tpu.matmul %43, %46, %cst_21 {dimension_numbers = #tpu.dot_dimension_numbers<[1], [0], [0], [1], [0, 0, 1, 1], [], []>} : vector<16x128xf32>, vector<128x256xf32>, vector<16x256xf32> -> vector<16x256xf32>
    %48 = vector.extract_strided_slice %47 {offsets = [0, 0], sizes = [16, 128], strides = [1, 1]} : vector<16x256xf32> to vector<16x128xf32>
    %49 = vector.extract_strided_slice %47 {offsets = [0, 128], sizes = [16, 128], strides = [1, 1]} : vector<16x256xf32> to vector<16x128xf32>
    %50 = vector.shape_cast %45 : vector<16x128xf32> to vector<2x8x128xf32>
    %51 = vector.shape_cast %48 : vector<16x128xf32> to vector<2x8x128xf32>
    %52 = vector.shape_cast %49 : vector<16x128xf32> to vector<2x8x128xf32>
    %53 = vector.extract_strided_slice %50 {offsets = [0, 0, 0], sizes = [2, 8, 32], strides = [1, 1, 1]} : vector<2x8x128xf32> to vector<2x8x32xf32>
    %54 = vector.extract_strided_slice %51 {offsets = [0, 0, 0], sizes = [2, 8, 32], strides = [1, 1, 1]} : vector<2x8x128xf32> to vector<2x8x32xf32>
    %55 = vector.extract_strided_slice %52 {offsets = [0, 0, 0], sizes = [2, 8, 32], strides = [1, 1, 1]} : vector<2x8x128xf32> to vector<2x8x32xf32>
    "tpu.trace_start"() <{level = 10 : i32, message = "bnd,bmd->bnm"}> : () -> ()
    %cst_22 = arith.constant dense<0.000000e+00> : vector<2x8x8xf32>
    %56 = tpu.matmul %53, %54, %cst_22 {dimension_numbers = #tpu.dot_dimension_numbers<[2], [2], [1], [1], [0, 0, 0, 1, 1, 1], [0], [0]>} : vector<2x8x32xf32>, vector<2x8x32xf32>, vector<2x8x8xf32> -> vector<2x8x8xf32>
    "tpu.trace_stop"() : () -> ()
    %cst_23 = arith.constant 0.0883883461 : f32
    %57 = vector.broadcast %cst_23 : f32 to vector<2x8x8xf32>
    %58 = arith.mulf %56, %57 : vector<2x8x8xf32>
    %cst_24 = arith.constant dense<0xFF800000> : vector<2x8xf32>
    %59 = vector.multi_reduction <maximumf>, %58, %cst_24 [2] : vector<2x8x8xf32> to vector<2x8xf32>
    %60 = vector.shape_cast %59 : vector<2x8xf32> to vector<2x8x1xf32>
    %61 = vector.broadcast %60 : vector<2x8x1xf32> to vector<2x8x8xf32>
    %62 = arith.subf %58, %61 : vector<2x8x8xf32>
    %63 = math.exp %62 : vector<2x8x8xf32>
    %cst_25 = arith.constant dense<0.000000e+00> : vector<2x8xf32>
    %64 = vector.multi_reduction <add>, %63, %cst_25 [2] : vector<2x8x8xf32> to vector<2x8xf32>
    %65 = vector.shape_cast %64 : vector<2x8xf32> to vector<2x8x1xf32>
    %66 = vector.broadcast %65 : vector<2x8x1xf32> to vector<2x8x8xf32>
    %67 = arith.divf %63, %66 : vector<2x8x8xf32>
    "tpu.trace_start"() <{level = 10 : i32, message = "bnm,bmd->bnd"}> : () -> ()
    %cst_26 = arith.constant dense<0.000000e+00> : vector<2x8x32xf32>
    %68 = tpu.matmul %67, %55, %cst_26 {dimension_numbers = #tpu.dot_dimension_numbers<[2], [1], [1], [2], [0, 0, 0, 1, 1, 2], [0], [0]>} : vector<2x8x8xf32>, vector<2x8x32xf32>, vector<2x8x32xf32> -> vector<2x8x32xf32>
    "tpu.trace_stop"() : () -> ()
    %69 = vector.extract_strided_slice %50 {offsets = [0, 0, 32], sizes = [2, 8, 32], strides = [1, 1, 1]} : vector<2x8x128xf32> to vector<2x8x32xf32>
    %70 = vector.extract_strided_slice %51 {offsets = [0, 0, 32], sizes = [2, 8, 32], strides = [1, 1, 1]} : vector<2x8x128xf32> to vector<2x8x32xf32>
    %71 = vector.extract_strided_slice %52 {offsets = [0, 0, 32], sizes = [2, 8, 32], strides = [1, 1, 1]} : vector<2x8x128xf32> to vector<2x8x32xf32>
    "tpu.trace_start"() <{level = 10 : i32, message = "bnd,bmd->bnm"}> : () -> ()
    %cst_27 = arith.constant dense<0.000000e+00> : vector<2x8x8xf32>
    %72 = tpu.matmul %69, %70, %cst_27 {dimension_numbers = #tpu.dot_dimension_numbers<[2], [2], [1], [1], [0, 0, 0, 1, 1, 1], [0], [0]>} : vector<2x8x32xf32>, vector<2x8x32xf32>, vector<2x8x8xf32> -> vector<2x8x8xf32>
    "tpu.trace_stop"() : () -> ()
    %cst_28 = arith.constant 0.0883883461 : f32
    %73 = vector.broadcast %cst_28 : f32 to vector<2x8x8xf32>
    %74 = arith.mulf %72, %73 : vector<2x8x8xf32>
    %cst_29 = arith.constant dense<0xFF800000> : vector<2x8xf32>
    %75 = vector.multi_reduction <maximumf>, %74, %cst_29 [2] : vector<2x8x8xf32> to vector<2x8xf32>
    %76 = vector.shape_cast %75 : vector<2x8xf32> to vector<2x8x1xf32>
    %77 = vector.broadcast %76 : vector<2x8x1xf32> to vector<2x8x8xf32>
    %78 = arith.subf %74, %77 : vector<2x8x8xf32>
    %79 = math.exp %78 : vector<2x8x8xf32>
    %cst_30 = arith.constant dense<0.000000e+00> : vector<2x8xf32>
    %80 = vector.multi_reduction <add>, %79, %cst_30 [2] : vector<2x8x8xf32> to vector<2x8xf32>
    %81 = vector.shape_cast %80 : vector<2x8xf32> to vector<2x8x1xf32>
    %82 = vector.broadcast %81 : vector<2x8x1xf32> to vector<2x8x8xf32>
    %83 = arith.divf %79, %82 : vector<2x8x8xf32>
    "tpu.trace_start"() <{level = 10 : i32, message = "bnm,bmd->bnd"}> : () -> ()
    %cst_31 = arith.constant dense<0.000000e+00> : vector<2x8x32xf32>
    %84 = tpu.matmul %83, %71, %cst_31 {dimension_numbers = #tpu.dot_dimension_numbers<[2], [1], [1], [2], [0, 0, 0, 1, 1, 2], [0], [0]>} : vector<2x8x8xf32>, vector<2x8x32xf32>, vector<2x8x32xf32> -> vector<2x8x32xf32>
    "tpu.trace_stop"() : () -> ()
    %85 = vector.extract_strided_slice %50 {offsets = [0, 0, 64], sizes = [2, 8, 32], strides = [1, 1, 1]} : vector<2x8x128xf32> to vector<2x8x32xf32>
    %86 = vector.extract_strided_slice %51 {offsets = [0, 0, 64], sizes = [2, 8, 32], strides = [1, 1, 1]} : vector<2x8x128xf32> to vector<2x8x32xf32>
    %87 = vector.extract_strided_slice %52 {offsets = [0, 0, 64], sizes = [2, 8, 32], strides = [1, 1, 1]} : vector<2x8x128xf32> to vector<2x8x32xf32>
    "tpu.trace_start"() <{level = 10 : i32, message = "bnd,bmd->bnm"}> : () -> ()
    %cst_32 = arith.constant dense<0.000000e+00> : vector<2x8x8xf32>
    %88 = tpu.matmul %85, %86, %cst_32 {dimension_numbers = #tpu.dot_dimension_numbers<[2], [2], [1], [1], [0, 0, 0, 1, 1, 1], [0], [0]>} : vector<2x8x32xf32>, vector<2x8x32xf32>, vector<2x8x8xf32> -> vector<2x8x8xf32>
    "tpu.trace_stop"() : () -> ()
    %cst_33 = arith.constant 0.0883883461 : f32
    %89 = vector.broadcast %cst_33 : f32 to vector<2x8x8xf32>
    %90 = arith.mulf %88, %89 : vector<2x8x8xf32>
    %cst_34 = arith.constant dense<0xFF800000> : vector<2x8xf32>
    %91 = vector.multi_reduction <maximumf>, %90, %cst_34 [2] : vector<2x8x8xf32> to vector<2x8xf32>
    %92 = vector.shape_cast %91 : vector<2x8xf32> to vector<2x8x1xf32>
    %93 = vector.broadcast %92 : vector<2x8x1xf32> to vector<2x8x8xf32>
    %94 = arith.subf %90, %93 : vector<2x8x8xf32>
    %95 = math.exp %94 : vector<2x8x8xf32>
    %cst_35 = arith.constant dense<0.000000e+00> : vector<2x8xf32>
    %96 = vector.multi_reduction <add>, %95, %cst_35 [2] : vector<2x8x8xf32> to vector<2x8xf32>
    %97 = vector.shape_cast %96 : vector<2x8xf32> to vector<2x8x1xf32>
    %98 = vector.broadcast %97 : vector<2x8x1xf32> to vector<2x8x8xf32>
    %99 = arith.divf %95, %98 : vector<2x8x8xf32>
    "tpu.trace_start"() <{level = 10 : i32, message = "bnm,bmd->bnd"}> : () -> ()
    %cst_36 = arith.constant dense<0.000000e+00> : vector<2x8x32xf32>
    %100 = tpu.matmul %99, %87, %cst_36 {dimension_numbers = #tpu.dot_dimension_numbers<[2], [1], [1], [2], [0, 0, 0, 1, 1, 2], [0], [0]>} : vector<2x8x8xf32>, vector<2x8x32xf32>, vector<2x8x32xf32> -> vector<2x8x32xf32>
    "tpu.trace_stop"() : () -> ()
    %101 = vector.extract_strided_slice %50 {offsets = [0, 0, 96], sizes = [2, 8, 32], strides = [1, 1, 1]} : vector<2x8x128xf32> to vector<2x8x32xf32>
    %102 = vector.extract_strided_slice %51 {offsets = [0, 0, 96], sizes = [2, 8, 32], strides = [1, 1, 1]} : vector<2x8x128xf32> to vector<2x8x32xf32>
    %103 = vector.extract_strided_slice %52 {offsets = [0, 0, 96], sizes = [2, 8, 32], strides = [1, 1, 1]} : vector<2x8x128xf32> to vector<2x8x32xf32>
    "tpu.trace_start"() <{level = 10 : i32, message = "bnd,bmd->bnm"}> : () -> ()
    %cst_37 = arith.constant dense<0.000000e+00> : vector<2x8x8xf32>
    %104 = tpu.matmul %101, %102, %cst_37 {dimension_numbers = #tpu.dot_dimension_numbers<[2], [2], [1], [1], [0, 0, 0, 1, 1, 1], [0], [0]>} : vector<2x8x32xf32>, vector<2x8x32xf32>, vector<2x8x8xf32> -> vector<2x8x8xf32>
    "tpu.trace_stop"() : () -> ()
    %cst_38 = arith.constant 0.0883883461 : f32
    %105 = vector.broadcast %cst_38 : f32 to vector<2x8x8xf32>
    %106 = arith.mulf %104, %105 : vector<2x8x8xf32>
    %cst_39 = arith.constant dense<0xFF800000> : vector<2x8xf32>
    %107 = vector.multi_reduction <maximumf>, %106, %cst_39 [2] : vector<2x8x8xf32> to vector<2x8xf32>
    %108 = vector.shape_cast %107 : vector<2x8xf32> to vector<2x8x1xf32>
    %109 = vector.broadcast %108 : vector<2x8x1xf32> to vector<2x8x8xf32>
    %110 = arith.subf %106, %109 : vector<2x8x8xf32>
    %111 = math.exp %110 : vector<2x8x8xf32>
    %cst_40 = arith.constant dense<0.000000e+00> : vector<2x8xf32>
    %112 = vector.multi_reduction <add>, %111, %cst_40 [2] : vector<2x8x8xf32> to vector<2x8xf32>
    %113 = vector.shape_cast %112 : vector<2x8xf32> to vector<2x8x1xf32>
    %114 = vector.broadcast %113 : vector<2x8x1xf32> to vector<2x8x8xf32>
    %115 = arith.divf %111, %114 : vector<2x8x8xf32>
    "tpu.trace_start"() <{level = 10 : i32, message = "bnm,bmd->bnd"}> : () -> ()
    %cst_41 = arith.constant dense<0.000000e+00> : vector<2x8x32xf32>
    %116 = tpu.matmul %115, %103, %cst_41 {dimension_numbers = #tpu.dot_dimension_numbers<[2], [1], [1], [2], [0, 0, 0, 1, 1, 2], [0], [0]>} : vector<2x8x8xf32>, vector<2x8x32xf32>, vector<2x8x32xf32> -> vector<2x8x32xf32>
    "tpu.trace_stop"() : () -> ()
    %117 = tpu.concatenate %68, %84, %100, %116 in 2 : vector<2x8x32xf32>, vector<2x8x32xf32>, vector<2x8x32xf32>, vector<2x8x32xf32> -> vector<2x8x128xf32>
    %118 = vector.shape_cast %117 : vector<2x8x128xf32> to vector<16x128xf32>
    %c0_42 = arith.constant 0 : index
    %c0_43 = arith.constant 0 : index
    %119 = vector.load %arg6[%c0_42, %c0_43] : memref<128x128xf32, #tpu.memory_space<vmem>>, vector<128x128xf32>
    %cst_44 = arith.constant dense<0.000000e+00> : vector<16x128xf32>
    %120 = tpu.matmul %118, %119, %cst_44 {dimension_numbers = #tpu.dot_dimension_numbers<[1], [0], [0], [1], [0, 0, 1, 1], [], []>} : vector<16x128xf32>, vector<128x128xf32>, vector<16x128xf32> -> vector<16x128xf32>
    %c0_45 = arith.constant 0 : index
    %c0_46 = arith.constant 0 : index
    %121 = vector.load %arg7[%c0_45, %c0_46] : memref<1x128xf32, #tpu.memory_space<vmem>>, vector<1x128xf32>
    %122 = vector.broadcast %121 : vector<1x128xf32> to vector<16x128xf32>
    %123 = arith.addf %120, %122 : vector<16x128xf32>
    %124 = arith.addf %0, %123 : vector<16x128xf32>
    %c0_47 = arith.constant 0 : index
    %c0_48 = arith.constant 0 : index
    %125 = vector.load %arg8[%c0_47, %c0_48] : memref<1x128xf32, #tpu.memory_space<vmem>>, vector<1x128xf32>
    %c0_49 = arith.constant 0 : index
    %c0_50 = arith.constant 0 : index
    %126 = vector.load %arg9[%c0_49, %c0_50] : memref<1x128xf32, #tpu.memory_space<vmem>>, vector<1x128xf32>
    %cst_51 = arith.constant dense<0.000000e+00> : vector<16xf32>
    %127 = vector.multi_reduction <add>, %124, %cst_51 [1] : vector<16x128xf32> to vector<16xf32>
    %128 = vector.shape_cast %127 : vector<16xf32> to vector<16x1xf32>
    %cst_52 = arith.constant 1.280000e+02 : f32
    %129 = vector.broadcast %cst_52 : f32 to vector<16x1xf32>
    %130 = arith.divf %128, %129 : vector<16x1xf32>
    %131 = vector.broadcast %130 : vector<16x1xf32> to vector<16x128xf32>
    %132 = arith.subf %124, %131 : vector<16x128xf32>
    %133 = arith.mulf %132, %132 : vector<16x128xf32>
    %cst_53 = arith.constant dense<0.000000e+00> : vector<16xf32>
    %134 = vector.multi_reduction <add>, %133, %cst_53 [1] : vector<16x128xf32> to vector<16xf32>
    %135 = vector.shape_cast %134 : vector<16xf32> to vector<16x1xf32>
    %cst_54 = arith.constant 1.280000e+02 : f32
    %136 = vector.broadcast %cst_54 : f32 to vector<16x1xf32>
    %137 = arith.divf %135, %136 : vector<16x1xf32>
    %cst_55 = arith.constant 9.99999974E-6 : f32
    %138 = vector.broadcast %cst_55 : f32 to vector<16x1xf32>
    %139 = arith.addf %137, %138 : vector<16x1xf32>
    %140 = math.rsqrt %139 : vector<16x1xf32>
    %141 = vector.broadcast %140 : vector<16x1xf32> to vector<16x128xf32>
    %142 = arith.mulf %132, %141 : vector<16x128xf32>
    %143 = vector.broadcast %125 : vector<1x128xf32> to vector<16x128xf32>
    %144 = arith.mulf %142, %143 : vector<16x128xf32>
    %145 = vector.broadcast %126 : vector<1x128xf32> to vector<16x128xf32>
    %146 = arith.addf %144, %145 : vector<16x128xf32>
    %c0_56 = arith.constant 0 : index
    %c0_57 = arith.constant 0 : index
    %147 = vector.load %arg10[%c0_56, %c0_57] : memref<128x256xf32, #tpu.memory_space<vmem>>, vector<128x256xf32>
    %cst_58 = arith.constant dense<0.000000e+00> : vector<16x256xf32>
    %148 = tpu.matmul %146, %147, %cst_58 {dimension_numbers = #tpu.dot_dimension_numbers<[1], [0], [0], [1], [0, 0, 1, 1], [], []>} : vector<16x128xf32>, vector<128x256xf32>, vector<16x256xf32> -> vector<16x256xf32>
    %c0_59 = arith.constant 0 : index
    %c0_60 = arith.constant 0 : index
    %149 = vector.load %arg11[%c0_59, %c0_60] : memref<1x256xf32, #tpu.memory_space<vmem>>, vector<1x256xf32>
    %150 = vector.broadcast %149 : vector<1x256xf32> to vector<16x256xf32>
    %151 = arith.addf %148, %150 : vector<16x256xf32>
    %cst_61 = arith.constant 5.000000e-01 : f32
    %152 = vector.broadcast %cst_61 : f32 to vector<16x256xf32>
    %153 = arith.mulf %152, %151 : vector<16x256xf32>
    %cst_62 = arith.constant 0.707106769 : f32
    %154 = vector.broadcast %cst_62 : f32 to vector<16x256xf32>
    %155 = arith.mulf %151, %154 : vector<16x256xf32>
    %cst_63 = arith.constant 0.000000e+00 : f32
    %156 = vector.broadcast %cst_63 : f32 to vector<16x256xf32>
    %157 = arith.cmpf oge, %155, %156 : vector<16x256xf32>
    %cst_64 = arith.constant 1.000000e+00 : f32
    %cst_65 = arith.constant -1.000000e+00 : f32
    %158 = vector.broadcast %cst_64 : f32 to vector<16x256xf32>
    %159 = vector.broadcast %cst_65 : f32 to vector<16x256xf32>
    %160 = arith.select %157, %158, %159 : vector<16x256xi1>, vector<16x256xf32>
    %161 = math.absf %155 : vector<16x256xf32>
    %cst_66 = arith.constant 0.327591091 : f32
    %162 = vector.broadcast %cst_66 : f32 to vector<16x256xf32>
    %163 = arith.mulf %162, %161 : vector<16x256xf32>
    %cst_67 = arith.constant 1.000000e+00 : f32
    %164 = vector.broadcast %cst_67 : f32 to vector<16x256xf32>
    %165 = arith.addf %164, %163 : vector<16x256xf32>
    %cst_68 = arith.constant 1.000000e+00 : f32
    %166 = vector.broadcast %cst_68 : f32 to vector<16x256xf32>
    %167 = arith.divf %166, %165 : vector<16x256xf32>
    %cst_69 = arith.constant 1.06140542 : f32
    %168 = vector.broadcast %cst_69 : f32 to vector<16x256xf32>
    %169 = arith.mulf %168, %167 : vector<16x256xf32>
    %cst_70 = arith.constant -1.45315206 : f32
    %170 = vector.broadcast %cst_70 : f32 to vector<16x256xf32>
    %171 = arith.addf %169, %170 : vector<16x256xf32>
    %172 = arith.mulf %171, %167 : vector<16x256xf32>
    %cst_71 = arith.constant 1.42141378 : f32
    %173 = vector.broadcast %cst_71 : f32 to vector<16x256xf32>
    %174 = arith.addf %172, %173 : vector<16x256xf32>
    %175 = arith.mulf %174, %167 : vector<16x256xf32>
    %cst_72 = arith.constant -0.284496725 : f32
    %176 = vector.broadcast %cst_72 : f32 to vector<16x256xf32>
    %177 = arith.addf %175, %176 : vector<16x256xf32>
    %178 = arith.mulf %177, %167 : vector<16x256xf32>
    %cst_73 = arith.constant 0.254829586 : f32
    %179 = vector.broadcast %cst_73 : f32 to vector<16x256xf32>
    %180 = arith.addf %178, %179 : vector<16x256xf32>
    %181 = arith.mulf %180, %167 : vector<16x256xf32>
    %cst_74 = arith.constant 0.000000e+00 : f32
    %182 = vector.broadcast %cst_74 : f32 to vector<16x256xf32>
    %183 = arith.subf %182, %161 : vector<16x256xf32>
    %184 = arith.mulf %183, %161 : vector<16x256xf32>
    %185 = math.exp %184 : vector<16x256xf32>
    %186 = arith.mulf %181, %185 : vector<16x256xf32>
    %cst_75 = arith.constant 1.000000e+00 : f32
    %187 = vector.broadcast %cst_75 : f32 to vector<16x256xf32>
    %188 = arith.subf %187, %186 : vector<16x256xf32>
    %189 = arith.mulf %160, %188 : vector<16x256xf32>
    %cst_76 = arith.constant 1.000000e+00 : f32
    %190 = vector.broadcast %cst_76 : f32 to vector<16x256xf32>
    %191 = arith.addf %190, %189 : vector<16x256xf32>
    %192 = arith.mulf %153, %191 : vector<16x256xf32>
    %c0_77 = arith.constant 0 : index
    %c0_78 = arith.constant 0 : index
    %193 = vector.load %arg12[%c0_77, %c0_78] : memref<256x128xf32, #tpu.memory_space<vmem>>, vector<256x128xf32>
    %cst_79 = arith.constant dense<0.000000e+00> : vector<16x128xf32>
    %194 = tpu.matmul %192, %193, %cst_79 {dimension_numbers = #tpu.dot_dimension_numbers<[1], [0], [0], [1], [0, 0, 1, 1], [], []>} : vector<16x256xf32>, vector<256x128xf32>, vector<16x128xf32> -> vector<16x128xf32>
    %c0_80 = arith.constant 0 : index
    %c0_81 = arith.constant 0 : index
    %195 = vector.load %arg13[%c0_80, %c0_81] : memref<1x128xf32, #tpu.memory_space<vmem>>, vector<1x128xf32>
    %196 = vector.broadcast %195 : vector<1x128xf32> to vector<16x128xf32>
    %197 = arith.addf %194, %196 : vector<16x128xf32>
    %198 = arith.addf %124, %197 : vector<16x128xf32>
    %c0_82 = arith.constant 0 : index
    %c0_83 = arith.constant 0 : index
    %199 = vector.load %arg14[%c0_82, %c0_83] : memref<16x128xf32, #tpu.memory_space<vmem>>, vector<16x128xf32>
    tpu.vector_store %arg14[%c0_82, %c0_83], %198 {strides = array<i32>} : memref<16x128xf32, #tpu.memory_space<vmem>>, vector<16x128xf32>,
    return
  }
}

module attributes {stable_mosaic.version = 11 : i64} {
  func.func @decoder_layer_kernel(%arg0: memref<16x128xf32, #tpu.memory_space<vmem>>, %arg1: memref<16x128xf32, #tpu.memory_space<vmem>>, %arg2: memref<1x128xf32, #tpu.memory_space<vmem>>, %arg3: memref<1x128xf32, #tpu.memory_space<vmem>>, %arg4: memref<128x128xf32, #tpu.memory_space<vmem>>, %arg5: memref<128x256xf32, #tpu.memory_space<vmem>>, %arg6: memref<128x128xf32, #tpu.memory_space<vmem>>, %arg7: memref<1x128xf32, #tpu.memory_space<vmem>>, %arg8: memref<1x128xf32, #tpu.memory_space<vmem>>, %arg9: memref<1x128xf32, #tpu.memory_space<vmem>>, %arg10: memref<128x256xf32, #tpu.memory_space<vmem>>, %arg11: memref<1x256xf32, #tpu.memory_space<vmem>>, %arg12: memref<256x128xf32, #tpu.memory_space<vmem>>, %arg13: memref<1x128xf32, #tpu.memory_space<vmem>>, %arg14: memref<16x128xf32, #tpu.memory_space<vmem>>) attributes {dimension_semantics = [], scalar_prefetch = 0 : i64, scratch_operands = 0 : i64, tpu.core_type = #tpu.core_type<tc>} {
    %c0 = arith.constant 0 : index
    %c0_0 = arith.constant 0 : index
    %0 = vector.load %arg0[%c0, %c0_0] : memref<16x128xf32, #tpu.memory_space<vmem>>, vector<16x128xf32>
    %c0_1 = arith.constant 0 : index
    %c0_2 = arith.constant 0 : index
    %1 = vector.load %arg1[%c0_1, %c0_2] : memref<16x128xf32, #tpu.memory_space<vmem>>, vector<16x128xf32>
    %c0_3 = arith.constant 0 : index
    %c0_4 = arith.constant 0 : index
    %2 = vector.load %arg2[%c0_3, %c0_4] : memref<1x128xf32, #tpu.memory_space<vmem>>, vector<1x128xf32>
    %c0_5 = arith.constant 0 : index
    %c0_6 = arith.constant 0 : index
    %3 = vector.load %arg3[%c0_5, %c0_6] : memref<1x128xf32, #tpu.memory_space<vmem>>, vector<1x128xf32>
    %cst = arith.constant dense<0.000000e+00> : vector<16xf32>
    %4 = vector.multi_reduction <add>, %0, %cst [1] : vector<16x128xf32> to vector<16xf32>
    %5 = vector.shape_cast %4 : vector<16xf32> to vector<16x1xf32>
    %cst_7 = arith.constant 1.280000e+02 : f32
    %6 = vector.broadcast %cst_7 : f32 to vector<16x1xf32>
    %7 = arith.divf %5, %6 : vector<16x1xf32>
    %8 = vector.broadcast %7 : vector<16x1xf32> to vector<16x128xf32>
    %9 = arith.subf %0, %8 : vector<16x128xf32>
    %10 = arith.mulf %9, %9 : vector<16x128xf32>
    %cst_8 = arith.constant dense<0.000000e+00> : vector<16xf32>
    %11 = vector.multi_reduction <add>, %10, %cst_8 [1] : vector<16x128xf32> to vector<16xf32>
    %12 = vector.shape_cast %11 : vector<16xf32> to vector<16x1xf32>
    %cst_9 = arith.constant 1.280000e+02 : f32
    %13 = vector.broadcast %cst_9 : f32 to vector<16x1xf32>
    %14 = arith.divf %12, %13 : vector<16x1xf32>
    %cst_10 = arith.constant 9.99999974E-6 : f32
    %15 = vector.broadcast %cst_10 : f32 to vector<16x1xf32>
    %16 = arith.addf %14, %15 : vector<16x1xf32>
    %17 = math.rsqrt %16 : vector<16x1xf32>
    %18 = vector.broadcast %17 : vector<16x1xf32> to vector<16x128xf32>
    %19 = arith.mulf %9, %18 : vector<16x128xf32>
    %20 = vector.broadcast %2 : vector<1x128xf32> to vector<16x128xf32>
    %21 = arith.mulf %19, %20 : vector<16x128xf32>
    %22 = vector.broadcast %3 : vector<1x128xf32> to vector<16x128xf32>
    %23 = arith.addf %21, %22 : vector<16x128xf32>
    %cst_11 = arith.constant dense<0.000000e+00> : vector<16xf32>
    %24 = vector.multi_reduction <add>, %1, %cst_11 [1] : vector<16x128xf32> to vector<16xf32>
    %25 = vector.shape_cast %24 : vector<16xf32> to vector<16x1xf32>
    %cst_12 = arith.constant 1.280000e+02 : f32
    %26 = vector.broadcast %cst_12 : f32 to vector<16x1xf32>
    %27 = arith.divf %25, %26 : vector<16x1xf32>
    %28 = vector.broadcast %27 : vector<16x1xf32> to vector<16x128xf32>
    %29 = arith.subf %1, %28 : vector<16x128xf32>
    %30 = arith.mulf %29, %29 : vector<16x128xf32>
    %cst_13 = arith.constant dense<0.000000e+00> : vector<16xf32>
    %31 = vector.multi_reduction <add>, %30, %cst_13 [1] : vector<16x128xf32> to vector<16xf32>
    %32 = vector.shape_cast %31 : vector<16xf32> to vector<16x1xf32>
    %cst_14 = arith.constant 1.280000e+02 : f32
    %33 = vector.broadcast %cst_14 : f32 to vector<16x1xf32>
    %34 = arith.divf %32, %33 : vector<16x1xf32>
    %cst_15 = arith.constant 9.99999974E-6 : f32
    %35 = vector.broadcast %cst_15 : f32 to vector<16x1xf32>
    %36 = arith.addf %34, %35 : vector<16x1xf32>
    %37 = math.rsqrt %36 : vector<16x1xf32>
    %38 = vector.broadcast %37 : vector<16x1xf32> to vector<16x128xf32>
    %39 = arith.mulf %29, %38 : vector<16x128xf32>
    %40 = vector.broadcast %2 : vector<1x128xf32> to vector<16x128xf32>
    %41 = arith.mulf %39, %40 : vector<16x128xf32>
    %42 = vector.broadcast %3 : vector<1x128xf32> to vector<16x128xf32>
    %43 = arith.addf %41, %42 : vector<16x128xf32>
    %c0_16 = arith.constant 0 : index
    %c0_17 = arith.constant 0 : index
    %44 = vector.load %arg4[%c0_16, %c0_17] : memref<128x128xf32, #tpu.memory_space<vmem>>, vector<128x128xf32>
    %cst_18 = arith.constant dense<0.000000e+00> : vector<16x128xf32>
    %45 = tpu.matmul %23, %44, %cst_18 {dimension_numbers = #tpu.dot_dimension_numbers<[1], [0], [0], [1], [0, 0, 1, 1], [], []>} : vector<16x128xf32>, vector<128x128xf32>, vector<16x128xf32> -> vector<16x128xf32>
    %c0_19 = arith.constant 0 : index
    %c0_20 = arith.constant 0 : index
    %46 = vector.load %arg5[%c0_19, %c0_20] : memref<128x256xf32, #tpu.memory_space<vmem>>, vector<128x256xf32>
    %cst_21 = arith.constant dense<0.000000e+00> : vector<16x256xf32>
    %47 = tpu.matmul %43, %46, %cst_21 {dimension_numbers = #tpu.dot_dimension_numbers<[1], [0], [0], [1], [0, 0, 1, 1], [], []>} : vector<16x128xf32>, vector<128x256xf32>, vector<16x256xf32> -> vector<16x256xf32>
    %48 = vector.extract_strided_slice %47 {offsets = [0, 0], sizes = [16, 128], strides = [1, 1]} : vector<16x256xf32> to vector<16x128xf32>
    %49 = vector.extract_strided_slice %47 {offsets = [0, 128], sizes = [16, 128], strides = [1, 1]} : vector<16x256xf32> to vector<16x128xf32>
    %50 = vector.shape_cast %45 : vector<16x128xf32> to vector<2x8x128xf32>
    %51 = vector.shape_cast %48 : vector<16x128xf32> to vector<2x8x128xf32>
    %52 = vector.shape_cast %49 : vector<16x128xf32> to vector<2x8x128xf32>
    %53 = vector.extract_strided_slice %50 {offsets = [0, 0, 0], sizes = [2, 8, 32], strides = [1, 1, 1]} : vector<2x8x128xf32> to vector<2x8x32xf32>
    %54 = vector.extract_strided_slice %51 {offsets = [0, 0, 0], sizes = [2, 8, 32], strides = [1, 1, 1]} : vector<2x8x128xf32> to vector<2x8x32xf32>
    %55 = vector.extract_strided_slice %52 {offsets = [0, 0, 0], sizes = [2, 8, 32], strides = [1, 1, 1]} : vector<2x8x128xf32> to vector<2x8x32xf32>
    "tpu.trace_start"() <{level = 10 : i32, message = "bnd,bmd->bnm"}> : () -> ()
    %cst_22 = arith.constant dense<0.000000e+00> : vector<2x8x8xf32>
    %56 = tpu.matmul %53, %54, %cst_22 {dimension_numbers = #tpu.dot_dimension_numbers<[2], [2], [1], [1], [0, 0, 0, 1, 1, 1], [0], [0]>} : vector<2x8x32xf32>, vector<2x8x32xf32>, vector<2x8x8xf32> -> vector<2x8x8xf32>
    "tpu.trace_stop"() : () -> ()
    %cst_23 = arith.constant 0.0883883461 : f32
    %57 = vector.broadcast %cst_23 : f32 to vector<2x8x8xf32>
    %58 = arith.mulf %56, %57 : vector<2x8x8xf32>
    %cst_24 = arith.constant dense<0xFF800000> : vector<2x8xf32>
    %59 = vector.multi_reduction <maximumf>, %58, %cst_24 [2] : vector<2x8x8xf32> to vector<2x8xf32>
    %60 = vector.shape_cast %59 : vector<2x8xf32> to vector<2x8x1xf32>
    %61 = vector.broadcast %60 : vector<2x8x1xf32> to vector<2x8x8xf32>
    %62 = arith.subf %58, %61 : vector<2x8x8xf32>
    %63 = math.exp %62 : vector<2x8x8xf32>
    %cst_25 = arith.constant dense<0.000000e+00> : vector<2x8xf32>
    %64 = vector.multi_reduction <add>, %63, %cst_25 [2] : vector<2x8x8xf32> to vector<2x8xf32>
    %65 = vector.shape_cast %64 : vector<2x8xf32> to vector<2x8x1xf32>
    %66 = vector.broadcast %65 : vector<2x8x1xf32> to vector<2x8x8xf32>
    %67 = arith.divf %63, %66 : vector<2x8x8xf32>
    "tpu.trace_start"() <{level = 10 : i32, message = "bnm,bmd->bnd"}> : () -> ()
    %cst_26 = arith.constant dense<0.000000e+00> : vector<2x8x32xf32>
    %68 = tpu.matmul %67, %55, %cst_26 {dimension_numbers = #tpu.dot_dimension_numbers<[2], [1], [1], [2], [0, 0, 0, 1, 1, 2], [0], [0]>} : vector<2x8x8xf32>, vector<2x8x32xf32>, vector<2x8x32xf32> -> vector<2x8x32xf32>
    "tpu.trace_stop"() : () -> ()
    %69 = vector.extract_strided_slice %50 {offsets = [0, 0, 32], sizes = [2, 8, 32], strides = [1, 1, 1]} : vector<2x8x128xf32> to vector<2x8x32xf32>
    %70 = vector.extract_strided_slice %51 {offsets = [0, 0, 32], sizes = [2, 8, 32], strides = [1, 1, 1]} : vector<2x8x128xf32> to vector<2x8x32xf32>
    %71 = vector.extract_strided_slice %52 {offsets = [0, 0, 32], sizes = [2, 8, 32], strides = [1, 1, 1]} : vector<2x8x128xf32> to vector<2x8x32xf32>
    "tpu.trace_start"() <{level = 10 : i32, message = "bnd,bmd->bnm"}> : () -> ()
    %cst_27 = arith.constant dense<0.000000e+00> : vector<2x8x8xf32>
    %72 = tpu.matmul %69, %70, %cst_27 {dimension_numbers = #tpu.dot_dimension_numbers<[2], [2], [1], [1], [0, 0, 0, 1, 1, 1], [0], [0]>} : vector<2x8x32xf32>, vector<2x8x32xf32>, vector<2x8x8xf32> -> vector<2x8x8xf32>
    "tpu.trace_stop"() : () -> ()
    %cst_28 = arith.constant 0.0883883461 : f32
    %73 = vector.broadcast %cst_28 : f32 to vector<2x8x8xf32>
    %74 = arith.mulf %72, %73 : vector<2x8x8xf32>
    %cst_29 = arith.constant dense<0xFF800000> : vector<2x8xf32>
    %75 = vector.multi_reduction <maximumf>, %74, %cst_29 [2] : vector<2x8x8xf32> to vector<2x8xf32>
    %76 = vector.shape_cast %75 : vector<2x8xf32> to vector<2x8x1xf32>
    %77 = vector.broadcast %76 : vector<2x8x1xf32> to vector<2x8x8xf32>
    %78 = arith.subf %74, %77 : vector<2x8x8xf32>
    %79 = math.exp %78 : vector<2x8x8xf32>
    %cst_30 = arith.constant dense<0.000000e+00> : vector<2x8xf32>
    %80 = vector.multi_reduction <add>, %79, %cst_30 [2] : vector<2x8x8xf32> to vector<2x8xf32>
    %81 = vector.shape_cast %80 : vector<2x8xf32> to vector<2x8x1xf32>
    %82 = vector.broadcast %81 : vector<2x8x1xf32> to vector<2x8x8xf32>
    %83 = arith.divf %79, %82 : vector<2x8x8xf32>
    "tpu.trace_start"() <{level = 10 : i32, message = "bnm,bmd->bnd"}> : () -> ()
    %cst_31 = arith.constant dense<0.000000e+00> : vector<2x8x32xf32>
    %84 = tpu.matmul %83, %71, %cst_31 {dimension_numbers = #tpu.dot_dimension_numbers<[2], [1], [1], [2], [0, 0, 0, 1, 1, 2], [0], [0]>} : vector<2x8x8xf32>, vector<2x8x32xf32>, vector<2x8x32xf32> -> vector<2x8x32xf32>
    "tpu.trace_stop"() : () -> ()
    %85 = vector.extract_strided_slice %50 {offsets = [0, 0, 64], sizes = [2, 8, 32], strides = [1, 1, 1]} : vector<2x8x128xf32> to vector<2x8x32xf32>
    %86 = vector.extract_strided_slice %51 {offsets = [0, 0, 64], sizes = [2, 8, 32], strides = [1, 1, 1]} : vector<2x8x128xf32> to vector<2x8x32xf32>
    %87 = vector.extract_strided_slice %52 {offsets = [0, 0, 64], sizes = [2, 8, 32], strides = [1, 1, 1]} : vector<2x8x128xf32> to vector<2x8x32xf32>
    "tpu.trace_start"() <{level = 10 : i32, message = "bnd,bmd->bnm"}> : () -> ()
    %cst_32 = arith.constant dense<0.000000e+00> : vector<2x8x8xf32>
    %88 = tpu.matmul %85, %86, %cst_32 {dimension_numbers = #tpu.dot_dimension_numbers<[2], [2], [1], [1], [0, 0, 0, 1, 1, 1], [0], [0]>} : vector<2x8x32xf32>, vector<2x8x32xf32>, vector<2x8x8xf32> -> vector<2x8x8xf32>
    "tpu.trace_stop"() : () -> ()
    %cst_33 = arith.constant 0.0883883461 : f32
    %89 = vector.broadcast %cst_33 : f32 to vector<2x8x8xf32>
    %90 = arith.mulf %88, %89 : vector<2x8x8xf32>
    %cst_34 = arith.constant dense<0xFF800000> : vector<2x8xf32>
    %91 = vector.multi_reduction <maximumf>, %90, %cst_34 [2] : vector<2x8x8xf32> to vector<2x8xf32>
    %92 = vector.shape_cast %91 : vector<2x8xf32> to vector<2x8x1xf32>
    %93 = vector.broadcast %92 : vector<2x8x1xf32> to vector<2x8x8xf32>
    %94 = arith.subf %90, %93 : vector<2x8x8xf32>
    %95 = math.exp %94 : vector<2x8x8xf32>
    %cst_35 = arith.constant dense<0.000000e+00> : vector<2x8xf32>
    %96 = vector.multi_reduction <add>, %95, %cst_35 [2] : vector<2x8x8xf32> to vector<2x8xf32>
    %97 = vector.shape_cast %96 : vector<2x8xf32> to vector<2x8x1xf32>
    %98 = vector.broadcast %97 : vector<2x8x1xf32> to vector<2x8x8xf32>
    %99 = arith.divf %95, %98 : vector<2x8x8xf32>
    "tpu.trace_start"() <{level = 10 : i32, message = "bnm,bmd->bnd"}> : () -> ()
    %cst_36 = arith.constant dense<0.000000e+00> : vector<2x8x32xf32>
    %100 = tpu.matmul %99, %87, %cst_36 {dimension_numbers = #tpu.dot_dimension_numbers<[2], [1], [1], [2], [0, 0, 0, 1, 1, 2], [0], [0]>} : vector<2x8x8xf32>, vector<2x8x32xf32>, vector<2x8x32xf32> -> vector<2x8x32xf32>
    "tpu.trace_stop"() : () -> ()
    %101 = vector.extract_strided_slice %50 {offsets = [0, 0, 96], sizes = [2, 8, 32], strides = [1, 1, 1]} : vector<2x8x128xf32> to vector<2x8x32xf32>
    %102 = vector.extract_strided_slice %51 {offsets = [0, 0, 96], sizes = [2, 8, 32], strides = [1, 1, 1]} : vector<2x8x128xf32> to vector<2x8x32xf32>
    %103 = vector.extract_strided_slice %52 {offsets = [0, 0, 96], sizes = [2, 8, 32], strides = [1, 1, 1]} : vector<2x8x128xf32> to vector<2x8x32xf32>
    "tpu.trace_start"() <{level = 10 : i32, message = "bnd,bmd->bnm"}> : () -> ()
    %cst_37 = arith.constant dense<0.000000e+00> : vector<2x8x8xf32>
    %104 = tpu.matmul %101, %102, %cst_37 {dimension_numbers = #tpu.dot_dimension_numbers<[2], [2], [1], [1], [0, 0, 0, 1, 1, 1], [0], [0]>} : vector<2x8x32xf32>, vector<2x8x32xf32>, vector<2x8x8xf32> -> vector<2x8x8xf32>
    "tpu.trace_stop"() : () -> ()
    %cst_38 = arith.constant 0.0883883461 : f32
    %105 = vector.broadcast %cst_38 : f32 to vector<2x8x8xf32>
    %106 = arith.mulf %104, %105 : vector<2x8x8xf32>
    %cst_39 = arith.constant dense<0xFF800000> : vector<2x8xf32>
    %107 = vector.multi_reduction <maximumf>, %106, %cst_39 [2] : vector<2x8x8xf32> to vector<2x8xf32>
    %108 = vector.shape_cast %107 : vector<2x8xf32> to vector<2x8x1xf32>
    %109 = vector.broadcast %108 : vector<2x8x1xf32> to vector<2x8x8xf32>
    %110 = arith.subf %106, %109 : vector<2x8x8xf32>
    %111 = math.exp %110 : vector<2x8x8xf32>
    %cst_40 = arith.constant dense<0.000000e+00> : vector<2x8xf32>
    %112 = vector.multi_reduction <add>, %111, %cst_40 [2] : vector<2x8x8xf32> to vector<2x8xf32>
    %113 = vector.shape_cast %112 : vector<2x8xf32> to vector<2x8x1xf32>
    %114 = vector.broadcast %113 : vector<2x8x1xf32> to vector<2x8x8xf32>
    %115 = arith.divf %111, %114 : vector<2x8x8xf32>
    "tpu.trace_start"() <{level = 10 : i32, message = "bnm,bmd->bnd"}> : () -> ()
    %cst_41 = arith.constant dense<0.000000e+00> : vector<2x8x32xf32>
    %116 = tpu.matmul %115, %103, %cst_41 {dimension_numbers = #tpu.dot_dimension_numbers<[2], [1], [1], [2], [0, 0, 0, 1, 1, 2], [0], [0]>} : vector<2x8x8xf32>, vector<2x8x32xf32>, vector<2x8x32xf32> -> vector<2x8x32xf32>
    "tpu.trace_stop"() : () -> ()
    %117 = tpu.concatenate %68, %84, %100, %116 in 2 : vector<2x8x32xf32>, vector<2x8x32xf32>, vector<2x8x32xf32>, vector<2x8x32xf32> -> vector<2x8x128xf32>
    %118 = vector.shape_cast %117 : vector<2x8x128xf32> to vector<16x128xf32>
    %c0_42 = arith.constant 0 : index
    %c0_43 = arith.constant 0 : index
    %119 = vector.load %arg6[%c0_42, %c0_43] : memref<128x128xf32, #tpu.memory_space<vmem>>, vector<128x128xf32>
    %cst_44 = arith.constant dense<0.000000e+00> : vector<16x128xf32>
    %120 = tpu.matmul %118, %119, %cst_44 {dimension_numbers = #tpu.dot_dimension_numbers<[1], [0], [0], [1], [0, 0, 1, 1], [], []>} : vector<16x128xf32>, vector<128x128xf32>, vector<16x128xf32> -> vector<16x128xf32>
    %c0_45 = arith.constant 0 : index
    %c0_46 = arith.constant 0 : index
    %121 = vector.load %arg7[%c0_45, %c0_46] : memref<1x128xf32, #tpu.memory_space<vmem>>, vector<1x128xf32>
    %122 = vector.broadcast %121 : vector<1x128xf32> to vector<16x128xf32>
    %123 = arith.addf %120, %122 : vector<16x128xf32>
    %124 = arith.addf %0, %123 : vector<16x128xf32>
    %c0_47 = arith.constant 0 : index
    %c0_48 = arith.constant 0 : index
    %125 = vector.load %arg8[%c0_47, %c0_48] : memref<1x128xf32, #tpu.memory_space<vmem>>, vector<1x128xf32>
    %c0_49 = arith.constant 0 : index
    %c0_50 = arith.constant 0 : index
    %126 = vector.load %arg9[%c0_49, %c0_50] : memref<1x128xf32, #tpu.memory_space<vmem>>, vector<1x128xf32>
    %cst_51 = arith.constant dense<0.000000e+00> : vector<16xf32>
    %127 = vector.multi_reduction <add>, %124, %cst_51 [1] : vector<16x128xf32> to vector<16xf32>
    %128 = vector.shape_cast %127 : vector<16xf32> to vector<16x1xf32>
    %cst_52 = arith.constant 1.280000e+02 : f32
    %129 = vector.broadcast %cst_52 : f32 to vector<16x1xf32>
    %130 = arith.divf %128, %129 : vector<16x1xf32>
    %131 = vector.broadcast %130 : vector<16x1xf32> to vector<16x128xf32>
    %132 = arith.subf %124, %131 : vector<16x128xf32>
    %133 = arith.mulf %132, %132 : vector<16x128xf32>
    %cst_53 = arith.constant dense<0.000000e+00> : vector<16xf32>
    %134 = vector.multi_reduction <add>, %133, %cst_53 [1] : vector<16x128xf32> to vector<16xf32>
    %135 = vector.shape_cast %134 : vector<16xf32> to vector<16x1xf32>
    %cst_54 = arith.constant 1.280000e+02 : f32
    %136 = vector.broadcast %cst_54 : f32 to vector<16x1xf32>
    %137 = arith.divf %135, %136 : vector<16x1xf32>
    %cst_55 = arith.constant 9.99999974E-6 : f32
    %138 = vector.broadcast %cst_55 : f32 to vector<16x1xf32>
    %139 = arith.addf %137, %138 : vector<16x1xf32>
    %140 = math.rsqrt %139 : vector<16x1xf32>
    %141 = vector.broadcast %140 : vector<16x1xf32> to vector<16x128xf32>
    %142 = arith.mulf %132, %141 : vector<16x128xf32>
    %143 = vector.broadcast %125 : vector<1x128xf32> to vector<16x128xf32>
    %144 = arith.mulf %142, %143 : vector<16x128xf32>
    %145 = vector.broadcast %126 : vector<1x128xf32> to vector<16x128xf32>
    %146 = arith.addf %144, %145 : vector<16x128xf32>
    %c0_56 = arith.constant 0 : index
    %c0_57 = arith.constant 0 : index
    %147 = vector.load %arg10[%c0_56, %c0_57] : memref<128x256xf32, #tpu.memory_space<vmem>>, vector<128x256xf32>
    %cst_58 = arith.constant dense<0.000000e+00> : vector<16x256xf32>
    %148 = tpu.matmul %146, %147, %cst_58 {dimension_numbers = #tpu.dot_dimension_numbers<[1], [0], [0], [1], [0, 0, 1, 1], [], []>} : vector<16x128xf32>, vector<128x256xf32>, vector<16x256xf32> -> vector<16x256xf32>
    %c0_59 = arith.constant 0 : index
    %c0_60 = arith.constant 0 : index
    %149 = vector.load %arg11[%c0_59, %c0_60] : memref<1x256xf32, #tpu.memory_space<vmem>>, vector<1x256xf32>
    %150 = vector.broadcast %149 : vector<1x256xf32> to vector<16x256xf32>
    %151 = arith.addf %148, %150 : vector<16x256xf32>
    %cst_61 = arith.constant 5.000000e-01 : f32
    %152 = vector.broadcast %cst_61 : f32 to vector<16x256xf32>
    %153 = arith.mulf %152, %151 : vector<16x256xf32>
    %cst_62 = arith.constant 0.707106769 : f32
    %154 = vector.broadcast %cst_62 : f32 to vector<16x256xf32>
    %155 = arith.mulf %151, %154 : vector<16x256xf32>
    %cst_63 = arith.constant 0.000000e+00 : f32
    %156 = vector.broadcast %cst_63 : f32 to vector<16x256xf32>
    %157 = arith.cmpf oge, %155, %156 : vector<16x256xf32>
    %cst_64 = arith.constant 1.000000e+00 : f32
    %cst_65 = arith.constant -1.000000e+00 : f32
    %158 = vector.broadcast %cst_64 : f32 to vector<16x256xf32>
    %159 = vector.broadcast %cst_65 : f32 to vector<16x256xf32>
    %160 = arith.select %157, %158, %159 : vector<16x256xi1>, vector<16x256xf32>
    %161 = math.absf %155 : vector<16x256xf32>
    %cst_66 = arith.constant 0.327591091 : f32
    %162 = vector.broadcast %cst_66 : f32 to vector<16x256xf32>
    %163 = arith.mulf %162, %161 : vector<16x256xf32>
    %cst_67 = arith.constant 1.000000e+00 : f32
    %164 = vector.broadcast %cst_67 : f32 to vector<16x256xf32>
    %165 = arith.addf %164, %163 : vector<16x256xf32>
    %cst_68 = arith.constant 1.000000e+00 : f32
    %166 = vector.broadcast %cst_68 : f32 to vector<16x256xf32>
    %167 = arith.divf %166, %165 : vector<16x256xf32>
    %cst_69 = arith.constant 1.06140542 : f32
    %168 = vector.broadcast %cst_69 : f32 to vector<16x256xf32>
    %169 = arith.mulf %168, %167 : vector<16x256xf32>
    %cst_70 = arith.constant -1.45315206 : f32
    %170 = vector.broadcast %cst_70 : f32 to vector<16x256xf32>
    %171 = arith.addf %169, %170 : vector<16x256xf32>
    %172 = arith.mulf %171, %167 : vector<16x256xf32>
    %cst_71 = arith.constant 1.42141378 : f32
    %173 = vector.broadcast %cst_71 : f32 to vector<16x256xf32>
    %174 = arith.addf %172, %173 : vector<16x256xf32>
    %175 = arith.mulf %174, %167 : vector<16x256xf32>
    %cst_72 = arith.constant -0.284496725 : f32
    %176 = vector.broadcast %cst_72 : f32 to vector<16x256xf32>
    %177 = arith.addf %175, %176 : vector<16x256xf32>
    %178 = arith.mulf %177, %167 : vector<16x256xf32>
    %cst_73 = arith.constant 0.254829586 : f32
    %179 = vector.broadcast %cst_73 : f32 to vector<16x256xf32>
    %180 = arith.addf %178, %179 : vector<16x256xf32>
    %181 = arith.mulf %180, %167 : vector<16x256xf32>
    %cst_74 = arith.constant 0.000000e+00 : f32
    %182 = vector.broadcast %cst_74 : f32 to vector<16x256xf32>
    %183 = arith.subf %182, %161 : vector<16x256xf32>
    %184 = arith.mulf %183, %161 : vector<16x256xf32>
    %185 = math.exp %184 : vector<16x256xf32>
    %186 = arith.mulf %181, %185 : vector<16x256xf32>
    %cst_75 = arith.constant 1.000000e+00 : f32
    %187 = vector.broadcast %cst_75 : f32 to vector<16x256xf32>
    %188 = arith.subf %187, %186 : vector<16x256xf32>
    %189 = arith.mulf %160, %188 : vector<16x256xf32>
    %cst_76 = arith.constant 1.000000e+00 : f32
    %190 = vector.broadcast %cst_76 : f32 to vector<16x256xf32>
    %191 = arith.addf %190, %189 : vector<16x256xf32>
    %192 = arith.mulf %153, %191 : vector<16x256xf32>
    %c0_77 = arith.constant 0 : index
    %c0_78 = arith.constant 0 : index
    %193 = vector.load %arg12[%c0_77, %c0_78] : memref<256x128xf32, #tpu.memory_space<vmem>>, vector<256x128xf32>
    %cst_79 = arith.constant dense<0.000000e+00> : vector<16x128xf32>
    %194 = tpu.matmul %192, %193, %cst_79 {dimension_numbers = #tpu.dot_dimension_numbers<[1], [0], [0], [1], [0, 0, 1, 1], [], []>} : vector<16x256xf32>, vector<256x128xf32>, vector<16x128xf32> -> vector<16x128xf32>
    %c0_80 = arith.constant 0 : index
    %c0_81 = arith.constant 0 : index
    %195 = vector.load %arg13[%c0_80, %c0_81] : memref<1x128xf32, #tpu.memory_space<vmem>>, vector<1x128xf32>
    %196 = vector.broadcast %195 : vector<1x128xf32> to vector<16x128xf32>
    %197 = arith.addf %194, %196 : vector<16x128xf32>
    %198 = arith.addf %124, %197 : vector<16x128xf32>
    %c0_82 = arith.constant 0 : index
    %c0_83 = arith.constant 0 : index
    %199 = vector.load %arg14[%c0_82, %c0_83] : memref<16x128xf32, #tpu.memory_space<vmem>>, vector<16x128xf32>
    tpu.vector_store %arg14[%c0_82, %c0_83], %198 {strides = array<i32>} : memref<16x128xf32, #tpu.memory_space<vmem>>, vector<16x128xf32>,
    return
  }
}

</mosaic_0001>

<llo_original>
// kernel: transformer_decoder.2
$region0: #{transformer_decoder.2}
  #allocation0 [shape = 'u32[]', space=smem, size = 0x4, offset = 0x4, fixed_abs, tag = 'smem constant byte address 0x4 - core index']
  #allocation1 [shape = 'u32[72,128]{1,0:T(1,128)}', space=vmem, size = 0x9000, scoped, tag = 'internal scratch']
  %s0 = inlined_call_operand.hbm [shape: f32[16,128], index: 0, kind: input, shape index: {}]
  %s1 = inlined_call_operand.hbm [shape: f32[16,128], index: 1, kind: input, shape index: {}]
  %s2 = inlined_call_operand.vmem [shape: f32[1,128], index: 2, kind: input, shape index: {}]
  %s3 = inlined_call_operand.vmem [shape: f32[1,128], index: 3, kind: input, shape index: {}]
  %s4 = inlined_call_operand.hbm [shape: f32[128,128], index: 4, kind: input, shape index: {}]
  %s5 = inlined_call_operand.hbm [shape: f32[128,256], index: 5, kind: input, shape index: {}]
  %s6 = inlined_call_operand.hbm [shape: f32[128,128], index: 6, kind: input, shape index: {}]
  %s7 = inlined_call_operand.vmem [shape: f32[1,128], index: 7, kind: input, shape index: {}]
  %s8 = inlined_call_operand.vmem [shape: f32[1,128], index: 8, kind: input, shape index: {}]
  %s9 = inlined_call_operand.vmem [shape: f32[1,128], index: 9, kind: input, shape index: {}]
  %s10 = inlined_call_operand.hbm [shape: f32[128,256], index: 10, kind: input, shape index: {}]
  %s11 = inlined_call_operand.vmem [shape: f32[1,256], index: 11, kind: input, shape index: {}]
  %s12 = inlined_call_operand.hbm [shape: f32[256,128], index: 12, kind: input, shape index: {}]
  %s13 = inlined_call_operand.hbm [shape: f32[1,128], index: 13, kind: input, shape index: {}]
  %s14 = inlined_call_operand.vmem [shape: f32[16,128], index: 14, kind: output, shape index: {}]
  %s15 = sld [smem:[#allocation0]]
  $region98: #{transformer_decoder.2} parent=0
    _
  %s17 = ssub.s32 1, %s15
  %s18 = scalar_select 0, %s17, %s15
  $region1: #{transformer_decoder.2} parent=0
    #allocation2 [shape = 'u8[8192]{0}', space=vmem, size = 0x2000, scoped, tag = 'input window, operand 0, single buffered']
    #allocation3 [shape = 's32[1]{0}', space=sflag, size = 0x4, scoped, tag = 'scoped memory for transformer_decoder.2']
    #allocation4 [shape = 'u8[8192]{0}', space=vmem, size = 0x2000, scoped, tag = 'input window, operand 1, single buffered']
    #allocation5 [shape = 's32[1]{0}', space=sflag, size = 0x4, scoped, tag = 'scoped memory for transformer_decoder.2']
    #allocation6 [shape = 'u8[65536]{0}', space=vmem, size = 0x10000, scoped, tag = 'input window, operand 4, single buffered']
    #allocation7 [shape = 'u8[131072]{0}', space=vmem, size = 0x20000, scoped, tag = 'input window, operand 5, single buffered']
    #allocation8 [shape = 's32[1]{0}', space=sflag, size = 0x4, scoped, tag = 'scoped memory for transformer_decoder.2']
    #allocation9 [shape = 'u8[65536]{0}', space=vmem, size = 0x10000, scoped, tag = 'input window, operand 6, single buffered']
    #allocation10 [shape = 'u8[131072]{0}', space=vmem, size = 0x20000, scoped, tag = 'input window, operand 10, single buffered']
    #allocation11 [shape = 's32[1]{0}', space=sflag, size = 0x4, scoped, tag = 'scoped memory for transformer_decoder.2']
    #allocation12 [shape = 'u8[131072]{0}', space=vmem, size = 0x20000, scoped, tag = 'input window, operand 12, single buffered']
    #allocation13 [shape = 'u8[512]{0}', space=vmem, size = 0x400, scoped, tag = 'input window, operand 13, single buffered']
    #allocation14 [shape = 's32[1]{0}', space=sflag, size = 0x4, scoped, tag = 'scoped memory for transformer_decoder.2']
    %19 = vsyncpa [#allocation3], 0
    %20 = vsyncpa [#allocation5], 0
    %21 = vsyncpa [#allocation8], 0
    %22 = vsyncpa [#allocation11], 0
    %23 = vsyncpa [#allocation14], 0
    // Predicated region
    $region2: #{transformer_decoder.2} parent=1 // pred_check
      _
    $region3: #{transformer_decoder.2} parent=1 // pred_check_branch
      %25 = sbr.rel (0) target = $region5
    $region4: #{transformer_decoder.2} parent=1 // pred_region
      %27 = vsyncadd [#allocation3], 0
      %s28 = sshll.u32 %s0, 4
      %s29 = int_to_ptr.hbm [resolvable:$true] %s28
      %s30 = sshll.u32 [#allocation2], 4
      %s31 = int_to_ptr.vmem [resolvable:$true] %s30
      %36 = dma.hbm_to_vmem [thread:$0]  %s29, 256, %s31, [#allocation3], 128, 128, 8
    $region5: #{transformer_decoder.2} parent=1 // pred_fallthru
      _
    // Predicated region
    $region6: #{transformer_decoder.2} parent=1 // pred_check
      _
    $region7: #{transformer_decoder.2} parent=1 // pred_check_branch
      %38 = sbr.rel (0) target = $region9
    $region8: #{transformer_decoder.2} parent=1 // pred_region
      %40 = vsyncadd [#allocation5], 0
      %s41 = sshll.u32 %s1, 4
      %s42 = int_to_ptr.hbm [resolvable:$true] %s41
      %s43 = sshll.u32 [#allocation4], 4
      %s44 = int_to_ptr.vmem [resolvable:$true] %s43
      %49 = dma.hbm_to_vmem [thread:$0]  %s42, 256, %s44, [#allocation5], 128, 128, 8
    $region9: #{transformer_decoder.2} parent=1 // pred_fallthru
      _
    // Predicated region
    $region10: #{transformer_decoder.2} parent=1 // pred_check
      _
    $region11: #{transformer_decoder.2} parent=1 // pred_check_branch
      %51 = sbr.rel (0) target = $region13
    $region12: #{transformer_decoder.2} parent=1 // pred_region
      _
    $region13: #{transformer_decoder.2} parent=1 // pred_fallthru
      _
    // Predicated region
    $region14: #{transformer_decoder.2} parent=1 // pred_check
      _
    $region15: #{transformer_decoder.2} parent=1 // pred_check_branch
      %53 = sbr.rel (0) target = $region17
    $region16: #{transformer_decoder.2} parent=1 // pred_region
      _
    $region17: #{transformer_decoder.2} parent=1 // pred_fallthru
      _
    // Predicated region
    $region18: #{transformer_decoder.2} parent=1 // pred_check
      _
    $region19: #{transformer_decoder.2} parent=1 // pred_check_branch
      %55 = sbr.rel (0) target = $region21
    $region20: #{transformer_decoder.2} parent=1 // pred_region
      %57 = vsyncadd [#allocation5], 0
      %s58 = sshll.u32 %s4, 4
      %s59 = int_to_ptr.hbm [resolvable:$true] %s58
      %s60 = sshll.u32 [#allocation6], 4
      %s61 = int_to_ptr.vmem [resolvable:$true] %s60
      %66 = dma.hbm_to_vmem [thread:$0]  %s59, 2048, %s61, [#allocation5], 128, 128, 8
    $region21: #{transformer_decoder.2} parent=1 // pred_fallthru
      _
    // Predicated region
    $region22: #{transformer_decoder.2} parent=1 // pred_check
      _
    $region23: #{transformer_decoder.2} parent=1 // pred_check_branch
      %68 = sbr.rel (0) target = $region25
    $region24: #{transformer_decoder.2} parent=1 // pred_region
      %70 = vsyncadd [#allocation8], 0
      %s71 = sshll.u32 %s5, 4
      %s72 = int_to_ptr.hbm [resolvable:$true] %s71
      %s73 = sshll.u32 [#allocation7], 4
      %s74 = int_to_ptr.vmem [resolvable:$true] %s73
      %79 = dma.hbm_to_vmem [thread:$0]  %s72, 4096, %s74, [#allocation8], 256, 256, 16
    $region25: #{transformer_decoder.2} parent=1 // pred_fallthru
      _
    // Predicated region
    $region26: #{transformer_decoder.2} parent=1 // pred_check
      _
    $region27: #{transformer_decoder.2} parent=1 // pred_check_branch
      %81 = sbr.rel (0) target = $region29
    $region28: #{transformer_decoder.2} parent=1 // pred_region
      %83 = vsyncadd [#allocation8], 0
      %s84 = sshll.u32 %s6, 4
      %s85 = int_to_ptr.hbm [resolvable:$true] %s84
      %s86 = sshll.u32 [#allocation9], 4
      %s87 = int_to_ptr.vmem [resolvable:$true] %s86
      %92 = dma.hbm_to_vmem [thread:$0]  %s85, 2048, %s87, [#allocation8], 128, 128, 8
    $region29: #{transformer_decoder.2} parent=1 // pred_fallthru
      _
    // Predicated region
    $region30: #{transformer_decoder.2} parent=1 // pred_check
      _
    $region31: #{transformer_decoder.2} parent=1 // pred_check_branch
      %94 = sbr.rel (0) target = $region33
    $region32: #{transformer_decoder.2} parent=1 // pred_region
      _
    $region33: #{transformer_decoder.2} parent=1 // pred_fallthru
      _
    // Predicated region
    $region34: #{transformer_decoder.2} parent=1 // pred_check
      _
    $region35: #{transformer_decoder.2} parent=1 // pred_check_branch
      %96 = sbr.rel (0) target = $region37
    $region36: #{transformer_decoder.2} parent=1 // pred_region
      _
    $region37: #{transformer_decoder.2} parent=1 // pred_fallthru
      _
    // Predicated region
    $region38: #{transformer_decoder.2} parent=1 // pred_check
      _
    $region39: #{transformer_decoder.2} parent=1 // pred_check_branch
      %98 = sbr.rel (0) target = $region41
    $region40: #{transformer_decoder.2} parent=1 // pred_region
      _
    $region41: #{transformer_decoder.2} parent=1 // pred_fallthru
      _
    // Predicated region
    $region42: #{transformer_decoder.2} parent=1 // pred_check
      _
    $region43: #{transformer_decoder.2} parent=1 // pred_check_branch
      %100 = sbr.rel (0) target = $region45
    $region44: #{transformer_decoder.2} parent=1 // pred_region
      %102 = vsyncadd [#allocation11], 0
      %s103 = sshll.u32 %s10, 4
      %s104 = int_to_ptr.hbm [resolvable:$true] %s103
      %s105 = sshll.u32 [#allocation10], 4
      %s106 = int_to_ptr.vmem [resolvable:$true] %s105
      %111 = dma.hbm_to_vmem [thread:$0]  %s104, 4096, %s106, [#allocation11], 256, 256, 16
    $region45: #{transformer_decoder.2} parent=1 // pred_fallthru
      _
    // Predicated region
    $region46: #{transformer_decoder.2} parent=1 // pred_check
      _
    $region47: #{transformer_decoder.2} parent=1 // pred_check_branch
      %113 = sbr.rel (0) target = $region49
    $region48: #{transformer_decoder.2} parent=1 // pred_region
      _
    $region49: #{transformer_decoder.2} parent=1 // pred_fallthru
      _
    // Predicated region
    $region50: #{transformer_decoder.2} parent=1 // pred_check
      _
    $region51: #{transformer_decoder.2} parent=1 // pred_check_branch
      %115 = sbr.rel (0) target = $region53
    $region52: #{transformer_decoder.2} parent=1 // pred_region
      %117 = vsyncadd [#allocation11], 0
      %s118 = sshll.u32 %s12, 4
      %s119 = int_to_ptr.hbm [resolvable:$true] %s118
      %s120 = sshll.u32 [#allocation12], 4
      %s121 = int_to_ptr.vmem [resolvable:$true] %s120
      %126 = dma.hbm_to_vmem [thread:$0]  %s119, 4096, %s121, [#allocation11], 128, 128, 8
    $region53: #{transformer_decoder.2} parent=1 // pred_fallthru
      _
    // Predicated region
    $region54: #{transformer_decoder.2} parent=1 // pred_check
      _
    $region55: #{transformer_decoder.2} parent=1 // pred_check_branch
      %128 = sbr.rel (0) target = $region57
    $region56: #{transformer_decoder.2} parent=1 // pred_region
      %130 = vsyncadd [#allocation14], 0
      %s132 = sshll.u32 %s13, 4
      %s133 = int_to_ptr.hbm [resolvable:$true] %s132
      %s134 = sshll.u32 [#allocation13], 4
      %s135 = int_to_ptr.vmem [resolvable:$true] %s134
      %137 = dma.hbm_to_vmem [thread:$0]  %s133, 16, %s135, [#allocation14]
    $region57: #{transformer_decoder.2} parent=1 // pred_fallthru
      _
    // Predicated region
    $region58: #{transformer_decoder.2} parent=1 // pred_check
      _
    $region59: #{transformer_decoder.2} parent=1 // pred_check_branch
      %139 = sbr.rel (0) target = $region61
    $region60: #{transformer_decoder.2} parent=1 // pred_region
      %141 = dma.done [#allocation3], 256
    $region61: #{transformer_decoder.2} parent=1 // pred_fallthru
      _
    // Predicated region
    $region62: #{transformer_decoder.2} parent=1 // pred_check
      _
    $region63: #{transformer_decoder.2} parent=1 // pred_check_branch
      %143 = sbr.rel (0) target = $region65
    $region64: #{transformer_decoder.2} parent=1 // pred_region
      %145 = dma.done [#allocation5], 256
    $region65: #{transformer_decoder.2} parent=1 // pred_fallthru
      _
    // Predicated region
    $region66: #{transformer_decoder.2} parent=1 // pred_check
      _
    $region67: #{transformer_decoder.2} parent=1 // pred_check_branch
      %147 = sbr.rel (0) target = $region69
    $region68: #{transformer_decoder.2} parent=1 // pred_region
      %149 = dma.done [#allocation5], 2048
    $region69: #{transformer_decoder.2} parent=1 // pred_fallthru
      _
    // Predicated region
    $region70: #{transformer_decoder.2} parent=1 // pred_check
      _
    $region71: #{transformer_decoder.2} parent=1 // pred_check_branch
      %151 = sbr.rel (0) target = $region73
    $region72: #{transformer_decoder.2} parent=1 // pred_region
      %153 = dma.done [#allocation8], 4096
    $region73: #{transformer_decoder.2} parent=1 // pred_fallthru
      _
    // Predicated region
    $region74: #{transformer_decoder.2} parent=1 // pred_check
      _
    $region75: #{transformer_decoder.2} parent=1 // pred_check_branch
      %155 = sbr.rel (0) target = $region77
    $region76: #{transformer_decoder.2} parent=1 // pred_region
      %157 = dma.done [#allocation8], 2048
    $region77: #{transformer_decoder.2} parent=1 // pred_fallthru
      _
    // Predicated region
    $region78: #{transformer_decoder.2} parent=1 // pred_check
      _
    $region79: #{transformer_decoder.2} parent=1 // pred_check_branch
      %159 = sbr.rel (0) target = $region81
    $region80: #{transformer_decoder.2} parent=1 // pred_region
      %161 = dma.done [#allocation11], 4096
    $region81: #{transformer_decoder.2} parent=1 // pred_fallthru
      _
    // Predicated region
    $region82: #{transformer_decoder.2} parent=1 // pred_check
      _
    $region83: #{transformer_decoder.2} parent=1 // pred_check_branch
      %163 = sbr.rel (0) target = $region85
    $region84: #{transformer_decoder.2} parent=1 // pred_region
      %165 = dma.done [#allocation11], 4096
    $region85: #{transformer_decoder.2} parent=1 // pred_fallthru
      _
    // Predicated region
    $region86: #{transformer_decoder.2} parent=1 // pred_check
      _
    $region87: #{transformer_decoder.2} parent=1 // pred_check_branch
      %167 = sbr.rel (0) target = $region89
    $region88: #{transformer_decoder.2} parent=1 // pred_region
      %169 = dma.done [#allocation14], 16
    $region89: #{transformer_decoder.2} parent=1 // pred_fallthru
      _
    %v170 = vld [vmem:[#allocation2] sm:$0xff]
    %v171 = vld [vmem:[#allocation2 + $0x8] sm:$0xff]
    %v172 = vld [vmem:[#allocation4] sm:$0xff]
    %v173 = vld [vmem:[#allocation4 + $0x8] sm:$0xff]
    %v174 = vld [vmem:[%s2] sm:$0x1]
    %v175 = vld [vmem:[%s3] sm:$0x1]
    %176 = vadd.xlane.f32.xlu0 %v170
    %v177 = vpop.xlane.xlu0 %176
    %178 = vadd.xlane.f32.xlu0 %v171
    %v179 = vpop.xlane.xlu0 %178
    %v180 = vrcp.pop 128.0
    %v181 = vmul.f32 128.0, %v180
    %v182 = vsub.f32 1.0, %v181
    %v183 = vmul.f32 %v180, %v182
    %v184 = vadd.f32 %v180, %v183
    %vm185 = vweird.f32 %v180
    %v186 = vsel %vm185, %v180, %v184
    %v187 = vmul.f32 %v177, %v186
    %v188 = vmul.f32 %v179, %v186
    %v189 = vsub.f32 %v170, %v187
    %v190 = vsub.f32 %v171, %v188
    %v191 = vmul.f32 %v189, %v189
    %v192 = vmul.f32 %v190, %v190
    %193 = vadd.xlane.f32.xlu0 %v191
    %v194 = vpop.xlane.xlu0 %193
    %195 = vadd.xlane.f32.xlu0 %v192
    %v196 = vpop.xlane.xlu0 %195
    %v197 = vmul.f32 %v194, %v186
    %v198 = vmul.f32 %v196, %v186
    %v199 = vadd.f32 %v197, 1e-05
    %v200 = vadd.f32 %v198, 1e-05
    %v201 = vrsqrt.pop %v199
    %v202 = vmul.f32 %v201, %v199
    %v203 = vmul.f32 %v202, %v201
    %v204 = vmul.f32 0.5, %v203
    %v205 = vsub.f32 1.5, %v204
    %v206 = vmul.f32 %v201, %v205
    %vm207 = vweird.f32 %v199
    %vm208 = vweird.f32 %v201
    %vm209 = vmor %vm207, %vm208
    %v210 = vsel %vm209, %v201, %v206
    %v211 = vrsqrt.pop %v200
    %v212 = vmul.f32 %v211, %v200
    %v213 = vmul.f32 %v212, %v211
    %v214 = vmul.f32 0.5, %v213
    %v215 = vsub.f32 1.5, %v214
    %v216 = vmul.f32 %v211, %v215
    %vm217 = vweird.f32 %v200
    %vm218 = vweird.f32 %v211
    %vm219 = vmor %vm217, %vm218
    %v220 = vsel %vm219, %v211, %v216
    %v221 = vmul.f32 %v189, %v210
    %v222 = vmul.f32 %v190, %v220
    %v224 = vperm.slane %v174, 0
    %v226 = vmul.f32 %v221, %v224
    %v227 = vmul.f32 %v222, %v224
    %v229 = vperm.slane %v175, 0
    %v231 = vadd.f32 %v226, %v229
    %v232 = vadd.f32 %v227, %v229
    %233 = vadd.xlane.f32.xlu0 %v172
    %v234 = vpop.xlane.xlu0 %233
    %235 = vadd.xlane.f32.xlu0 %v173
    %v236 = vpop.xlane.xlu0 %235
    %v237 = vmul.f32 %v234, %v186
    %v238 = vmul.f32 %v236, %v186
    %v239 = vsub.f32 %v172, %v237
    %v240 = vsub.f32 %v173, %v238
    %v241 = vmul.f32 %v239, %v239
    %v242 = vmul.f32 %v240, %v240
    %243 = vadd.xlane.f32.xlu0 %v241
    %v244 = vpop.xlane.xlu0 %243
    %245 = vadd.xlane.f32.xlu0 %v242
    %v246 = vpop.xlane.xlu0 %245
    %v247 = vmul.f32 %v244, %v186
    %v248 = vmul.f32 %v246, %v186
    %v249 = vadd.f32 %v247, 1e-05
    %v250 = vadd.f32 %v248, 1e-05
    %v251 = vrsqrt.pop %v249
    %v252 = vmul.f32 %v251, %v249
    %v253 = vmul.f32 %v252, %v251
    %v254 = vmul.f32 0.5, %v253
    %v255 = vsub.f32 1.5, %v254
    %v256 = vmul.f32 %v251, %v255
    %vm257 = vweird.f32 %v249
    %vm258 = vweird.f32 %v251
    %vm259 = vmor %vm257, %vm258
    %v260 = vsel %vm259, %v251, %v256
    %v261 = vrsqrt.pop %v250
    %v262 = vmul.f32 %v261, %v250
    %v263 = vmul.f32 %v262, %v261
    %v264 = vmul.f32 0.5, %v263
    %v265 = vsub.f32 1.5, %v264
    %v266 = vmul.f32 %v261, %v265
    %vm267 = vweird.f32 %v250
    %vm268 = vweird.f32 %v261
    %vm269 = vmor %vm267, %vm268
    %v270 = vsel %vm269, %v261, %v266
    %v271 = vmul.f32 %v239, %v260
    %v272 = vmul.f32 %v240, %v270
    %v273 = vmul.f32 %v271, %v224
    %v274 = vmul.f32 %v272, %v224
    %v275 = vadd.f32 %v273, %v229
    %v276 = vadd.f32 %v274, %v229
    %v277 = vld [vmem:[#allocation6] sm:$0xff]
    %v278 = vld [vmem:[#allocation6 + $0x8] sm:$0xff]
    %v279 = vld [vmem:[#allocation6 + $0x10] sm:$0xff]
    %v280 = vld [vmem:[#allocation6 + $0x18] sm:$0xff]
    %v281 = vld [vmem:[#allocation6 + $0x20] sm:$0xff]
    %v282 = vld [vmem:[#allocation6 + $0x28] sm:$0xff]
    %v283 = vld [vmem:[#allocation6 + $0x30] sm:$0xff]
    %v284 = vld [vmem:[#allocation6 + $0x38] sm:$0xff]
    %v285 = vld [vmem:[#allocation6 + $0x40] sm:$0xff]
    %v286 = vld [vmem:[#allocation6 + $0x48] sm:$0xff]
    %v287 = vld [vmem:[#allocation6 + $0x50] sm:$0xff]
    %v288 = vld [vmem:[#allocation6 + $0x58] sm:$0xff]
    %v289 = vld [vmem:[#allocation6 + $0x60] sm:$0xff]
    %v290 = vld [vmem:[#allocation6 + $0x68] sm:$0xff]
    %v291 = vld [vmem:[#allocation6 + $0x70] sm:$0xff]
    %v292 = vld [vmem:[#allocation6 + $0x78] sm:$0xff]
    %293 = vmatpush.msra.mxu0 %v292
    %294 = vmatpush.msra.mxu0 %v291
    %295 = vmatpush.msra.mxu0 %v290
    %296 = vmatpush.msra.mxu0 %v289
    %297 = vmatpush.msra.mxu0 %v288
    %298 = vmatpush.msra.mxu0 %v287
    %299 = vmatpush.msra.mxu0 %v286
    %300 = vmatpush.msra.mxu0 %v285
    %301 = vmatpush.msra.mxu0 %v284
    %302 = vmatpush.msra.mxu0 %v283
    %303 = vmatpush.msra.mxu0 %v282
    %304 = vmatpush.msra.mxu0 %v281
    %305 = vmatpush.msra.mxu0 %v280
    %306 = vmatpush.msra.mxu0 %v279
    %307 = vmatpush.msra.mxu0 %v278
    %308 = vmatpush.msra.mxu0 %v277
    %309 = vmatmul.f32.gmra.mxu0 %v231
    %v310 = vpop.f32.mrf.mxu0
    %v311 = vadd.f32 0.0, %v310
    %312 = vmatmul.f32.gmra.mxu0 %v232
    %v313 = vpop.f32.mrf.mxu0
    %v314 = vadd.f32 0.0, %v313
    %315 = vdwg.mxu0
    %v316 = vld [vmem:[#allocation7] sm:$0xff]
    %v317 = vld [vmem:[#allocation7 + $0x8] sm:$0xff]
    %v318 = vld [vmem:[#allocation7 + $0x10] sm:$0xff]
    %v319 = vld [vmem:[#allocation7 + $0x18] sm:$0xff]
    %v320 = vld [vmem:[#allocation7 + $0x20] sm:$0xff]
    %v321 = vld [vmem:[#allocation7 + $0x28] sm:$0xff]
    %v322 = vld [vmem:[#allocation7 + $0x30] sm:$0xff]
    %v323 = vld [vmem:[#allocation7 + $0x38] sm:$0xff]
    %v324 = vld [vmem:[#allocation7 + $0x40] sm:$0xff]
    %v325 = vld [vmem:[#allocation7 + $0x48] sm:$0xff]
    %v326 = vld [vmem:[#allocation7 + $0x50] sm:$0xff]
    %v327 = vld [vmem:[#allocation7 + $0x58] sm:$0xff]
    %v328 = vld [vmem:[#allocation7 + $0x60] sm:$0xff]
    %v329 = vld [vmem:[#allocation7 + $0x68] sm:$0xff]
    %v330 = vld [vmem:[#allocation7 + $0x70] sm:$0xff]
    %v331 = vld [vmem:[#allocation7 + $0x78] sm:$0xff]
    %v332 = vld [vmem:[#allocation7 + $0x80] sm:$0xff]
    %v333 = vld [vmem:[#allocation7 + $0x88] sm:$0xff]
    %v334 = vld [vmem:[#allocation7 + $0x90] sm:$0xff]
    %v335 = vld [vmem:[#allocation7 + $0x98] sm:$0xff]
    %v336 = vld [vmem:[#allocation7 + $0xa0] sm:$0xff]
    %v337 = vld [vmem:[#allocation7 + $0xa8] sm:$0xff]
    %v338 = vld [vmem:[#allocation7 + $0xb0] sm:$0xff]
    %v339 = vld [vmem:[#allocation7 + $0xb8] sm:$0xff]
    %v340 = vld [vmem:[#allocation7 + $0xc0] sm:$0xff]
    %v341 = vld [vmem:[#allocation7 + $0xc8] sm:$0xff]
    %v342 = vld [vmem:[#allocation7 + $0xd0] sm:$0xff]
    %v343 = vld [vmem:[#allocation7 + $0xd8] sm:$0xff]
    %v344 = vld [vmem:[#allocation7 + $0xe0] sm:$0xff]
    %v345 = vld [vmem:[#allocation7 + $0xe8] sm:$0xff]
    %v346 = vld [vmem:[#allocation7 + $0xf0] sm:$0xff]
    %v347 = vld [vmem:[#allocation7 + $0xf8] sm:$0xff]
    %348 = vmatpush.msra.mxu0 %v346
    %349 = vmatpush.msra.mxu0 %v344
    %350 = vmatpush.msra.mxu0 %v342
    %351 = vmatpush.msra.mxu0 %v340
    %352 = vmatpush.msra.mxu0 %v338
    %353 = vmatpush.msra.mxu0 %v336
    %354 = vmatpush.msra.mxu0 %v334
    %355 = vmatpush.msra.mxu0 %v332
    %356 = vmatpush.msra.mxu0 %v330
    %357 = vmatpush.msra.mxu0 %v328
    %358 = vmatpush.msra.mxu0 %v326
    %359 = vmatpush.msra.mxu0 %v324
    %360 = vmatpush.msra.mxu0 %v322
    %361 = vmatpush.msra.mxu0 %v320
    %362 = vmatpush.msra.mxu0 %v318
    %363 = vmatpush.msra.mxu0 %v316
    %364 = vmatmul.f32.gmra.mxu0 %v275
    %v365 = vpop.f32.mrf.mxu0
    %v366 = vadd.f32 0.0, %v365
    %367 = vmatmul.f32.gmra.mxu0 %v276
    %v368 = vpop.f32.mrf.mxu0
    %v369 = vadd.f32 0.0, %v368
    %370 = vdwg.mxu0
    %371 = vmatpush.msra.mxu0 %v347
    %372 = vmatpush.msra.mxu0 %v345
    %373 = vmatpush.msra.mxu0 %v343
    %374 = vmatpush.msra.mxu0 %v341
    %375 = vmatpush.msra.mxu0 %v339
    %376 = vmatpush.msra.mxu0 %v337
    %377 = vmatpush.msra.mxu0 %v335
    %378 = vmatpush.msra.mxu0 %v333
    %379 = vmatpush.msra.mxu0 %v331
    %380 = vmatpush.msra.mxu0 %v329
    %381 = vmatpush.msra.mxu0 %v327
    %382 = vmatpush.msra.mxu0 %v325
    %383 = vmatpush.msra.mxu0 %v323
    %384 = vmatpush.msra.mxu0 %v321
    %385 = vmatpush.msra.mxu0 %v319
    %386 = vmatpush.msra.mxu0 %v317
    %387 = vmatmul.f32.gmra.mxu0 %v275
    %v388 = vpop.f32.mrf.mxu0
    %v389 = vadd.f32 0.0, %v388
    %390 = vmatmul.f32.gmra.mxu0 %v276
    %v391 = vpop.f32.mrf.mxu0
    %v392 = vadd.f32 0.0, %v391
    %393 = vdwg.mxu0
    %vm394 = vcmask 261120
    %v396 = vsel %vm394, %v311, 0
    %v399 = vsel %vm394, %v366, 0
    %401 = vmatpush.xpose.msra.mxu0 0.0
    %402 = vmatpush.xpose.msra.mxu0 0.0
    %403 = vmatpush.xpose.msra.mxu0 0.0
    %404 = vmatpush.xpose.msra.mxu0 0.0
    %405 = vmatpush.xpose.msra.mxu0 0.0
    %406 = vmatpush.xpose.msra.mxu0 0.0
    %407 = vmatpush.xpose.msra.mxu0 0.0
    %408 = vmatpush.xpose.msra.mxu0 0.0
    %409 = vmatpush.xpose.msra.mxu0 0.0
    %410 = vmatpush.xpose.msra.mxu0 0.0
    %411 = vmatpush.xpose.msra.mxu0 0.0
    %412 = vmatpush.xpose.msra.mxu0 0.0
    %413 = vmatpush.xpose.msra.mxu0 0.0
    %414 = vmatpush.xpose.msra.mxu0 0.0
    %415 = vmatpush.xpose.msra.mxu0 0.0
    %416 = vmatpush.xpose.msra.mxu0 %v399
    %417 = vmatmul.f32.gmra.mxu0 %v396
    %v418 = vpop.f32.mrf.mxu0
    %v419 = vadd.f32 0.0, %v418
    %420 = vdwg.mxu0
    %v422 = vsel %vm394, %v314, 0
    %v425 = vsel %vm394, %v369, 0
    %427 = vmatpush.xpose.msra.mxu0 0.0
    %428 = vmatpush.xpose.msra.mxu0 0.0
    %429 = vmatpush.xpose.msra.mxu0 0.0
    %430 = vmatpush.xpose.msra.mxu0 0.0
    %431 = vmatpush.xpose.msra.mxu0 0.0
    %432 = vmatpush.xpose.msra.mxu0 0.0
    %433 = vmatpush.xpose.msra.mxu0 0.0
    %434 = vmatpush.xpose.msra.mxu0 0.0
    %435 = vmatpush.xpose.msra.mxu0 0.0
    %436 = vmatpush.xpose.msra.mxu0 0.0
    %437 = vmatpush.xpose.msra.mxu0 0.0
    %438 = vmatpush.xpose.msra.mxu0 0.0
    %439 = vmatpush.xpose.msra.mxu0 0.0
    %440 = vmatpush.xpose.msra.mxu0 0.0
    %441 = vmatpush.xpose.msra.mxu0 0.0
    %442 = vmatpush.xpose.msra.mxu0 %v425
    %443 = vmatmul.f32.gmra.mxu0 %v422
    %v444 = vpop.f32.mrf.mxu0
    %v445 = vadd.f32 0.0, %v444
    %446 = vdwg.mxu0
    %v447 = vmul.f32 %v419, 0.088388346
    %v448 = vmul.f32 %v445, 0.088388346
    %vm449 = vcmask 64512
    %v450 = vsel %vm449, %v447, -inf
    %451 = vmax.xlane.f32.xlu0 %v450
    %v452 = vpop.xlane.xlu0 %451
    %v453 = vsel %vm449, %v448, -inf
    %454 = vmax.xlane.f32.xlu0 %v453
    %v455 = vpop.xlane.xlu0 %454
    %v456 = vsub.f32 %v447, %v452
    %v457 = vsub.f32 %v448, %v455
    %v458 = vmul.f32 %v456, 1.442695
    %v459 = vpow.pop %v458
    %v460 = vmul.f32 %v457, 1.442695
    %v461 = vpow.pop %v460
    %v462 = vsel %vm449, %v459, 0.0
    %463 = vadd.xlane.f32.xlu0 %v462
    %v464 = vpop.xlane.xlu0 %463
    %v465 = vsel %vm449, %v461, 0.0
    %466 = vadd.xlane.f32.xlu0 %v465
    %v467 = vpop.xlane.xlu0 %466
    %v468 = vrcp.pop %v464
    %v469 = vmul.f32 %v464, %v468
    %v470 = vsub.f32 1.0, %v469
    %v471 = vmul.f32 %v468, %v470
    %v472 = vadd.f32 %v468, %v471
    %vm473 = vweird.f32 %v464
    %vm474 = vweird.f32 %v468
    %vm475 = vmor %vm473, %vm474
    %v476 = vsel %vm475, %v468, %v472
    %v477 = vand.u32 2147483647, %v464
    %vm478 = vcmp.eq.f32.partialorder %v477, 8.507059e+37
    %v479 = vand.u32 %v464, 2147483648
    %v480 = vor.u32 1.1754944e-38, %v479
    %v481 = vsel %vm478, %v480, %v476
    %v482 = vmul.f32 %v459, %v481
    %v483 = vrcp.pop %v467
    %v484 = vmul.f32 %v467, %v483
    %v485 = vsub.f32 1.0, %v484
    %v486 = vmul.f32 %v483, %v485
    %v487 = vadd.f32 %v483, %v486
    %vm488 = vweird.f32 %v467
    %vm489 = vweird.f32 %v483
    %vm490 = vmor %vm488, %vm489
    %v491 = vsel %vm490, %v483, %v487
    %v492 = vand.u32 2147483647, %v467
    %vm493 = vcmp.eq.f32.partialorder %v492, 8.507059e+37
    %v494 = vand.u32 %v467, 2147483648
    %v495 = vor.u32 1.1754944e-38, %v494
    %v496 = vsel %vm493, %v495, %v491
    %v497 = vmul.f32 %v461, %v496
    %v499 = vsel %vm449, %v482, 0
    %501 = vmatpush.msra.mxu0 0.0
    %502 = vmatpush.msra.mxu0 0.0
    %503 = vmatpush.msra.mxu0 0.0
    %504 = vmatpush.msra.mxu0 0.0
    %505 = vmatpush.msra.mxu0 0.0
    %506 = vmatpush.msra.mxu0 0.0
    %507 = vmatpush.msra.mxu0 0.0
    %508 = vmatpush.msra.mxu0 0.0
    %509 = vmatpush.msra.mxu0 0.0
    %510 = vmatpush.msra.mxu0 0.0
    %511 = vmatpush.msra.mxu0 0.0
    %512 = vmatpush.msra.mxu0 0.0
    %513 = vmatpush.msra.mxu0 0.0
    %514 = vmatpush.msra.mxu0 0.0
    %515 = vmatpush.msra.mxu0 0.0
    %516 = vmatpush.msra.mxu0 %v389
    %517 = vmatmul.f32.gmra.mxu0 %v499
    %v518 = vpop.f32.mrf.mxu0
    %v519 = vadd.f32 0.0, %v518
    %520 = vdwg.mxu0
    %v522 = vsel %vm449, %v497, 0
    %524 = vmatpush.msra.mxu0 0.0
    %525 = vmatpush.msra.mxu0 0.0
    %526 = vmatpush.msra.mxu0 0.0
    %527 = vmatpush.msra.mxu0 0.0
    %528 = vmatpush.msra.mxu0 0.0
    %529 = vmatpush.msra.mxu0 0.0
    %530 = vmatpush.msra.mxu0 0.0
    %531 = vmatpush.msra.mxu0 0.0
    %532 = vmatpush.msra.mxu0 0.0
    %533 = vmatpush.msra.mxu0 0.0
    %534 = vmatpush.msra.mxu0 0.0
    %535 = vmatpush.msra.mxu0 0.0
    %536 = vmatpush.msra.mxu0 0.0
    %537 = vmatpush.msra.mxu0 0.0
    %538 = vmatpush.msra.mxu0 0.0
    %539 = vmatpush.msra.mxu0 %v392
    %540 = vmatmul.f32.gmra.mxu0 %v522
    %v541 = vpop.f32.mrf.mxu0
    %v542 = vadd.f32 0.0, %v541
    %543 = vdwg.mxu0
    %544 = vrot.lane.b32.xlu0 %v311, 96
    %v545 = vpop.permute.xlu0 %544
    %546 = vrot.lane.b32.xlu0 %v366, 96
    %v547 = vpop.permute.xlu0 %546
    %v548 = vsel %vm394, %v545, 0
    %v550 = vsel %vm394, %v547, 0
    %552 = vmatpush.xpose.msra.mxu0 0.0
    %553 = vmatpush.xpose.msra.mxu0 0.0
    %554 = vmatpush.xpose.msra.mxu0 0.0
    %555 = vmatpush.xpose.msra.mxu0 0.0
    %556 = vmatpush.xpose.msra.mxu0 0.0
    %557 = vmatpush.xpose.msra.mxu0 0.0
    %558 = vmatpush.xpose.msra.mxu0 0.0
    %559 = vmatpush.xpose.msra.mxu0 0.0
    %560 = vmatpush.xpose.msra.mxu0 0.0
    %561 = vmatpush.xpose.msra.mxu0 0.0
    %562 = vmatpush.xpose.msra.mxu0 0.0
    %563 = vmatpush.xpose.msra.mxu0 0.0
    %564 = vmatpush.xpose.msra.mxu0 0.0
    %565 = vmatpush.xpose.msra.mxu0 0.0
    %566 = vmatpush.xpose.msra.mxu0 0.0
    %567 = vmatpush.xpose.msra.mxu0 %v550
    %568 = vmatmul.f32.gmra.mxu0 %v548
    %v569 = vpop.f32.mrf.mxu0
    %v570 = vadd.f32 0.0, %v569
    %571 = vdwg.mxu0
    %572 = vrot.lane.b32.xlu0 %v314, 96
    %v573 = vpop.permute.xlu0 %572
    %574 = vrot.lane.b32.xlu0 %v369, 96
    %v575 = vpop.permute.xlu0 %574
    %v576 = vsel %vm394, %v573, 0
    %v578 = vsel %vm394, %v575, 0
    %580 = vmatpush.xpose.msra.mxu0 0.0
    %581 = vmatpush.xpose.msra.mxu0 0.0
    %582 = vmatpush.xpose.msra.mxu0 0.0
    %583 = vmatpush.xpose.msra.mxu0 0.0
    %584 = vmatpush.xpose.msra.mxu0 0.0
    %585 = vmatpush.xpose.msra.mxu0 0.0
    %586 = vmatpush.xpose.msra.mxu0 0.0
    %587 = vmatpush.xpose.msra.mxu0 0.0
    %588 = vmatpush.xpose.msra.mxu0 0.0
    %589 = vmatpush.xpose.msra.mxu0 0.0
    %590 = vmatpush.xpose.msra.mxu0 0.0
    %591 = vmatpush.xpose.msra.mxu0 0.0
    %592 = vmatpush.xpose.msra.mxu0 0.0
    %593 = vmatpush.xpose.msra.mxu0 0.0
    %594 = vmatpush.xpose.msra.mxu0 0.0
    %595 = vmatpush.xpose.msra.mxu0 %v578
    %596 = vmatmul.f32.gmra.mxu0 %v576
    %v597 = vpop.f32.mrf.mxu0
    %v598 = vadd.f32 0.0, %v597
    %599 = vdwg.mxu0
    %v600 = vmul.f32 %v570, 0.088388346
    %v601 = vmul.f32 %v598, 0.088388346
    %v602 = vsel %vm449, %v600, -inf
    %603 = vmax.xlane.f32.xlu0 %v602
    %v604 = vpop.xlane.xlu0 %603
    %v605 = vsel %vm449, %v601, -inf
    %606 = vmax.xlane.f32.xlu0 %v605
    %v607 = vpop.xlane.xlu0 %606
    %v608 = vsub.f32 %v600, %v604
    %v609 = vsub.f32 %v601, %v607
    %v610 = vmul.f32 %v608, 1.442695
    %v611 = vpow.pop %v610
    %v612 = vmul.f32 %v609, 1.442695
    %v613 = vpow.pop %v612
    %v614 = vsel %vm449, %v611, 0.0
    %615 = vadd.xlane.f32.xlu0 %v614
    %v616 = vpop.xlane.xlu0 %615
    %v617 = vsel %vm449, %v613, 0.0
    %618 = vadd.xlane.f32.xlu0 %v617
    %v619 = vpop.xlane.xlu0 %618
    %v620 = vrcp.pop %v616
    %v621 = vmul.f32 %v616, %v620
    %v622 = vsub.f32 1.0, %v621
    %v623 = vmul.f32 %v620, %v622
    %v624 = vadd.f32 %v620, %v623
    %vm625 = vweird.f32 %v616
    %vm626 = vweird.f32 %v620
    %vm627 = vmor %vm625, %vm626
    %v628 = vsel %vm627, %v620, %v624
    %v629 = vand.u32 2147483647, %v616
    %vm630 = vcmp.eq.f32.partialorder %v629, 8.507059e+37
    %v631 = vand.u32 %v616, 2147483648
    %v632 = vor.u32 1.1754944e-38, %v631
    %v633 = vsel %vm630, %v632, %v628
    %v634 = vmul.f32 %v611, %v633
    %v635 = vrcp.pop %v619
    %v636 = vmul.f32 %v619, %v635
    %v637 = vsub.f32 1.0, %v636
    %v638 = vmul.f32 %v635, %v637
    %v639 = vadd.f32 %v635, %v638
    %vm640 = vweird.f32 %v619
    %vm641 = vweird.f32 %v635
    %vm642 = vmor %vm640, %vm641
    %v643 = vsel %vm642, %v635, %v639
    %v644 = vand.u32 2147483647, %v619
    %vm645 = vcmp.eq.f32.partialorder %v644, 8.507059e+37
    %v646 = vand.u32 %v619, 2147483648
    %v647 = vor.u32 1.1754944e-38, %v646
    %v648 = vsel %vm645, %v647, %v643
    %v649 = vmul.f32 %v613, %v648
    %651 = vrot.lane.b32.xlu0 %v389, 96
    %v652 = vpop.permute.xlu0 %651
    %v655 = vsel %vm449, %v634, 0
    %657 = vmatpush.msra.mxu0 0.0
    %658 = vmatpush.msra.mxu0 0.0
    %659 = vmatpush.msra.mxu0 0.0
    %660 = vmatpush.msra.mxu0 0.0
    %661 = vmatpush.msra.mxu0 0.0
    %662 = vmatpush.msra.mxu0 0.0
    %663 = vmatpush.msra.mxu0 0.0
    %664 = vmatpush.msra.mxu0 0.0
    %665 = vmatpush.msra.mxu0 0.0
    %666 = vmatpush.msra.mxu0 0.0
    %667 = vmatpush.msra.mxu0 0.0
    %668 = vmatpush.msra.mxu0 0.0
    %669 = vmatpush.msra.mxu0 0.0
    %670 = vmatpush.msra.mxu0 0.0
    %671 = vmatpush.msra.mxu0 0.0
    %672 = vmatpush.msra.mxu0 %v652
    %673 = vmatmul.f32.gmra.mxu0 %v655
    %v674 = vpop.f32.mrf.mxu0
    %v675 = vadd.f32 0.0, %v674
    %676 = vdwg.mxu0
    %678 = vrot.lane.b32.xlu0 %v392, 96
    %v679 = vpop.permute.xlu0 %678
    %v682 = vsel %vm449, %v649, 0
    %684 = vmatpush.msra.mxu0 0.0
    %685 = vmatpush.msra.mxu0 0.0
    %686 = vmatpush.msra.mxu0 0.0
    %687 = vmatpush.msra.mxu0 0.0
    %688 = vmatpush.msra.mxu0 0.0
    %689 = vmatpush.msra.mxu0 0.0
    %690 = vmatpush.msra.mxu0 0.0
    %691 = vmatpush.msra.mxu0 0.0
    %692 = vmatpush.msra.mxu0 0.0
    %693 = vmatpush.msra.mxu0 0.0
    %694 = vmatpush.msra.mxu0 0.0
    %695 = vmatpush.msra.mxu0 0.0
    %696 = vmatpush.msra.mxu0 0.0
    %697 = vmatpush.msra.mxu0 0.0
    %698 = vmatpush.msra.mxu0 0.0
    %699 = vmatpush.msra.mxu0 %v679
    %700 = vmatmul.f32.gmra.mxu0 %v682
    %v701 = vpop.f32.mrf.mxu0
    %v702 = vadd.f32 0.0, %v701
    %703 = vdwg.mxu0
    %704 = vrot.lane.b32.xlu0 %v311, 64
    %v705 = vpop.permute.xlu0 %704
    %706 = vrot.lane.b32.xlu0 %v366, 64
    %v707 = vpop.permute.xlu0 %706
    %v708 = vsel %vm394, %v705, 0
    %v710 = vsel %vm394, %v707, 0
    %712 = vmatpush.xpose.msra.mxu0 0.0
    %713 = vmatpush.xpose.msra.mxu0 0.0
    %714 = vmatpush.xpose.msra.mxu0 0.0
    %715 = vmatpush.xpose.msra.mxu0 0.0
    %716 = vmatpush.xpose.msra.mxu0 0.0
    %717 = vmatpush.xpose.msra.mxu0 0.0
    %718 = vmatpush.xpose.msra.mxu0 0.0
    %719 = vmatpush.xpose.msra.mxu0 0.0
    %720 = vmatpush.xpose.msra.mxu0 0.0
    %721 = vmatpush.xpose.msra.mxu0 0.0
    %722 = vmatpush.xpose.msra.mxu0 0.0
    %723 = vmatpush.xpose.msra.mxu0 0.0
    %724 = vmatpush.xpose.msra.mxu0 0.0
    %725 = vmatpush.xpose.msra.mxu0 0.0
    %726 = vmatpush.xpose.msra.mxu0 0.0
    %727 = vmatpush.xpose.msra.mxu0 %v710
    %728 = vmatmul.f32.gmra.mxu0 %v708
    %v729 = vpop.f32.mrf.mxu0
    %v730 = vadd.f32 0.0, %v729
    %731 = vdwg.mxu0
    %732 = vrot.lane.b32.xlu0 %v314, 64
    %v733 = vpop.permute.xlu0 %732
    %734 = vrot.lane.b32.xlu0 %v369, 64
    %v735 = vpop.permute.xlu0 %734
    %v736 = vsel %vm394, %v733, 0
    %v738 = vsel %vm394, %v735, 0
    %740 = vmatpush.xpose.msra.mxu0 0.0
    %741 = vmatpush.xpose.msra.mxu0 0.0
    %742 = vmatpush.xpose.msra.mxu0 0.0
    %743 = vmatpush.xpose.msra.mxu0 0.0
    %744 = vmatpush.xpose.msra.mxu0 0.0
    %745 = vmatpush.xpose.msra.mxu0 0.0
    %746 = vmatpush.xpose.msra.mxu0 0.0
    %747 = vmatpush.xpose.msra.mxu0 0.0
    %748 = vmatpush.xpose.msra.mxu0 0.0
    %749 = vmatpush.xpose.msra.mxu0 0.0
    %750 = vmatpush.xpose.msra.mxu0 0.0
    %751 = vmatpush.xpose.msra.mxu0 0.0
    %752 = vmatpush.xpose.msra.mxu0 0.0
    %753 = vmatpush.xpose.msra.mxu0 0.0
    %754 = vmatpush.xpose.msra.mxu0 0.0
    %755 = vmatpush.xpose.msra.mxu0 %v738
    %756 = vmatmul.f32.gmra.mxu0 %v736
    %v757 = vpop.f32.mrf.mxu0
    %v758 = vadd.f32 0.0, %v757
    %759 = vdwg.mxu0
    %v760 = vmul.f32 %v730, 0.088388346
    %v761 = vmul.f32 %v758, 0.088388346
    %v762 = vsel %vm449, %v760, -inf
    %763 = vmax.xlane.f32.xlu0 %v762
    %v764 = vpop.xlane.xlu0 %763
    %v765 = vsel %vm449, %v761, -inf
    %766 = vmax.xlane.f32.xlu0 %v765
    %v767 = vpop.xlane.xlu0 %766
    %v768 = vsub.f32 %v760, %v764
    %v769 = vsub.f32 %v761, %v767
    %v770 = vmul.f32 %v768, 1.442695
    %v771 = vpow.pop %v770
    %v772 = vmul.f32 %v769, 1.442695
    %v773 = vpow.pop %v772
    %v774 = vsel %vm449, %v771, 0.0
    %775 = vadd.xlane.f32.xlu0 %v774
    %v776 = vpop.xlane.xlu0 %775
    %v777 = vsel %vm449, %v773, 0.0
    %778 = vadd.xlane.f32.xlu0 %v777
    %v779 = vpop.xlane.xlu0 %778
    %v780 = vrcp.pop %v776
    %v781 = vmul.f32 %v776, %v780
    %v782 = vsub.f32 1.0, %v781
    %v783 = vmul.f32 %v780, %v782
    %v784 = vadd.f32 %v780, %v783
    %vm785 = vweird.f32 %v776
    %vm786 = vweird.f32 %v780
    %vm787 = vmor %vm785, %vm786
    %v788 = vsel %vm787, %v780, %v784
    %v789 = vand.u32 2147483647, %v776
    %vm790 = vcmp.eq.f32.partialorder %v789, 8.507059e+37
    %v791 = vand.u32 %v776, 2147483648
    %v792 = vor.u32 1.1754944e-38, %v791
    %v793 = vsel %vm790, %v792, %v788
    %v794 = vmul.f32 %v771, %v793
    %v795 = vrcp.pop %v779
    %v796 = vmul.f32 %v779, %v795
    %v797 = vsub.f32 1.0, %v796
    %v798 = vmul.f32 %v795, %v797
    %v799 = vadd.f32 %v795, %v798
    %vm800 = vweird.f32 %v779
    %vm801 = vweird.f32 %v795
    %vm802 = vmor %vm800, %vm801
    %v803 = vsel %vm802, %v795, %v799
    %v804 = vand.u32 2147483647, %v779
    %vm805 = vcmp.eq.f32.partialorder %v804, 8.507059e+37
    %v806 = vand.u32 %v779, 2147483648
    %v807 = vor.u32 1.1754944e-38, %v806
    %v808 = vsel %vm805, %v807, %v803
    %v809 = vmul.f32 %v773, %v808
    %810 = vrot.lane.b32.xlu0 %v389, 64
    %v811 = vpop.permute.xlu0 %810
    %v814 = vsel %vm449, %v794, 0
    %816 = vmatpush.msra.mxu0 0.0
    %817 = vmatpush.msra.mxu0 0.0
    %818 = vmatpush.msra.mxu0 0.0
    %819 = vmatpush.msra.mxu0 0.0
    %820 = vmatpush.msra.mxu0 0.0
    %821 = vmatpush.msra.mxu0 0.0
    %822 = vmatpush.msra.mxu0 0.0
    %823 = vmatpush.msra.mxu0 0.0
    %824 = vmatpush.msra.mxu0 0.0
    %825 = vmatpush.msra.mxu0 0.0
    %826 = vmatpush.msra.mxu0 0.0
    %827 = vmatpush.msra.mxu0 0.0
    %828 = vmatpush.msra.mxu0 0.0
    %829 = vmatpush.msra.mxu0 0.0
    %830 = vmatpush.msra.mxu0 0.0
    %831 = vmatpush.msra.mxu0 %v811
    %832 = vmatmul.f32.gmra.mxu0 %v814
    %v833 = vpop.f32.mrf.mxu0
    %v834 = vadd.f32 0.0, %v833
    %835 = vdwg.mxu0
    %836 = vrot.lane.b32.xlu0 %v392, 64
    %v837 = vpop.permute.xlu0 %836
    %v840 = vsel %vm449, %v809, 0
    %842 = vmatpush.msra.mxu0 0.0
    %843 = vmatpush.msra.mxu0 0.0
    %844 = vmatpush.msra.mxu0 0.0
    %845 = vmatpush.msra.mxu0 0.0
    %846 = vmatpush.msra.mxu0 0.0
    %847 = vmatpush.msra.mxu0 0.0
    %848 = vmatpush.msra.mxu0 0.0
    %849 = vmatpush.msra.mxu0 0.0
    %850 = vmatpush.msra.mxu0 0.0
    %851 = vmatpush.msra.mxu0 0.0
    %852 = vmatpush.msra.mxu0 0.0
    %853 = vmatpush.msra.mxu0 0.0
    %854 = vmatpush.msra.mxu0 0.0
    %855 = vmatpush.msra.mxu0 0.0
    %856 = vmatpush.msra.mxu0 0.0
    %857 = vmatpush.msra.mxu0 %v837
    %858 = vmatmul.f32.gmra.mxu0 %v840
    %v859 = vpop.f32.mrf.mxu0
    %v860 = vadd.f32 0.0, %v859
    %861 = vdwg.mxu0
    %862 = vrot.lane.b32.xlu0 %v311, 32
    %v863 = vpop.permute.xlu0 %862
    %864 = vrot.lane.b32.xlu0 %v366, 32
    %v865 = vpop.permute.xlu0 %864
    %v866 = vsel %vm394, %v863, 0
    %v868 = vsel %vm394, %v865, 0
    %870 = vmatpush.xpose.msra.mxu0 0.0
    %871 = vmatpush.xpose.msra.mxu0 0.0
    %872 = vmatpush.xpose.msra.mxu0 0.0
    %873 = vmatpush.xpose.msra.mxu0 0.0
    %874 = vmatpush.xpose.msra.mxu0 0.0
    %875 = vmatpush.xpose.msra.mxu0 0.0
    %876 = vmatpush.xpose.msra.mxu0 0.0
    %877 = vmatpush.xpose.msra.mxu0 0.0
    %878 = vmatpush.xpose.msra.mxu0 0.0
    %879 = vmatpush.xpose.msra.mxu0 0.0
    %880 = vmatpush.xpose.msra.mxu0 0.0
    %881 = vmatpush.xpose.msra.mxu0 0.0
    %882 = vmatpush.xpose.msra.mxu0 0.0
    %883 = vmatpush.xpose.msra.mxu0 0.0
    %884 = vmatpush.xpose.msra.mxu0 0.0
    %885 = vmatpush.xpose.msra.mxu0 %v868
    %886 = vmatmul.f32.gmra.mxu0 %v866
    %v887 = vpop.f32.mrf.mxu0
    %v888 = vadd.f32 0.0, %v887
    %889 = vdwg.mxu0
    %890 = vrot.lane.b32.xlu0 %v314, 32
    %v891 = vpop.permute.xlu0 %890
    %892 = vrot.lane.b32.xlu0 %v369, 32
    %v893 = vpop.permute.xlu0 %892
    %v894 = vsel %vm394, %v891, 0
    %v896 = vsel %vm394, %v893, 0
    %898 = vmatpush.xpose.msra.mxu0 0.0
    %899 = vmatpush.xpose.msra.mxu0 0.0
    %900 = vmatpush.xpose.msra.mxu0 0.0
    %901 = vmatpush.xpose.msra.mxu0 0.0
    %902 = vmatpush.xpose.msra.mxu0 0.0
    %903 = vmatpush.xpose.msra.mxu0 0.0
    %904 = vmatpush.xpose.msra.mxu0 0.0
    %905 = vmatpush.xpose.msra.mxu0 0.0
    %906 = vmatpush.xpose.msra.mxu0 0.0
    %907 = vmatpush.xpose.msra.mxu0 0.0
    %908 = vmatpush.xpose.msra.mxu0 0.0
    %909 = vmatpush.xpose.msra.mxu0 0.0
    %910 = vmatpush.xpose.msra.mxu0 0.0
    %911 = vmatpush.xpose.msra.mxu0 0.0
    %912 = vmatpush.xpose.msra.mxu0 0.0
    %913 = vmatpush.xpose.msra.mxu0 %v896
    %914 = vmatmul.f32.gmra.mxu0 %v894
    %v915 = vpop.f32.mrf.mxu0
    %v916 = vadd.f32 0.0, %v915
    %917 = vdwg.mxu0
    %v918 = vmul.f32 %v888, 0.088388346
    %v919 = vmul.f32 %v916, 0.088388346
    %v920 = vsel %vm449, %v918, -inf
    %921 = vmax.xlane.f32.xlu0 %v920
    %v922 = vpop.xlane.xlu0 %921
    %v923 = vsel %vm449, %v919, -inf
    %924 = vmax.xlane.f32.xlu0 %v923
    %v925 = vpop.xlane.xlu0 %924
    %v926 = vsub.f32 %v918, %v922
    %v927 = vsub.f32 %v919, %v925
    %v928 = vmul.f32 %v926, 1.442695
    %v929 = vpow.pop %v928
    %v930 = vmul.f32 %v927, 1.442695
    %v931 = vpow.pop %v930
    %v932 = vsel %vm449, %v929, 0.0
    %933 = vadd.xlane.f32.xlu0 %v932
    %v934 = vpop.xlane.xlu0 %933
    %v935 = vsel %vm449, %v931, 0.0
    %936 = vadd.xlane.f32.xlu0 %v935
    %v937 = vpop.xlane.xlu0 %936
    %v938 = vrcp.pop %v934
    %v939 = vmul.f32 %v934, %v938
    %v940 = vsub.f32 1.0, %v939
    %v941 = vmul.f32 %v938, %v940
    %v942 = vadd.f32 %v938, %v941
    %vm943 = vweird.f32 %v934
    %vm944 = vweird.f32 %v938
    %vm945 = vmor %vm943, %vm944
    %v946 = vsel %vm945, %v938, %v942
    %v947 = vand.u32 2147483647, %v934
    %vm948 = vcmp.eq.f32.partialorder %v947, 8.507059e+37
    %v949 = vand.u32 %v934, 2147483648
    %v950 = vor.u32 1.1754944e-38, %v949
    %v951 = vsel %vm948, %v950, %v946
    %v952 = vmul.f32 %v929, %v951
    %v953 = vrcp.pop %v937
    %v954 = vmul.f32 %v937, %v953
    %v955 = vsub.f32 1.0, %v954
    %v956 = vmul.f32 %v953, %v955
    %v957 = vadd.f32 %v953, %v956
    %vm958 = vweird.f32 %v937
    %vm959 = vweird.f32 %v953
    %vm960 = vmor %vm958, %vm959
    %v961 = vsel %vm960, %v953, %v957
    %v962 = vand.u32 2147483647, %v937
    %vm963 = vcmp.eq.f32.partialorder %v962, 8.507059e+37
    %v964 = vand.u32 %v937, 2147483648
    %v965 = vor.u32 1.1754944e-38, %v964
    %v966 = vsel %vm963, %v965, %v961
    %v967 = vmul.f32 %v931, %v966
    %968 = vrot.lane.b32.xlu0 %v389, 32
    %v969 = vpop.permute.xlu0 %968
    %v972 = vsel %vm449, %v952, 0
    %974 = vmatpush.msra.mxu0 0.0
    %975 = vmatpush.msra.mxu0 0.0
    %976 = vmatpush.msra.mxu0 0.0
    %977 = vmatpush.msra.mxu0 0.0
    %978 = vmatpush.msra.mxu0 0.0
    %979 = vmatpush.msra.mxu0 0.0
    %980 = vmatpush.msra.mxu0 0.0
    %981 = vmatpush.msra.mxu0 0.0
    %982 = vmatpush.msra.mxu0 0.0
    %983 = vmatpush.msra.mxu0 0.0
    %984 = vmatpush.msra.mxu0 0.0
    %985 = vmatpush.msra.mxu0 0.0
    %986 = vmatpush.msra.mxu0 0.0
    %987 = vmatpush.msra.mxu0 0.0
    %988 = vmatpush.msra.mxu0 0.0
    %989 = vmatpush.msra.mxu0 %v969
    %990 = vmatmul.f32.gmra.mxu0 %v972
    %v991 = vpop.f32.mrf.mxu0
    %v992 = vadd.f32 0.0, %v991
    %993 = vdwg.mxu0
    %994 = vrot.lane.b32.xlu0 %v392, 32
    %v995 = vpop.permute.xlu0 %994
    %v998 = vsel %vm449, %v967, 0
    %1000 = vmatpush.msra.mxu0 0.0
    %1001 = vmatpush.msra.mxu0 0.0
    %1002 = vmatpush.msra.mxu0 0.0
    %1003 = vmatpush.msra.mxu0 0.0
    %1004 = vmatpush.msra.mxu0 0.0
    %1005 = vmatpush.msra.mxu0 0.0
    %1006 = vmatpush.msra.mxu0 0.0
    %1007 = vmatpush.msra.mxu0 0.0
    %1008 = vmatpush.msra.mxu0 0.0
    %1009 = vmatpush.msra.mxu0 0.0
    %1010 = vmatpush.msra.mxu0 0.0
    %1011 = vmatpush.msra.mxu0 0.0
    %1012 = vmatpush.msra.mxu0 0.0
    %1013 = vmatpush.msra.mxu0 0.0
    %1014 = vmatpush.msra.mxu0 0.0
    %1015 = vmatpush.msra.mxu0 %v995
    %1016 = vmatmul.f32.gmra.mxu0 %v998
    %v1017 = vpop.f32.mrf.mxu0
    %v1018 = vadd.f32 0.0, %v1017
    %1019 = vdwg.mxu0
    %1022 = vrot.lane.b32.xlu0 %v675, 32
    %v1023 = vpop.permute.xlu0 %1022
    %1024 = vrot.lane.b32.xlu0 %v702, 32
    %v1025 = vpop.permute.xlu0 %1024
    %1030 = vrot.lane.b32.xlu0 %v834, 64
    %v1031 = vpop.permute.xlu0 %1030
    %1032 = vrot.lane.b32.xlu0 %v860, 64
    %v1033 = vpop.permute.xlu0 %1032
    %1038 = vrot.lane.b32.xlu0 %v992, 96
    %v1039 = vpop.permute.xlu0 %1038
    %1040 = vrot.lane.b32.xlu0 %v1018, 96
    %v1041 = vpop.permute.xlu0 %1040
    %v1044 = vsel %vm394, %v519, %v1023
    %v1045 = vsel %vm394, %v542, %v1025
    %vm1046 = vcmask 523264
    %v1047 = vsel %vm1046, %v1044, %v1031
    %v1048 = vsel %vm1046, %v1045, %v1033
    %vm1049 = vcmask 785408
    %v1050 = vsel %vm1049, %v1047, %v1039
    %v1051 = vsel %vm1049, %v1048, %v1041
    %v1052 = vld [vmem:[#allocation9] sm:$0xff]
    %v1053 = vld [vmem:[#allocation9 + $0x8] sm:$0xff]
    %v1054 = vld [vmem:[#allocation9 + $0x10] sm:$0xff]
    %v1055 = vld [vmem:[#allocation9 + $0x18] sm:$0xff]
    %v1056 = vld [vmem:[#allocation9 + $0x20] sm:$0xff]
    %v1057 = vld [vmem:[#allocation9 + $0x28] sm:$0xff]
    %v1058 = vld [vmem:[#allocation9 + $0x30] sm:$0xff]
    %v1059 = vld [vmem:[#allocation9 + $0x38] sm:$0xff]
    %v1060 = vld [vmem:[#allocation9 + $0x40] sm:$0xff]
    %v1061 = vld [vmem:[#allocation9 + $0x48] sm:$0xff]
    %v1062 = vld [vmem:[#allocation9 + $0x50] sm:$0xff]
    %v1063 = vld [vmem:[#allocation9 + $0x58] sm:$0xff]
    %v1064 = vld [vmem:[#allocation9 + $0x60] sm:$0xff]
    %v1065 = vld [vmem:[#allocation9 + $0x68] sm:$0xff]
    %v1066 = vld [vmem:[#allocation9 + $0x70] sm:$0xff]
    %v1067 = vld [vmem:[#allocation9 + $0x78] sm:$0xff]
    %v1068 = vld [vmem:[%s7] sm:$0x1]
    %v1070 = vperm.slane %v1068, 0
    %1072 = vmatpush.msra.mxu0 %v1067
    %1073 = vmatpush.msra.mxu0 %v1066
    %1074 = vmatpush.msra.mxu0 %v1065
    %1075 = vmatpush.msra.mxu0 %v1064
    %1076 = vmatpush.msra.mxu0 %v1063
    %1077 = vmatpush.msra.mxu0 %v1062
    %1078 = vmatpush.msra.mxu0 %v1061
    %1079 = vmatpush.msra.mxu0 %v1060
    %1080 = vmatpush.msra.mxu0 %v1059
    %1081 = vmatpush.msra.mxu0 %v1058
    %1082 = vmatpush.msra.mxu0 %v1057
    %1083 = vmatpush.msra.mxu0 %v1056
    %1084 = vmatpush.msra.mxu0 %v1055
    %1085 = vmatpush.msra.mxu0 %v1054
    %1086 = vmatpush.msra.mxu0 %v1053
    %1087 = vmatpush.msra.mxu0 %v1052
    %1088 = vmatmul.f32.gmra.mxu0 %v1050
    %v1089 = vpop.f32.mrf.mxu0
    %v1090 = vadd.f32 %v1070, %v1089
    %1091 = vmatmul.f32.gmra.mxu0 %v1051
    %v1092 = vpop.f32.mrf.mxu0
    %v1093 = vadd.f32 %v1070, %v1092
    %1094 = vdwg.mxu0
    %v1095 = vadd.f32 %v170, %v1090
    %v1096 = vadd.f32 %v171, %v1093
    %v1097 = vld [vmem:[%s8] sm:$0x1]
    %v1098 = vld [vmem:[%s9] sm:$0x1]
    %1099 = vadd.xlane.f32.xlu0 %v1095
    %v1100 = vpop.xlane.xlu0 %1099
    %1101 = vadd.xlane.f32.xlu0 %v1096
    %v1102 = vpop.xlane.xlu0 %1101
    %v1103 = vmul.f32 %v1100, %v186
    %v1104 = vmul.f32 %v1102, %v186
    %v1105 = vsub.f32 %v1095, %v1103
    %v1106 = vsub.f32 %v1096, %v1104
    %v1107 = vmul.f32 %v1105, %v1105
    %v1108 = vmul.f32 %v1106, %v1106
    %1109 = vadd.xlane.f32.xlu0 %v1107
    %v1110 = vpop.xlane.xlu0 %1109
    %1111 = vadd.xlane.f32.xlu0 %v1108
    %v1112 = vpop.xlane.xlu0 %1111
    %v1113 = vmul.f32 %v1110, %v186
    %v1114 = vmul.f32 %v1112, %v186
    %v1115 = vadd.f32 %v1113, 1e-05
    %v1116 = vadd.f32 %v1114, 1e-05
    %v1117 = vrsqrt.pop %v1115
    %v1118 = vmul.f32 %v1117, %v1115
    %v1119 = vmul.f32 %v1118, %v1117
    %v1120 = vmul.f32 0.5, %v1119
    %v1121 = vsub.f32 1.5, %v1120
    %v1122 = vmul.f32 %v1117, %v1121
    %vm1123 = vweird.f32 %v1115
    %vm1124 = vweird.f32 %v1117
    %vm1125 = vmor %vm1123, %vm1124
    %v1126 = vsel %vm1125, %v1117, %v1122
    %v1127 = vrsqrt.pop %v1116
    %v1128 = vmul.f32 %v1127, %v1116
    %v1129 = vmul.f32 %v1128, %v1127
    %v1130 = vmul.f32 0.5, %v1129
    %v1131 = vsub.f32 1.5, %v1130
    %v1132 = vmul.f32 %v1127, %v1131
    %vm1133 = vweird.f32 %v1116
    %vm1134 = vweird.f32 %v1127
    %vm1135 = vmor %vm1133, %vm1134
    %v1136 = vsel %vm1135, %v1127, %v1132
    %v1137 = vmul.f32 %v1105, %v1126
    %v1138 = vmul.f32 %v1106, %v1136
    %v1140 = vperm.slane %v1097, 0
    %v1142 = vmul.f32 %v1137, %v1140
    %v1143 = vmul.f32 %v1138, %v1140
    %v1145 = vperm.slane %v1098, 0
    %v1147 = vadd.f32 %v1142, %v1145
    %v1148 = vadd.f32 %v1143, %v1145
    %v1149 = vld [vmem:[#allocation10] sm:$0xff]
    %v1150 = vld [vmem:[#allocation10 + $0x8] sm:$0xff]
    %v1151 = vld [vmem:[#allocation10 + $0x10] sm:$0xff]
    %v1152 = vld [vmem:[#allocation10 + $0x18] sm:$0xff]
    %v1153 = vld [vmem:[#allocation10 + $0x20] sm:$0xff]
    %v1154 = vld [vmem:[#allocation10 + $0x28] sm:$0xff]
    %v1155 = vld [vmem:[#allocation10 + $0x30] sm:$0xff]
    %v1156 = vld [vmem:[#allocation10 + $0x38] sm:$0xff]
    %v1157 = vld [vmem:[#allocation10 + $0x40] sm:$0xff]
    %v1158 = vld [vmem:[#allocation10 + $0x48] sm:$0xff]
    %v1159 = vld [vmem:[#allocation10 + $0x50] sm:$0xff]
    %v1160 = vld [vmem:[#allocation10 + $0x58] sm:$0xff]
    %v1161 = vld [vmem:[#allocation10 + $0x60] sm:$0xff]
    %v1162 = vld [vmem:[#allocation10 + $0x68] sm:$0xff]
    %v1163 = vld [vmem:[#allocation10 + $0x70] sm:$0xff]
    %v1164 = vld [vmem:[#allocation10 + $0x78] sm:$0xff]
    %v1165 = vld [vmem:[#allocation10 + $0x80] sm:$0xff]
    %v1166 = vld [vmem:[#allocation10 + $0x88] sm:$0xff]
    %v1167 = vld [vmem:[#allocation10 + $0x90] sm:$0xff]
    %v1168 = vld [vmem:[#allocation10 + $0x98] sm:$0xff]
    %v1169 = vld [vmem:[#allocation10 + $0xa0] sm:$0xff]
    %v1170 = vld [vmem:[#allocation10 + $0xa8] sm:$0xff]
    %v1171 = vld [vmem:[#allocation10 + $0xb0] sm:$0xff]
    %v1172 = vld [vmem:[#allocation10 + $0xb8] sm:$0xff]
    %v1173 = vld [vmem:[#allocation10 + $0xc0] sm:$0xff]
    %v1174 = vld [vmem:[#allocation10 + $0xc8] sm:$0xff]
    %v1175 = vld [vmem:[#allocation10 + $0xd0] sm:$0xff]
    %v1176 = vld [vmem:[#allocation10 + $0xd8] sm:$0xff]
    %v1177 = vld [vmem:[#allocation10 + $0xe0] sm:$0xff]
    %v1178 = vld [vmem:[#allocation10 + $0xe8] sm:$0xff]
    %v1179 = vld [vmem:[#allocation10 + $0xf0] sm:$0xff]
    %v1180 = vld [vmem:[#allocation10 + $0xf8] sm:$0xff]
    %v1181 = vld [vmem:[%s11] sm:$0x3]
    %v1183 = vperm.slane %v1181, 0
    %v1184 = vperm.slane %v1181, 1
    %1187 = vmatpush.msra.mxu0 %v1179
    %1188 = vmatpush.msra.mxu0 %v1177
    %1189 = vmatpush.msra.mxu0 %v1175
    %1190 = vmatpush.msra.mxu0 %v1173
    %1191 = vmatpush.msra.mxu0 %v1171
    %1192 = vmatpush.msra.mxu0 %v1169
    %1193 = vmatpush.msra.mxu0 %v1167
    %1194 = vmatpush.msra.mxu0 %v1165
    %1195 = vmatpush.msra.mxu0 %v1163
    %1196 = vmatpush.msra.mxu0 %v1161
    %1197 = vmatpush.msra.mxu0 %v1159
    %1198 = vmatpush.msra.mxu0 %v1157
    %1199 = vmatpush.msra.mxu0 %v1155
    %1200 = vmatpush.msra.mxu0 %v1153
    %1201 = vmatpush.msra.mxu0 %v1151
    %1202 = vmatpush.msra.mxu0 %v1149
    %1203 = vmatmul.f32.gmra.mxu0 %v1147
    %v1204 = vpop.f32.mrf.mxu0
    %v1205 = vadd.f32 %v1183, %v1204
    %1206 = vmatmul.f32.gmra.mxu0 %v1148
    %v1207 = vpop.f32.mrf.mxu0
    %v1208 = vadd.f32 %v1183, %v1207
    %1209 = vdwg.mxu0
    %1210 = vmatpush.msra.mxu0 %v1180
    %1211 = vmatpush.msra.mxu0 %v1178
    %1212 = vmatpush.msra.mxu0 %v1176
    %1213 = vmatpush.msra.mxu0 %v1174
    %1214 = vmatpush.msra.mxu0 %v1172
    %1215 = vmatpush.msra.mxu0 %v1170
    %1216 = vmatpush.msra.mxu0 %v1168
    %1217 = vmatpush.msra.mxu0 %v1166
    %1218 = vmatpush.msra.mxu0 %v1164
    %1219 = vmatpush.msra.mxu0 %v1162
    %1220 = vmatpush.msra.mxu0 %v1160
    %1221 = vmatpush.msra.mxu0 %v1158
    %1222 = vmatpush.msra.mxu0 %v1156
    %1223 = vmatpush.msra.mxu0 %v1154
    %1224 = vmatpush.msra.mxu0 %v1152
    %1225 = vmatpush.msra.mxu0 %v1150
    %1226 = vmatmul.f32.gmra.mxu0 %v1147
    %v1227 = vpop.f32.mrf.mxu0
    %v1228 = vadd.f32 %v1184, %v1227
    %1229 = vmatmul.f32.gmra.mxu0 %v1148
    %v1230 = vpop.f32.mrf.mxu0
    %v1231 = vadd.f32 %v1184, %v1230
    %1232 = vdwg.mxu0
    %v1233 = vmul.f32 %v1205, 0.5
    %v1234 = vmul.f32 %v1228, 0.5
    %v1235 = vmul.f32 %v1208, 0.5
    %v1236 = vmul.f32 %v1231, 0.5
    %v1237 = vmul.f32 %v1205, 0.70710677
    %v1238 = vmul.f32 %v1228, 0.70710677
    %v1239 = vmul.f32 %v1208, 0.70710677
    %v1240 = vmul.f32 %v1231, 0.70710677
    %vm1241 = vcmp.ge.f32.partialorder %v1237, 0.0
    %vm1242 = vcmp.ge.f32.partialorder %v1238, 0.0
    %vm1243 = vcmp.ge.f32.partialorder %v1239, 0.0
    %vm1244 = vcmp.ge.f32.partialorder %v1240, 0.0
    %v1245 = vsel %vm1241, 1.0, -1.0
    %v1246 = vsel %vm1242, 1.0, -1.0
    %v1247 = vsel %vm1243, 1.0, -1.0
    %v1248 = vsel %vm1244, 1.0, -1.0
    %v1249 = vand.u32 2147483647, %v1237
    %v1250 = vand.u32 2147483647, %v1238
    %v1251 = vand.u32 2147483647, %v1239
    %v1252 = vand.u32 2147483647, %v1240
    %v1253 = vmul.f32 %v1249, 0.3275911
    %v1254 = vmul.f32 %v1250, 0.3275911
    %v1255 = vmul.f32 %v1251, 0.3275911
    %v1256 = vmul.f32 %v1252, 0.3275911
    %v1257 = vadd.f32 %v1253, 1.0
    %v1258 = vadd.f32 %v1254, 1.0
    %v1259 = vadd.f32 %v1255, 1.0
    %v1260 = vadd.f32 %v1256, 1.0
    %v1261 = vrcp.pop %v1257
    %v1262 = vmul.f32 %v1257, %v1261
    %v1263 = vsub.f32 1.0, %v1262
    %v1264 = vmul.f32 %v1261, %v1263
    %v1265 = vadd.f32 %v1261, %v1264
    %vm1266 = vweird.f32 %v1257
    %vm1267 = vweird.f32 %v1261
    %vm1268 = vmor %vm1266, %vm1267
    %v1269 = vsel %vm1268, %v1261, %v1265
    %v1270 = vand.u32 2147483647, %v1257
    %vm1271 = vcmp.eq.f32.partialorder %v1270, 8.507059e+37
    %v1272 = vand.u32 %v1257, 2147483648
    %v1273 = vor.u32 1.1754944e-38, %v1272
    %v1274 = vsel %vm1271, %v1273, %v1269
    %v1275 = vmul.f32 1.0, %v1274
    %v1276 = vrcp.pop %v1258
    %v1277 = vmul.f32 %v1258, %v1276
    %v1278 = vsub.f32 1.0, %v1277
    %v1279 = vmul.f32 %v1276, %v1278
    %v1280 = vadd.f32 %v1276, %v1279
    %vm1281 = vweird.f32 %v1258
    %vm1282 = vweird.f32 %v1276
    %vm1283 = vmor %vm1281, %vm1282
    %v1284 = vsel %vm1283, %v1276, %v1280
    %v1285 = vand.u32 2147483647, %v1258
    %vm1286 = vcmp.eq.f32.partialorder %v1285, 8.507059e+37
    %v1287 = vand.u32 %v1258, 2147483648
    %v1288 = vor.u32 1.1754944e-38, %v1287
    %v1289 = vsel %vm1286, %v1288, %v1284
    %v1290 = vmul.f32 1.0, %v1289
    %v1291 = vrcp.pop %v1259
    %v1292 = vmul.f32 %v1259, %v1291
    %v1293 = vsub.f32 1.0, %v1292
    %v1294 = vmul.f32 %v1291, %v1293
    %v1295 = vadd.f32 %v1291, %v1294
    %vm1296 = vweird.f32 %v1259
    %vm1297 = vweird.f32 %v1291
    %vm1298 = vmor %vm1296, %vm1297
    %v1299 = vsel %vm1298, %v1291, %v1295
    %v1300 = vand.u32 2147483647, %v1259
    %vm1301 = vcmp.eq.f32.partialorder %v1300, 8.507059e+37
    %v1302 = vand.u32 %v1259, 2147483648
    %v1303 = vor.u32 1.1754944e-38, %v1302
    %v1304 = vsel %vm1301, %v1303, %v1299
    %v1305 = vmul.f32 1.0, %v1304
    %v1306 = vrcp.pop %v1260
    %v1307 = vmul.f32 %v1260, %v1306
    %v1308 = vsub.f32 1.0, %v1307
    %v1309 = vmul.f32 %v1306, %v1308
    %v1310 = vadd.f32 %v1306, %v1309
    %vm1311 = vweird.f32 %v1260
    %vm1312 = vweird.f32 %v1306
    %vm1313 = vmor %vm1311, %vm1312
    %v1314 = vsel %vm1313, %v1306, %v1310
    %v1315 = vand.u32 2147483647, %v1260
    %vm1316 = vcmp.eq.f32.partialorder %v1315, 8.507059e+37
    %v1317 = vand.u32 %v1260, 2147483648
    %v1318 = vor.u32 1.1754944e-38, %v1317
    %v1319 = vsel %vm1316, %v1318, %v1314
    %v1320 = vmul.f32 1.0, %v1319
    %v1321 = vmul.f32 %v1275, 1.0614054
    %v1322 = vmul.f32 %v1290, 1.0614054
    %v1323 = vmul.f32 %v1305, 1.0614054
    %v1324 = vmul.f32 %v1320, 1.0614054
    %v1325 = vadd.f32 %v1321, -1.4531521
    %v1326 = vadd.f32 %v1322, -1.4531521
    %v1327 = vadd.f32 %v1323, -1.4531521
    %v1328 = vadd.f32 %v1324, -1.4531521
    %v1329 = vmul.f32 %v1325, %v1275
    %v1330 = vmul.f32 %v1326, %v1290
    %v1331 = vmul.f32 %v1327, %v1305
    %v1332 = vmul.f32 %v1328, %v1320
    %v1333 = vadd.f32 %v1329, 1.4214138
    %v1334 = vadd.f32 %v1330, 1.4214138
    %v1335 = vadd.f32 %v1331, 1.4214138
    %v1336 = vadd.f32 %v1332, 1.4214138
    %v1337 = vmul.f32 %v1333, %v1275
    %v1338 = vmul.f32 %v1334, %v1290
    %v1339 = vmul.f32 %v1335, %v1305
    %v1340 = vmul.f32 %v1336, %v1320
    %v1341 = vadd.f32 %v1337, -0.28449672
    %v1342 = vadd.f32 %v1338, -0.28449672
    %v1343 = vadd.f32 %v1339, -0.28449672
    %v1344 = vadd.f32 %v1340, -0.28449672
    %v1345 = vmul.f32 %v1341, %v1275
    %v1346 = vmul.f32 %v1342, %v1290
    %v1347 = vmul.f32 %v1343, %v1305
    %v1348 = vmul.f32 %v1344, %v1320
    %v1349 = vadd.f32 %v1345, 0.2548296
    %v1350 = vadd.f32 %v1346, 0.2548296
    %v1351 = vadd.f32 %v1347, 0.2548296
    %v1352 = vadd.f32 %v1348, 0.2548296
    %v1353 = vmul.f32 %v1349, %v1275
    %v1354 = vmul.f32 %v1350, %v1290
    %v1355 = vmul.f32 %v1351, %v1305
    %v1356 = vmul.f32 %v1352, %v1320
    %v1357 = vsub.f32 0.0, %v1249
    %v1358 = vsub.f32 0.0, %v1250
    %v1359 = vsub.f32 0.0, %v1251
    %v1360 = vsub.f32 0.0, %v1252
    %v1361 = vmul.f32 %v1357, %v1249
    %v1362 = vmul.f32 %v1358, %v1250
    %v1363 = vmul.f32 %v1359, %v1251
    %v1364 = vmul.f32 %v1360, %v1252
    %v1365 = vmul.f32 %v1361, 1.442695
    %v1366 = vpow.pop %v1365
    %v1367 = vmul.f32 %v1362, 1.442695
    %v1368 = vpow.pop %v1367
    %v1369 = vmul.f32 %v1363, 1.442695
    %v1370 = vpow.pop %v1369
    %v1371 = vmul.f32 %v1364, 1.442695
    %v1372 = vpow.pop %v1371
    %v1373 = vmul.f32 %v1353, %v1366
    %v1374 = vmul.f32 %v1354, %v1368
    %v1375 = vmul.f32 %v1355, %v1370
    %v1376 = vmul.f32 %v1356, %v1372
    %v1377 = vsub.f32 1.0, %v1373
    %v1378 = vsub.f32 1.0, %v1374
    %v1379 = vsub.f32 1.0, %v1375
    %v1380 = vsub.f32 1.0, %v1376
    %v1381 = vmul.f32 %v1245, %v1377
    %v1382 = vmul.f32 %v1246, %v1378
    %v1383 = vmul.f32 %v1247, %v1379
    %v1384 = vmul.f32 %v1248, %v1380
    %v1385 = vadd.f32 %v1381, 1.0
    %v1386 = vadd.f32 %v1382, 1.0
    %v1387 = vadd.f32 %v1383, 1.0
    %v1388 = vadd.f32 %v1384, 1.0
    %v1389 = vmul.f32 %v1233, %v1385
    %v1390 = vmul.f32 %v1234, %v1386
    %v1391 = vmul.f32 %v1235, %v1387
    %v1392 = vmul.f32 %v1236, %v1388
    %v1393 = vld [vmem:[#allocation12] sm:$0xff]
    %v1394 = vld [vmem:[#allocation12 + $0x8] sm:$0xff]
    %v1395 = vld [vmem:[#allocation12 + $0x10] sm:$0xff]
    %v1396 = vld [vmem:[#allocation12 + $0x18] sm:$0xff]
    %v1397 = vld [vmem:[#allocation12 + $0x20] sm:$0xff]
    %v1398 = vld [vmem:[#allocation12 + $0x28] sm:$0xff]
    %v1399 = vld [vmem:[#allocation12 + $0x30] sm:$0xff]
    %v1400 = vld [vmem:[#allocation12 + $0x38] sm:$0xff]
    %v1401 = vld [vmem:[#allocation12 + $0x40] sm:$0xff]
    %v1402 = vld [vmem:[#allocation12 + $0x48] sm:$0xff]
    %v1403 = vld [vmem:[#allocation12 + $0x50] sm:$0xff]
    %v1404 = vld [vmem:[#allocation12 + $0x58] sm:$0xff]
    %v1405 = vld [vmem:[#allocation12 + $0x60] sm:$0xff]
    %v1406 = vld [vmem:[#allocation12 + $0x68] sm:$0xff]
    %v1407 = vld [vmem:[#allocation12 + $0x70] sm:$0xff]
    %v1408 = vld [vmem:[#allocation12 + $0x78] sm:$0xff]
    %v1409 = vld [vmem:[#allocation12 + $0x80] sm:$0xff]
    %v1410 = vld [vmem:[#allocation12 + $0x88] sm:$0xff]
    %v1411 = vld [vmem:[#allocation12 + $0x90] sm:$0xff]
    %v1412 = vld [vmem:[#allocation12 + $0x98] sm:$0xff]
    %v1413 = vld [vmem:[#allocation12 + $0xa0] sm:$0xff]
    %v1414 = vld [vmem:[#allocation12 + $0xa8] sm:$0xff]
    %v1415 = vld [vmem:[#allocation12 + $0xb0] sm:$0xff]
    %v1416 = vld [vmem:[#allocation12 + $0xb8] sm:$0xff]
    %v1417 = vld [vmem:[#allocation12 + $0xc0] sm:$0xff]
    %v1418 = vld [vmem:[#allocation12 + $0xc8] sm:$0xff]
    %v1419 = vld [vmem:[#allocation12 + $0xd0] sm:$0xff]
    %v1420 = vld [vmem:[#allocation12 + $0xd8] sm:$0xff]
    %v1421 = vld [vmem:[#allocation12 + $0xe0] sm:$0xff]
    %v1422 = vld [vmem:[#allocation12 + $0xe8] sm:$0xff]
    %v1423 = vld [vmem:[#allocation12 + $0xf0] sm:$0xff]
    %v1424 = vld [vmem:[#allocation12 + $0xf8] sm:$0xff]
    %v1425 = vld [vmem:[#allocation13] sm:$0x1]
    %v1427 = vperm.slane %v1425, 0
    %1429 = vmatpush.msra.mxu0 %v1408
    %1430 = vmatpush.msra.mxu0 %v1407
    %1431 = vmatpush.msra.mxu0 %v1406
    %1432 = vmatpush.msra.mxu0 %v1405
    %1433 = vmatpush.msra.mxu0 %v1404
    %1434 = vmatpush.msra.mxu0 %v1403
    %1435 = vmatpush.msra.mxu0 %v1402
    %1436 = vmatpush.msra.mxu0 %v1401
    %1437 = vmatpush.msra.mxu0 %v1400
    %1438 = vmatpush.msra.mxu0 %v1399
    %1439 = vmatpush.msra.mxu0 %v1398
    %1440 = vmatpush.msra.mxu0 %v1397
    %1441 = vmatpush.msra.mxu0 %v1396
    %1442 = vmatpush.msra.mxu0 %v1395
    %1443 = vmatpush.msra.mxu0 %v1394
    %1444 = vmatpush.msra.mxu0 %v1393
    %1445 = vmatmul.f32.gmra.mxu0 %v1389
    %v1446 = vpop.f32.mrf.mxu0
    %v1447 = vadd.f32 %v1427, %v1446
    %1448 = vmatmul.f32.gmra.mxu0 %v1391
    %v1449 = vpop.f32.mrf.mxu0
    %v1450 = vadd.f32 %v1427, %v1449
    %1451 = vdwg.mxu0
    %1452 = vmatpush.msra.mxu0 %v1424
    %1453 = vmatpush.msra.mxu0 %v1423
    %1454 = vmatpush.msra.mxu0 %v1422
    %1455 = vmatpush.msra.mxu0 %v1421
    %1456 = vmatpush.msra.mxu0 %v1420
    %1457 = vmatpush.msra.mxu0 %v1419
    %1458 = vmatpush.msra.mxu0 %v1418
    %1459 = vmatpush.msra.mxu0 %v1417
    %1460 = vmatpush.msra.mxu0 %v1416
    %1461 = vmatpush.msra.mxu0 %v1415
    %1462 = vmatpush.msra.mxu0 %v1414
    %1463 = vmatpush.msra.mxu0 %v1413
    %1464 = vmatpush.msra.mxu0 %v1412
    %1465 = vmatpush.msra.mxu0 %v1411
    %1466 = vmatpush.msra.mxu0 %v1410
    %1467 = vmatpush.msra.mxu0 %v1409
    %1468 = vmatmul.f32.gmra.mxu0 %v1390
    %v1469 = vpop.f32.mrf.mxu0
    %v1470 = vadd.f32 %v1447, %v1469
    %1471 = vmatmul.f32.gmra.mxu0 %v1392
    %v1472 = vpop.f32.mrf.mxu0
    %v1473 = vadd.f32 %v1450, %v1472
    %1474 = vdwg.mxu0
    %v1475 = vadd.f32 %v1095, %v1470
    %v1476 = vadd.f32 %v1096, %v1473
    %1477 = vst [vmem:[%s14] sm:$0xff] %v1475
    %1478 = vst [vmem:[%s14 + $0x8] sm:$0xff] %v1476
    // Predicated region
    $region90: #{transformer_decoder.2} parent=1 // pred_check
      _
    $region91: #{transformer_decoder.2} parent=1 // pred_check_branch
      %1480 = sbr.rel (0) target = $region93
    $region92: #{transformer_decoder.2} parent=1 // pred_region
      _
    $region93: #{transformer_decoder.2} parent=1 // pred_fallthru
      _
    // Predicated region
    $region94: #{transformer_decoder.2} parent=1 // pred_check
      _
    $region95: #{transformer_decoder.2} parent=1 // pred_check_branch
      %1482 = sbr.rel (0) target = $region97
    $region96: #{transformer_decoder.2} parent=1 // pred_region
      _
    $region97: #{transformer_decoder.2} parent=1 // pred_fallthru
      _
    %1483 = vsyncpa [#allocation3], 1
    %1484 = vsyncpa [#allocation5], 1
    %1485 = vsyncpa [#allocation8], 1
    %1486 = vsyncpa [#allocation11], 1
    %1487 = vsyncpa [#allocation14], 1

// kernel: transformer_decoder.3
$region0: #{transformer_decoder.3}
  #allocation0 [shape = 'u32[]', space=smem, size = 0x4, offset = 0x4, fixed_abs, tag = 'smem constant byte address 0x4 - core index']
  #allocation1 [shape = 'u32[72,128]{1,0:T(1,128)}', space=vmem, size = 0x9000, scoped, tag = 'internal scratch']
  %s0 = inlined_call_operand.vmem [shape: f32[16,128], index: 0, kind: input, shape index: {}]
  %s1 = inlined_call_operand.vmem [shape: f32[16,128], index: 1, kind: input, shape index: {}]
  %s2 = inlined_call_operand.vmem [shape: f32[1,128], index: 2, kind: input, shape index: {}]
  %s3 = inlined_call_operand.vmem [shape: f32[1,128], index: 3, kind: input, shape index: {}]
  %s4 = inlined_call_operand.vmem [shape: f32[128,128], index: 4, kind: input, shape index: {}]
  %s5 = inlined_call_operand.vmem [shape: f32[128,256], index: 5, kind: input, shape index: {}]
  %s6 = inlined_call_operand.vmem [shape: f32[128,128], index: 6, kind: input, shape index: {}]
  %s7 = inlined_call_operand.vmem [shape: f32[1,128], index: 7, kind: input, shape index: {}]
  %s8 = inlined_call_operand.vmem [shape: f32[1,128], index: 8, kind: input, shape index: {}]
  %s9 = inlined_call_operand.vmem [shape: f32[1,128], index: 9, kind: input, shape index: {}]
  %s10 = inlined_call_operand.vmem [shape: f32[128,256], index: 10, kind: input, shape index: {}]
  %s11 = inlined_call_operand.vmem [shape: f32[1,256], index: 11, kind: input, shape index: {}]
  %s12 = inlined_call_operand.vmem [shape: f32[256,128], index: 12, kind: input, shape index: {}]
  %s13 = inlined_call_operand.vmem [shape: f32[1,128], index: 13, kind: input, shape index: {}]
  %s14 = inlined_call_operand.hbm [shape: f32[16,128], index: 14, kind: output, shape index: {}]
  %s15 = sld [smem:[#allocation0]]
  $region66: #{transformer_decoder.3} parent=0
    _
  %s17 = ssub.s32 1, %s15
  %s18 = scalar_select 0, %s17, %s15
  $region1: #{transformer_decoder.3} parent=0
    #allocation2 [shape = 'u8[8192]{0}', space=vmem, size = 0x2000, scoped, tag = 'output window, operand 0, single buffered']
    #allocation3 [shape = 's32[1]{0}', space=sflag, size = 0x4, scoped, tag = 'scoped memory for transformer_decoder.3']
    %19 = vsyncpa [#allocation3], 0
    // Predicated region
    $region2: #{transformer_decoder.3} parent=1 // pred_check
      _
    $region3: #{transformer_decoder.3} parent=1 // pred_check_branch
      %21 = sbr.rel (0) target = $region5
    $region4: #{transformer_decoder.3} parent=1 // pred_region
      _
    $region5: #{transformer_decoder.3} parent=1 // pred_fallthru
      _
    // Predicated region
    $region6: #{transformer_decoder.3} parent=1 // pred_check
      _
    $region7: #{transformer_decoder.3} parent=1 // pred_check_branch
      %23 = sbr.rel (0) target = $region9
    $region8: #{transformer_decoder.3} parent=1 // pred_region
      _
    $region9: #{transformer_decoder.3} parent=1 // pred_fallthru
      _
    // Predicated region
    $region10: #{transformer_decoder.3} parent=1 // pred_check
      _
    $region11: #{transformer_decoder.3} parent=1 // pred_check_branch
      %25 = sbr.rel (0) target = $region13
    $region12: #{transformer_decoder.3} parent=1 // pred_region
      _
    $region13: #{transformer_decoder.3} parent=1 // pred_fallthru
      _
    // Predicated region
    $region14: #{transformer_decoder.3} parent=1 // pred_check
      _
    $region15: #{transformer_decoder.3} parent=1 // pred_check_branch
      %27 = sbr.rel (0) target = $region17
    $region16: #{transformer_decoder.3} parent=1 // pred_region
      _
    $region17: #{transformer_decoder.3} parent=1 // pred_fallthru
      _
    // Predicated region
    $region18: #{transformer_decoder.3} parent=1 // pred_check
      _
    $region19: #{transformer_decoder.3} parent=1 // pred_check_branch
      %29 = sbr.rel (0) target = $region21
    $region20: #{transformer_decoder.3} parent=1 // pred_region
      _
    $region21: #{transformer_decoder.3} parent=1 // pred_fallthru
      _
    // Predicated region
    $region22: #{transformer_decoder.3} parent=1 // pred_check
      _
    $region23: #{transformer_decoder.3} parent=1 // pred_check_branch
      %31 = sbr.rel (0) target = $region25
    $region24: #{transformer_decoder.3} parent=1 // pred_region
      _
    $region25: #{transformer_decoder.3} parent=1 // pred_fallthru
      _
    // Predicated region
    $region26: #{transformer_decoder.3} parent=1 // pred_check
      _
    $region27: #{transformer_decoder.3} parent=1 // pred_check_branch
      %33 = sbr.rel (0) target = $region29
    $region28: #{transformer_decoder.3} parent=1 // pred_region
      _
    $region29: #{transformer_decoder.3} parent=1 // pred_fallthru
      _
    // Predicated region
    $region30: #{transformer_decoder.3} parent=1 // pred_check
      _
    $region31: #{transformer_decoder.3} parent=1 // pred_check_branch
      %35 = sbr.rel (0) target = $region33
    $region32: #{transformer_decoder.3} parent=1 // pred_region
      _
    $region33: #{transformer_decoder.3} parent=1 // pred_fallthru
      _
    // Predicated region
    $region34: #{transformer_decoder.3} parent=1 // pred_check
      _
    $region35: #{transformer_decoder.3} parent=1 // pred_check_branch
      %37 = sbr.rel (0) target = $region37
    $region36: #{transformer_decoder.3} parent=1 // pred_region
      _
    $region37: #{transformer_decoder.3} parent=1 // pred_fallthru
      _
    // Predicated region
    $region38: #{transformer_decoder.3} parent=1 // pred_check
      _
    $region39: #{transformer_decoder.3} parent=1 // pred_check_branch
      %39 = sbr.rel (0) target = $region41
    $region40: #{transformer_decoder.3} parent=1 // pred_region
      _
    $region41: #{transformer_decoder.3} parent=1 // pred_fallthru
      _
    // Predicated region
    $region42: #{transformer_decoder.3} parent=1 // pred_check
      _
    $region43: #{transformer_decoder.3} parent=1 // pred_check_branch
      %41 = sbr.rel (0) target = $region45
    $region44: #{transformer_decoder.3} parent=1 // pred_region
      _
    $region45: #{transformer_decoder.3} parent=1 // pred_fallthru
      _
    // Predicated region
    $region46: #{transformer_decoder.3} parent=1 // pred_check
      _
    $region47: #{transformer_decoder.3} parent=1 // pred_check_branch
      %43 = sbr.rel (0) target = $region49
    $region48: #{transformer_decoder.3} parent=1 // pred_region
      _
    $region49: #{transformer_decoder.3} parent=1 // pred_fallthru
      _
    // Predicated region
    $region50: #{transformer_decoder.3} parent=1 // pred_check
      _
    $region51: #{transformer_decoder.3} parent=1 // pred_check_branch
      %45 = sbr.rel (0) target = $region53
    $region52: #{transformer_decoder.3} parent=1 // pred_region
      _
    $region53: #{transformer_decoder.3} parent=1 // pred_fallthru
      _
    // Predicated region
    $region54: #{transformer_decoder.3} parent=1 // pred_check
      _
    $region55: #{transformer_decoder.3} parent=1 // pred_check_branch
      %47 = sbr.rel (0) target = $region57
    $region56: #{transformer_decoder.3} parent=1 // pred_region
      _
    $region57: #{transformer_decoder.3} parent=1 // pred_fallthru
      _
    %v48 = vld [vmem:[%s0] sm:$0xff]
    %v49 = vld [vmem:[%s0 + $0x8] sm:$0xff]
    %v50 = vld [vmem:[%s1] sm:$0xff]
    %v51 = vld [vmem:[%s1 + $0x8] sm:$0xff]
    %v52 = vld [vmem:[%s2] sm:$0x1]
    %v53 = vld [vmem:[%s3] sm:$0x1]
    %54 = vadd.xlane.f32.xlu0 %v48
    %v55 = vpop.xlane.xlu0 %54
    %56 = vadd.xlane.f32.xlu0 %v49
    %v57 = vpop.xlane.xlu0 %56
    %v58 = vrcp.pop 128.0
    %v59 = vmul.f32 128.0, %v58
    %v60 = vsub.f32 1.0, %v59
    %v61 = vmul.f32 %v58, %v60
    %v62 = vadd.f32 %v58, %v61
    %vm63 = vweird.f32 %v58
    %v64 = vsel %vm63, %v58, %v62
    %v65 = vmul.f32 %v55, %v64
    %v66 = vmul.f32 %v57, %v64
    %v67 = vsub.f32 %v48, %v65
    %v68 = vsub.f32 %v49, %v66
    %v69 = vmul.f32 %v67, %v67
    %v70 = vmul.f32 %v68, %v68
    %71 = vadd.xlane.f32.xlu0 %v69
    %v72 = vpop.xlane.xlu0 %71
    %73 = vadd.xlane.f32.xlu0 %v70
    %v74 = vpop.xlane.xlu0 %73
    %v75 = vmul.f32 %v72, %v64
    %v76 = vmul.f32 %v74, %v64
    %v77 = vadd.f32 %v75, 1e-05
    %v78 = vadd.f32 %v76, 1e-05
    %v79 = vrsqrt.pop %v77
    %v80 = vmul.f32 %v79, %v77
    %v81 = vmul.f32 %v80, %v79
    %v82 = vmul.f32 0.5, %v81
    %v83 = vsub.f32 1.5, %v82
    %v84 = vmul.f32 %v79, %v83
    %vm85 = vweird.f32 %v77
    %vm86 = vweird.f32 %v79
    %vm87 = vmor %vm85, %vm86
    %v88 = vsel %vm87, %v79, %v84
    %v89 = vrsqrt.pop %v78
    %v90 = vmul.f32 %v89, %v78
    %v91 = vmul.f32 %v90, %v89
    %v92 = vmul.f32 0.5, %v91
    %v93 = vsub.f32 1.5, %v92
    %v94 = vmul.f32 %v89, %v93
    %vm95 = vweird.f32 %v78
    %vm96 = vweird.f32 %v89
    %vm97 = vmor %vm95, %vm96
    %v98 = vsel %vm97, %v89, %v94
    %v99 = vmul.f32 %v67, %v88
    %v100 = vmul.f32 %v68, %v98
    %v102 = vperm.slane %v52, 0
    %v104 = vmul.f32 %v99, %v102
    %v105 = vmul.f32 %v100, %v102
    %v107 = vperm.slane %v53, 0
    %v109 = vadd.f32 %v104, %v107
    %v110 = vadd.f32 %v105, %v107
    %111 = vadd.xlane.f32.xlu0 %v50
    %v112 = vpop.xlane.xlu0 %111
    %113 = vadd.xlane.f32.xlu0 %v51
    %v114 = vpop.xlane.xlu0 %113
    %v115 = vmul.f32 %v112, %v64
    %v116 = vmul.f32 %v114, %v64
    %v117 = vsub.f32 %v50, %v115
    %v118 = vsub.f32 %v51, %v116
    %v119 = vmul.f32 %v117, %v117
    %v120 = vmul.f32 %v118, %v118
    %121 = vadd.xlane.f32.xlu0 %v119
    %v122 = vpop.xlane.xlu0 %121
    %123 = vadd.xlane.f32.xlu0 %v120
    %v124 = vpop.xlane.xlu0 %123
    %v125 = vmul.f32 %v122, %v64
    %v126 = vmul.f32 %v124, %v64
    %v127 = vadd.f32 %v125, 1e-05
    %v128 = vadd.f32 %v126, 1e-05
    %v129 = vrsqrt.pop %v127
    %v130 = vmul.f32 %v129, %v127
    %v131 = vmul.f32 %v130, %v129
    %v132 = vmul.f32 0.5, %v131
    %v133 = vsub.f32 1.5, %v132
    %v134 = vmul.f32 %v129, %v133
    %vm135 = vweird.f32 %v127
    %vm136 = vweird.f32 %v129
    %vm137 = vmor %vm135, %vm136
    %v138 = vsel %vm137, %v129, %v134
    %v139 = vrsqrt.pop %v128
    %v140 = vmul.f32 %v139, %v128
    %v141 = vmul.f32 %v140, %v139
    %v142 = vmul.f32 0.5, %v141
    %v143 = vsub.f32 1.5, %v142
    %v144 = vmul.f32 %v139, %v143
    %vm145 = vweird.f32 %v128
    %vm146 = vweird.f32 %v139
    %vm147 = vmor %vm145, %vm146
    %v148 = vsel %vm147, %v139, %v144
    %v149 = vmul.f32 %v117, %v138
    %v150 = vmul.f32 %v118, %v148
    %v151 = vmul.f32 %v149, %v102
    %v152 = vmul.f32 %v150, %v102
    %v153 = vadd.f32 %v151, %v107
    %v154 = vadd.f32 %v152, %v107
    %v155 = vld [vmem:[%s4] sm:$0xff]
    %v156 = vld [vmem:[%s4 + $0x8] sm:$0xff]
    %v157 = vld [vmem:[%s4 + $0x10] sm:$0xff]
    %v158 = vld [vmem:[%s4 + $0x18] sm:$0xff]
    %v159 = vld [vmem:[%s4 + $0x20] sm:$0xff]
    %v160 = vld [vmem:[%s4 + $0x28] sm:$0xff]
    %v161 = vld [vmem:[%s4 + $0x30] sm:$0xff]
    %v162 = vld [vmem:[%s4 + $0x38] sm:$0xff]
    %v163 = vld [vmem:[%s4 + $0x40] sm:$0xff]
    %v164 = vld [vmem:[%s4 + $0x48] sm:$0xff]
    %v165 = vld [vmem:[%s4 + $0x50] sm:$0xff]
    %v166 = vld [vmem:[%s4 + $0x58] sm:$0xff]
    %v167 = vld [vmem:[%s4 + $0x60] sm:$0xff]
    %v168 = vld [vmem:[%s4 + $0x68] sm:$0xff]
    %v169 = vld [vmem:[%s4 + $0x70] sm:$0xff]
    %v170 = vld [vmem:[%s4 + $0x78] sm:$0xff]
    %171 = vmatpush.msra.mxu0 %v170
    %172 = vmatpush.msra.mxu0 %v169
    %173 = vmatpush.msra.mxu0 %v168
    %174 = vmatpush.msra.mxu0 %v167
    %175 = vmatpush.msra.mxu0 %v166
    %176 = vmatpush.msra.mxu0 %v165
    %177 = vmatpush.msra.mxu0 %v164
    %178 = vmatpush.msra.mxu0 %v163
    %179 = vmatpush.msra.mxu0 %v162
    %180 = vmatpush.msra.mxu0 %v161
    %181 = vmatpush.msra.mxu0 %v160
    %182 = vmatpush.msra.mxu0 %v159
    %183 = vmatpush.msra.mxu0 %v158
    %184 = vmatpush.msra.mxu0 %v157
    %185 = vmatpush.msra.mxu0 %v156
    %186 = vmatpush.msra.mxu0 %v155
    %187 = vmatmul.f32.gmra.mxu0 %v109
    %v188 = vpop.f32.mrf.mxu0
    %v189 = vadd.f32 0.0, %v188
    %190 = vmatmul.f32.gmra.mxu0 %v110
    %v191 = vpop.f32.mrf.mxu0
    %v192 = vadd.f32 0.0, %v191
    %193 = vdwg.mxu0
    %v194 = vld [vmem:[%s5] sm:$0xff]
    %v195 = vld [vmem:[%s5 + $0x8] sm:$0xff]
    %v196 = vld [vmem:[%s5 + $0x10] sm:$0xff]
    %v197 = vld [vmem:[%s5 + $0x18] sm:$0xff]
    %v198 = vld [vmem:[%s5 + $0x20] sm:$0xff]
    %v199 = vld [vmem:[%s5 + $0x28] sm:$0xff]
    %v200 = vld [vmem:[%s5 + $0x30] sm:$0xff]
    %v201 = vld [vmem:[%s5 + $0x38] sm:$0xff]
    %v202 = vld [vmem:[%s5 + $0x40] sm:$0xff]
    %v203 = vld [vmem:[%s5 + $0x48] sm:$0xff]
    %v204 = vld [vmem:[%s5 + $0x50] sm:$0xff]
    %v205 = vld [vmem:[%s5 + $0x58] sm:$0xff]
    %v206 = vld [vmem:[%s5 + $0x60] sm:$0xff]
    %v207 = vld [vmem:[%s5 + $0x68] sm:$0xff]
    %v208 = vld [vmem:[%s5 + $0x70] sm:$0xff]
    %v209 = vld [vmem:[%s5 + $0x78] sm:$0xff]
    %v210 = vld [vmem:[%s5 + $0x80] sm:$0xff]
    %v211 = vld [vmem:[%s5 + $0x88] sm:$0xff]
    %v212 = vld [vmem:[%s5 + $0x90] sm:$0xff]
    %v213 = vld [vmem:[%s5 + $0x98] sm:$0xff]
    %v214 = vld [vmem:[%s5 + $0xa0] sm:$0xff]
    %v215 = vld [vmem:[%s5 + $0xa8] sm:$0xff]
    %v216 = vld [vmem:[%s5 + $0xb0] sm:$0xff]
    %v217 = vld [vmem:[%s5 + $0xb8] sm:$0xff]
    %v218 = vld [vmem:[%s5 + $0xc0] sm:$0xff]
    %v219 = vld [vmem:[%s5 + $0xc8] sm:$0xff]
    %v220 = vld [vmem:[%s5 + $0xd0] sm:$0xff]
    %v221 = vld [vmem:[%s5 + $0xd8] sm:$0xff]
    %v222 = vld [vmem:[%s5 + $0xe0] sm:$0xff]
    %v223 = vld [vmem:[%s5 + $0xe8] sm:$0xff]
    %v224 = vld [vmem:[%s5 + $0xf0] sm:$0xff]
    %v225 = vld [vmem:[%s5 + $0xf8] sm:$0xff]
    %226 = vmatpush.msra.mxu0 %v224
    %227 = vmatpush.msra.mxu0 %v222
    %228 = vmatpush.msra.mxu0 %v220
    %229 = vmatpush.msra.mxu0 %v218
    %230 = vmatpush.msra.mxu0 %v216
    %231 = vmatpush.msra.mxu0 %v214
    %232 = vmatpush.msra.mxu0 %v212
    %233 = vmatpush.msra.mxu0 %v210
    %234 = vmatpush.msra.mxu0 %v208
    %235 = vmatpush.msra.mxu0 %v206
    %236 = vmatpush.msra.mxu0 %v204
    %237 = vmatpush.msra.mxu0 %v202
    %238 = vmatpush.msra.mxu0 %v200
    %239 = vmatpush.msra.mxu0 %v198
    %240 = vmatpush.msra.mxu0 %v196
    %241 = vmatpush.msra.mxu0 %v194
    %242 = vmatmul.f32.gmra.mxu0 %v153
    %v243 = vpop.f32.mrf.mxu0
    %v244 = vadd.f32 0.0, %v243
    %245 = vmatmul.f32.gmra.mxu0 %v154
    %v246 = vpop.f32.mrf.mxu0
    %v247 = vadd.f32 0.0, %v246
    %248 = vdwg.mxu0
    %249 = vmatpush.msra.mxu0 %v225
    %250 = vmatpush.msra.mxu0 %v223
    %251 = vmatpush.msra.mxu0 %v221
    %252 = vmatpush.msra.mxu0 %v219
    %253 = vmatpush.msra.mxu0 %v217
    %254 = vmatpush.msra.mxu0 %v215
    %255 = vmatpush.msra.mxu0 %v213
    %256 = vmatpush.msra.mxu0 %v211
    %257 = vmatpush.msra.mxu0 %v209
    %258 = vmatpush.msra.mxu0 %v207
    %259 = vmatpush.msra.mxu0 %v205
    %260 = vmatpush.msra.mxu0 %v203
    %261 = vmatpush.msra.mxu0 %v201
    %262 = vmatpush.msra.mxu0 %v199
    %263 = vmatpush.msra.mxu0 %v197
    %264 = vmatpush.msra.mxu0 %v195
    %265 = vmatmul.f32.gmra.mxu0 %v153
    %v266 = vpop.f32.mrf.mxu0
    %v267 = vadd.f32 0.0, %v266
    %268 = vmatmul.f32.gmra.mxu0 %v154
    %v269 = vpop.f32.mrf.mxu0
    %v270 = vadd.f32 0.0, %v269
    %271 = vdwg.mxu0
    %vm272 = vcmask 261120
    %v274 = vsel %vm272, %v189, 0
    %v277 = vsel %vm272, %v244, 0
    %279 = vmatpush.xpose.msra.mxu0 0.0
    %280 = vmatpush.xpose.msra.mxu0 0.0
    %281 = vmatpush.xpose.msra.mxu0 0.0
    %282 = vmatpush.xpose.msra.mxu0 0.0
    %283 = vmatpush.xpose.msra.mxu0 0.0
    %284 = vmatpush.xpose.msra.mxu0 0.0
    %285 = vmatpush.xpose.msra.mxu0 0.0
    %286 = vmatpush.xpose.msra.mxu0 0.0
    %287 = vmatpush.xpose.msra.mxu0 0.0
    %288 = vmatpush.xpose.msra.mxu0 0.0
    %289 = vmatpush.xpose.msra.mxu0 0.0
    %290 = vmatpush.xpose.msra.mxu0 0.0
    %291 = vmatpush.xpose.msra.mxu0 0.0
    %292 = vmatpush.xpose.msra.mxu0 0.0
    %293 = vmatpush.xpose.msra.mxu0 0.0
    %294 = vmatpush.xpose.msra.mxu0 %v277
    %295 = vmatmul.f32.gmra.mxu0 %v274
    %v296 = vpop.f32.mrf.mxu0
    %v297 = vadd.f32 0.0, %v296
    %298 = vdwg.mxu0
    %v300 = vsel %vm272, %v192, 0
    %v303 = vsel %vm272, %v247, 0
    %305 = vmatpush.xpose.msra.mxu0 0.0
    %306 = vmatpush.xpose.msra.mxu0 0.0
    %307 = vmatpush.xpose.msra.mxu0 0.0
    %308 = vmatpush.xpose.msra.mxu0 0.0
    %309 = vmatpush.xpose.msra.mxu0 0.0
    %310 = vmatpush.xpose.msra.mxu0 0.0
    %311 = vmatpush.xpose.msra.mxu0 0.0
    %312 = vmatpush.xpose.msra.mxu0 0.0
    %313 = vmatpush.xpose.msra.mxu0 0.0
    %314 = vmatpush.xpose.msra.mxu0 0.0
    %315 = vmatpush.xpose.msra.mxu0 0.0
    %316 = vmatpush.xpose.msra.mxu0 0.0
    %317 = vmatpush.xpose.msra.mxu0 0.0
    %318 = vmatpush.xpose.msra.mxu0 0.0
    %319 = vmatpush.xpose.msra.mxu0 0.0
    %320 = vmatpush.xpose.msra.mxu0 %v303
    %321 = vmatmul.f32.gmra.mxu0 %v300
    %v322 = vpop.f32.mrf.mxu0
    %v323 = vadd.f32 0.0, %v322
    %324 = vdwg.mxu0
    %v325 = vmul.f32 %v297, 0.088388346
    %v326 = vmul.f32 %v323, 0.088388346
    %vm327 = vcmask 64512
    %v328 = vsel %vm327, %v325, -inf
    %329 = vmax.xlane.f32.xlu0 %v328
    %v330 = vpop.xlane.xlu0 %329
    %v331 = vsel %vm327, %v326, -inf
    %332 = vmax.xlane.f32.xlu0 %v331
    %v333 = vpop.xlane.xlu0 %332
    %v334 = vsub.f32 %v325, %v330
    %v335 = vsub.f32 %v326, %v333
    %v336 = vmul.f32 %v334, 1.442695
    %v337 = vpow.pop %v336
    %v338 = vmul.f32 %v335, 1.442695
    %v339 = vpow.pop %v338
    %v340 = vsel %vm327, %v337, 0.0
    %341 = vadd.xlane.f32.xlu0 %v340
    %v342 = vpop.xlane.xlu0 %341
    %v343 = vsel %vm327, %v339, 0.0
    %344 = vadd.xlane.f32.xlu0 %v343
    %v345 = vpop.xlane.xlu0 %344
    %v346 = vrcp.pop %v342
    %v347 = vmul.f32 %v342, %v346
    %v348 = vsub.f32 1.0, %v347
    %v349 = vmul.f32 %v346, %v348
    %v350 = vadd.f32 %v346, %v349
    %vm351 = vweird.f32 %v342
    %vm352 = vweird.f32 %v346
    %vm353 = vmor %vm351, %vm352
    %v354 = vsel %vm353, %v346, %v350
    %v355 = vand.u32 2147483647, %v342
    %vm356 = vcmp.eq.f32.partialorder %v355, 8.507059e+37
    %v357 = vand.u32 %v342, 2147483648
    %v358 = vor.u32 1.1754944e-38, %v357
    %v359 = vsel %vm356, %v358, %v354
    %v360 = vmul.f32 %v337, %v359
    %v361 = vrcp.pop %v345
    %v362 = vmul.f32 %v345, %v361
    %v363 = vsub.f32 1.0, %v362
    %v364 = vmul.f32 %v361, %v363
    %v365 = vadd.f32 %v361, %v364
    %vm366 = vweird.f32 %v345
    %vm367 = vweird.f32 %v361
    %vm368 = vmor %vm366, %vm367
    %v369 = vsel %vm368, %v361, %v365
    %v370 = vand.u32 2147483647, %v345
    %vm371 = vcmp.eq.f32.partialorder %v370, 8.507059e+37
    %v372 = vand.u32 %v345, 2147483648
    %v373 = vor.u32 1.1754944e-38, %v372
    %v374 = vsel %vm371, %v373, %v369
    %v375 = vmul.f32 %v339, %v374
    %v377 = vsel %vm327, %v360, 0
    %379 = vmatpush.msra.mxu0 0.0
    %380 = vmatpush.msra.mxu0 0.0
    %381 = vmatpush.msra.mxu0 0.0
    %382 = vmatpush.msra.mxu0 0.0
    %383 = vmatpush.msra.mxu0 0.0
    %384 = vmatpush.msra.mxu0 0.0
    %385 = vmatpush.msra.mxu0 0.0
    %386 = vmatpush.msra.mxu0 0.0
    %387 = vmatpush.msra.mxu0 0.0
    %388 = vmatpush.msra.mxu0 0.0
    %389 = vmatpush.msra.mxu0 0.0
    %390 = vmatpush.msra.mxu0 0.0
    %391 = vmatpush.msra.mxu0 0.0
    %392 = vmatpush.msra.mxu0 0.0
    %393 = vmatpush.msra.mxu0 0.0
    %394 = vmatpush.msra.mxu0 %v267
    %395 = vmatmul.f32.gmra.mxu0 %v377
    %v396 = vpop.f32.mrf.mxu0
    %v397 = vadd.f32 0.0, %v396
    %398 = vdwg.mxu0
    %v400 = vsel %vm327, %v375, 0
    %402 = vmatpush.msra.mxu0 0.0
    %403 = vmatpush.msra.mxu0 0.0
    %404 = vmatpush.msra.mxu0 0.0
    %405 = vmatpush.msra.mxu0 0.0
    %406 = vmatpush.msra.mxu0 0.0
    %407 = vmatpush.msra.mxu0 0.0
    %408 = vmatpush.msra.mxu0 0.0
    %409 = vmatpush.msra.mxu0 0.0
    %410 = vmatpush.msra.mxu0 0.0
    %411 = vmatpush.msra.mxu0 0.0
    %412 = vmatpush.msra.mxu0 0.0
    %413 = vmatpush.msra.mxu0 0.0
    %414 = vmatpush.msra.mxu0 0.0
    %415 = vmatpush.msra.mxu0 0.0
    %416 = vmatpush.msra.mxu0 0.0
    %417 = vmatpush.msra.mxu0 %v270
    %418 = vmatmul.f32.gmra.mxu0 %v400
    %v419 = vpop.f32.mrf.mxu0
    %v420 = vadd.f32 0.0, %v419
    %421 = vdwg.mxu0
    %422 = vrot.lane.b32.xlu0 %v189, 96
    %v423 = vpop.permute.xlu0 %422
    %424 = vrot.lane.b32.xlu0 %v244, 96
    %v425 = vpop.permute.xlu0 %424
    %v426 = vsel %vm272, %v423, 0
    %v428 = vsel %vm272, %v425, 0
    %430 = vmatpush.xpose.msra.mxu0 0.0
    %431 = vmatpush.xpose.msra.mxu0 0.0
    %432 = vmatpush.xpose.msra.mxu0 0.0
    %433 = vmatpush.xpose.msra.mxu0 0.0
    %434 = vmatpush.xpose.msra.mxu0 0.0
    %435 = vmatpush.xpose.msra.mxu0 0.0
    %436 = vmatpush.xpose.msra.mxu0 0.0
    %437 = vmatpush.xpose.msra.mxu0 0.0
    %438 = vmatpush.xpose.msra.mxu0 0.0
    %439 = vmatpush.xpose.msra.mxu0 0.0
    %440 = vmatpush.xpose.msra.mxu0 0.0
    %441 = vmatpush.xpose.msra.mxu0 0.0
    %442 = vmatpush.xpose.msra.mxu0 0.0
    %443 = vmatpush.xpose.msra.mxu0 0.0
    %444 = vmatpush.xpose.msra.mxu0 0.0
    %445 = vmatpush.xpose.msra.mxu0 %v428
    %446 = vmatmul.f32.gmra.mxu0 %v426
    %v447 = vpop.f32.mrf.mxu0
    %v448 = vadd.f32 0.0, %v447
    %449 = vdwg.mxu0
    %450 = vrot.lane.b32.xlu0 %v192, 96
    %v451 = vpop.permute.xlu0 %450
    %452 = vrot.lane.b32.xlu0 %v247, 96
    %v453 = vpop.permute.xlu0 %452
    %v454 = vsel %vm272, %v451, 0
    %v456 = vsel %vm272, %v453, 0
    %458 = vmatpush.xpose.msra.mxu0 0.0
    %459 = vmatpush.xpose.msra.mxu0 0.0
    %460 = vmatpush.xpose.msra.mxu0 0.0
    %461 = vmatpush.xpose.msra.mxu0 0.0
    %462 = vmatpush.xpose.msra.mxu0 0.0
    %463 = vmatpush.xpose.msra.mxu0 0.0
    %464 = vmatpush.xpose.msra.mxu0 0.0
    %465 = vmatpush.xpose.msra.mxu0 0.0
    %466 = vmatpush.xpose.msra.mxu0 0.0
    %467 = vmatpush.xpose.msra.mxu0 0.0
    %468 = vmatpush.xpose.msra.mxu0 0.0
    %469 = vmatpush.xpose.msra.mxu0 0.0
    %470 = vmatpush.xpose.msra.mxu0 0.0
    %471 = vmatpush.xpose.msra.mxu0 0.0
    %472 = vmatpush.xpose.msra.mxu0 0.0
    %473 = vmatpush.xpose.msra.mxu0 %v456
    %474 = vmatmul.f32.gmra.mxu0 %v454
    %v475 = vpop.f32.mrf.mxu0
    %v476 = vadd.f32 0.0, %v475
    %477 = vdwg.mxu0
    %v478 = vmul.f32 %v448, 0.088388346
    %v479 = vmul.f32 %v476, 0.088388346
    %v480 = vsel %vm327, %v478, -inf
    %481 = vmax.xlane.f32.xlu0 %v480
    %v482 = vpop.xlane.xlu0 %481
    %v483 = vsel %vm327, %v479, -inf
    %484 = vmax.xlane.f32.xlu0 %v483
    %v485 = vpop.xlane.xlu0 %484
    %v486 = vsub.f32 %v478, %v482
    %v487 = vsub.f32 %v479, %v485
    %v488 = vmul.f32 %v486, 1.442695
    %v489 = vpow.pop %v488
    %v490 = vmul.f32 %v487, 1.442695
    %v491 = vpow.pop %v490
    %v492 = vsel %vm327, %v489, 0.0
    %493 = vadd.xlane.f32.xlu0 %v492
    %v494 = vpop.xlane.xlu0 %493
    %v495 = vsel %vm327, %v491, 0.0
    %496 = vadd.xlane.f32.xlu0 %v495
    %v497 = vpop.xlane.xlu0 %496
    %v498 = vrcp.pop %v494
    %v499 = vmul.f32 %v494, %v498
    %v500 = vsub.f32 1.0, %v499
    %v501 = vmul.f32 %v498, %v500
    %v502 = vadd.f32 %v498, %v501
    %vm503 = vweird.f32 %v494
    %vm504 = vweird.f32 %v498
    %vm505 = vmor %vm503, %vm504
    %v506 = vsel %vm505, %v498, %v502
    %v507 = vand.u32 2147483647, %v494
    %vm508 = vcmp.eq.f32.partialorder %v507, 8.507059e+37
    %v509 = vand.u32 %v494, 2147483648
    %v510 = vor.u32 1.1754944e-38, %v509
    %v511 = vsel %vm508, %v510, %v506
    %v512 = vmul.f32 %v489, %v511
    %v513 = vrcp.pop %v497
    %v514 = vmul.f32 %v497, %v513
    %v515 = vsub.f32 1.0, %v514
    %v516 = vmul.f32 %v513, %v515
    %v517 = vadd.f32 %v513, %v516
    %vm518 = vweird.f32 %v497
    %vm519 = vweird.f32 %v513
    %vm520 = vmor %vm518, %vm519
    %v521 = vsel %vm520, %v513, %v517
    %v522 = vand.u32 2147483647, %v497
    %vm523 = vcmp.eq.f32.partialorder %v522, 8.507059e+37
    %v524 = vand.u32 %v497, 2147483648
    %v525 = vor.u32 1.1754944e-38, %v524
    %v526 = vsel %vm523, %v525, %v521
    %v527 = vmul.f32 %v491, %v526
    %529 = vrot.lane.b32.xlu0 %v267, 96
    %v530 = vpop.permute.xlu0 %529
    %v533 = vsel %vm327, %v512, 0
    %535 = vmatpush.msra.mxu0 0.0
    %536 = vmatpush.msra.mxu0 0.0
    %537 = vmatpush.msra.mxu0 0.0
    %538 = vmatpush.msra.mxu0 0.0
    %539 = vmatpush.msra.mxu0 0.0
    %540 = vmatpush.msra.mxu0 0.0
    %541 = vmatpush.msra.mxu0 0.0
    %542 = vmatpush.msra.mxu0 0.0
    %543 = vmatpush.msra.mxu0 0.0
    %544 = vmatpush.msra.mxu0 0.0
    %545 = vmatpush.msra.mxu0 0.0
    %546 = vmatpush.msra.mxu0 0.0
    %547 = vmatpush.msra.mxu0 0.0
    %548 = vmatpush.msra.mxu0 0.0
    %549 = vmatpush.msra.mxu0 0.0
    %550 = vmatpush.msra.mxu0 %v530
    %551 = vmatmul.f32.gmra.mxu0 %v533
    %v552 = vpop.f32.mrf.mxu0
    %v553 = vadd.f32 0.0, %v552
    %554 = vdwg.mxu0
    %556 = vrot.lane.b32.xlu0 %v270, 96
    %v557 = vpop.permute.xlu0 %556
    %v560 = vsel %vm327, %v527, 0
    %562 = vmatpush.msra.mxu0 0.0
    %563 = vmatpush.msra.mxu0 0.0
    %564 = vmatpush.msra.mxu0 0.0
    %565 = vmatpush.msra.mxu0 0.0
    %566 = vmatpush.msra.mxu0 0.0
    %567 = vmatpush.msra.mxu0 0.0
    %568 = vmatpush.msra.mxu0 0.0
    %569 = vmatpush.msra.mxu0 0.0
    %570 = vmatpush.msra.mxu0 0.0
    %571 = vmatpush.msra.mxu0 0.0
    %572 = vmatpush.msra.mxu0 0.0
    %573 = vmatpush.msra.mxu0 0.0
    %574 = vmatpush.msra.mxu0 0.0
    %575 = vmatpush.msra.mxu0 0.0
    %576 = vmatpush.msra.mxu0 0.0
    %577 = vmatpush.msra.mxu0 %v557
    %578 = vmatmul.f32.gmra.mxu0 %v560
    %v579 = vpop.f32.mrf.mxu0
    %v580 = vadd.f32 0.0, %v579
    %581 = vdwg.mxu0
    %582 = vrot.lane.b32.xlu0 %v189, 64
    %v583 = vpop.permute.xlu0 %582
    %584 = vrot.lane.b32.xlu0 %v244, 64
    %v585 = vpop.permute.xlu0 %584
    %v586 = vsel %vm272, %v583, 0
    %v588 = vsel %vm272, %v585, 0
    %590 = vmatpush.xpose.msra.mxu0 0.0
    %591 = vmatpush.xpose.msra.mxu0 0.0
    %592 = vmatpush.xpose.msra.mxu0 0.0
    %593 = vmatpush.xpose.msra.mxu0 0.0
    %594 = vmatpush.xpose.msra.mxu0 0.0
    %595 = vmatpush.xpose.msra.mxu0 0.0
    %596 = vmatpush.xpose.msra.mxu0 0.0
    %597 = vmatpush.xpose.msra.mxu0 0.0
    %598 = vmatpush.xpose.msra.mxu0 0.0
    %599 = vmatpush.xpose.msra.mxu0 0.0
    %600 = vmatpush.xpose.msra.mxu0 0.0
    %601 = vmatpush.xpose.msra.mxu0 0.0
    %602 = vmatpush.xpose.msra.mxu0 0.0
    %603 = vmatpush.xpose.msra.mxu0 0.0
    %604 = vmatpush.xpose.msra.mxu0 0.0
    %605 = vmatpush.xpose.msra.mxu0 %v588
    %606 = vmatmul.f32.gmra.mxu0 %v586
    %v607 = vpop.f32.mrf.mxu0
    %v608 = vadd.f32 0.0, %v607
    %609 = vdwg.mxu0
    %610 = vrot.lane.b32.xlu0 %v192, 64
    %v611 = vpop.permute.xlu0 %610
    %612 = vrot.lane.b32.xlu0 %v247, 64
    %v613 = vpop.permute.xlu0 %612
    %v614 = vsel %vm272, %v611, 0
    %v616 = vsel %vm272, %v613, 0
    %618 = vmatpush.xpose.msra.mxu0 0.0
    %619 = vmatpush.xpose.msra.mxu0 0.0
    %620 = vmatpush.xpose.msra.mxu0 0.0
    %621 = vmatpush.xpose.msra.mxu0 0.0
    %622 = vmatpush.xpose.msra.mxu0 0.0
    %623 = vmatpush.xpose.msra.mxu0 0.0
    %624 = vmatpush.xpose.msra.mxu0 0.0
    %625 = vmatpush.xpose.msra.mxu0 0.0
    %626 = vmatpush.xpose.msra.mxu0 0.0
    %627 = vmatpush.xpose.msra.mxu0 0.0
    %628 = vmatpush.xpose.msra.mxu0 0.0
    %629 = vmatpush.xpose.msra.mxu0 0.0
    %630 = vmatpush.xpose.msra.mxu0 0.0
    %631 = vmatpush.xpose.msra.mxu0 0.0
    %632 = vmatpush.xpose.msra.mxu0 0.0
    %633 = vmatpush.xpose.msra.mxu0 %v616
    %634 = vmatmul.f32.gmra.mxu0 %v614
    %v635 = vpop.f32.mrf.mxu0
    %v636 = vadd.f32 0.0, %v635
    %637 = vdwg.mxu0
    %v638 = vmul.f32 %v608, 0.088388346
    %v639 = vmul.f32 %v636, 0.088388346
    %v640 = vsel %vm327, %v638, -inf
    %641 = vmax.xlane.f32.xlu0 %v640
    %v642 = vpop.xlane.xlu0 %641
    %v643 = vsel %vm327, %v639, -inf
    %644 = vmax.xlane.f32.xlu0 %v643
    %v645 = vpop.xlane.xlu0 %644
    %v646 = vsub.f32 %v638, %v642
    %v647 = vsub.f32 %v639, %v645
    %v648 = vmul.f32 %v646, 1.442695
    %v649 = vpow.pop %v648
    %v650 = vmul.f32 %v647, 1.442695
    %v651 = vpow.pop %v650
    %v652 = vsel %vm327, %v649, 0.0
    %653 = vadd.xlane.f32.xlu0 %v652
    %v654 = vpop.xlane.xlu0 %653
    %v655 = vsel %vm327, %v651, 0.0
    %656 = vadd.xlane.f32.xlu0 %v655
    %v657 = vpop.xlane.xlu0 %656
    %v658 = vrcp.pop %v654
    %v659 = vmul.f32 %v654, %v658
    %v660 = vsub.f32 1.0, %v659
    %v661 = vmul.f32 %v658, %v660
    %v662 = vadd.f32 %v658, %v661
    %vm663 = vweird.f32 %v654
    %vm664 = vweird.f32 %v658
    %vm665 = vmor %vm663, %vm664
    %v666 = vsel %vm665, %v658, %v662
    %v667 = vand.u32 2147483647, %v654
    %vm668 = vcmp.eq.f32.partialorder %v667, 8.507059e+37
    %v669 = vand.u32 %v654, 2147483648
    %v670 = vor.u32 1.1754944e-38, %v669
    %v671 = vsel %vm668, %v670, %v666
    %v672 = vmul.f32 %v649, %v671
    %v673 = vrcp.pop %v657
    %v674 = vmul.f32 %v657, %v673
    %v675 = vsub.f32 1.0, %v674
    %v676 = vmul.f32 %v673, %v675
    %v677 = vadd.f32 %v673, %v676
    %vm678 = vweird.f32 %v657
    %vm679 = vweird.f32 %v673
    %vm680 = vmor %vm678, %vm679
    %v681 = vsel %vm680, %v673, %v677
    %v682 = vand.u32 2147483647, %v657
    %vm683 = vcmp.eq.f32.partialorder %v682, 8.507059e+37
    %v684 = vand.u32 %v657, 2147483648
    %v685 = vor.u32 1.1754944e-38, %v684
    %v686 = vsel %vm683, %v685, %v681
    %v687 = vmul.f32 %v651, %v686
    %688 = vrot.lane.b32.xlu0 %v267, 64
    %v689 = vpop.permute.xlu0 %688
    %v692 = vsel %vm327, %v672, 0
    %694 = vmatpush.msra.mxu0 0.0
    %695 = vmatpush.msra.mxu0 0.0
    %696 = vmatpush.msra.mxu0 0.0
    %697 = vmatpush.msra.mxu0 0.0
    %698 = vmatpush.msra.mxu0 0.0
    %699 = vmatpush.msra.mxu0 0.0
    %700 = vmatpush.msra.mxu0 0.0
    %701 = vmatpush.msra.mxu0 0.0
    %702 = vmatpush.msra.mxu0 0.0
    %703 = vmatpush.msra.mxu0 0.0
    %704 = vmatpush.msra.mxu0 0.0
    %705 = vmatpush.msra.mxu0 0.0
    %706 = vmatpush.msra.mxu0 0.0
    %707 = vmatpush.msra.mxu0 0.0
    %708 = vmatpush.msra.mxu0 0.0
    %709 = vmatpush.msra.mxu0 %v689
    %710 = vmatmul.f32.gmra.mxu0 %v692
    %v711 = vpop.f32.mrf.mxu0
    %v712 = vadd.f32 0.0, %v711
    %713 = vdwg.mxu0
    %714 = vrot.lane.b32.xlu0 %v270, 64
    %v715 = vpop.permute.xlu0 %714
    %v718 = vsel %vm327, %v687, 0
    %720 = vmatpush.msra.mxu0 0.0
    %721 = vmatpush.msra.mxu0 0.0
    %722 = vmatpush.msra.mxu0 0.0
    %723 = vmatpush.msra.mxu0 0.0
    %724 = vmatpush.msra.mxu0 0.0
    %725 = vmatpush.msra.mxu0 0.0
    %726 = vmatpush.msra.mxu0 0.0
    %727 = vmatpush.msra.mxu0 0.0
    %728 = vmatpush.msra.mxu0 0.0
    %729 = vmatpush.msra.mxu0 0.0
    %730 = vmatpush.msra.mxu0 0.0
    %731 = vmatpush.msra.mxu0 0.0
    %732 = vmatpush.msra.mxu0 0.0
    %733 = vmatpush.msra.mxu0 0.0
    %734 = vmatpush.msra.mxu0 0.0
    %735 = vmatpush.msra.mxu0 %v715
    %736 = vmatmul.f32.gmra.mxu0 %v718
    %v737 = vpop.f32.mrf.mxu0
    %v738 = vadd.f32 0.0, %v737
    %739 = vdwg.mxu0
    %740 = vrot.lane.b32.xlu0 %v189, 32
    %v741 = vpop.permute.xlu0 %740
    %742 = vrot.lane.b32.xlu0 %v244, 32
    %v743 = vpop.permute.xlu0 %742
    %v744 = vsel %vm272, %v741, 0
    %v746 = vsel %vm272, %v743, 0
    %748 = vmatpush.xpose.msra.mxu0 0.0
    %749 = vmatpush.xpose.msra.mxu0 0.0
    %750 = vmatpush.xpose.msra.mxu0 0.0
    %751 = vmatpush.xpose.msra.mxu0 0.0
    %752 = vmatpush.xpose.msra.mxu0 0.0
    %753 = vmatpush.xpose.msra.mxu0 0.0
    %754 = vmatpush.xpose.msra.mxu0 0.0
    %755 = vmatpush.xpose.msra.mxu0 0.0
    %756 = vmatpush.xpose.msra.mxu0 0.0
    %757 = vmatpush.xpose.msra.mxu0 0.0
    %758 = vmatpush.xpose.msra.mxu0 0.0
    %759 = vmatpush.xpose.msra.mxu0 0.0
    %760 = vmatpush.xpose.msra.mxu0 0.0
    %761 = vmatpush.xpose.msra.mxu0 0.0
    %762 = vmatpush.xpose.msra.mxu0 0.0
    %763 = vmatpush.xpose.msra.mxu0 %v746
    %764 = vmatmul.f32.gmra.mxu0 %v744
    %v765 = vpop.f32.mrf.mxu0
    %v766 = vadd.f32 0.0, %v765
    %767 = vdwg.mxu0
    %768 = vrot.lane.b32.xlu0 %v192, 32
    %v769 = vpop.permute.xlu0 %768
    %770 = vrot.lane.b32.xlu0 %v247, 32
    %v771 = vpop.permute.xlu0 %770
    %v772 = vsel %vm272, %v769, 0
    %v774 = vsel %vm272, %v771, 0
    %776 = vmatpush.xpose.msra.mxu0 0.0
    %777 = vmatpush.xpose.msra.mxu0 0.0
    %778 = vmatpush.xpose.msra.mxu0 0.0
    %779 = vmatpush.xpose.msra.mxu0 0.0
    %780 = vmatpush.xpose.msra.mxu0 0.0
    %781 = vmatpush.xpose.msra.mxu0 0.0
    %782 = vmatpush.xpose.msra.mxu0 0.0
    %783 = vmatpush.xpose.msra.mxu0 0.0
    %784 = vmatpush.xpose.msra.mxu0 0.0
    %785 = vmatpush.xpose.msra.mxu0 0.0
    %786 = vmatpush.xpose.msra.mxu0 0.0
    %787 = vmatpush.xpose.msra.mxu0 0.0
    %788 = vmatpush.xpose.msra.mxu0 0.0
    %789 = vmatpush.xpose.msra.mxu0 0.0
    %790 = vmatpush.xpose.msra.mxu0 0.0
    %791 = vmatpush.xpose.msra.mxu0 %v774
    %792 = vmatmul.f32.gmra.mxu0 %v772
    %v793 = vpop.f32.mrf.mxu0
    %v794 = vadd.f32 0.0, %v793
    %795 = vdwg.mxu0
    %v796 = vmul.f32 %v766, 0.088388346
    %v797 = vmul.f32 %v794, 0.088388346
    %v798 = vsel %vm327, %v796, -inf
    %799 = vmax.xlane.f32.xlu0 %v798
    %v800 = vpop.xlane.xlu0 %799
    %v801 = vsel %vm327, %v797, -inf
    %802 = vmax.xlane.f32.xlu0 %v801
    %v803 = vpop.xlane.xlu0 %802
    %v804 = vsub.f32 %v796, %v800
    %v805 = vsub.f32 %v797, %v803
    %v806 = vmul.f32 %v804, 1.442695
    %v807 = vpow.pop %v806
    %v808 = vmul.f32 %v805, 1.442695
    %v809 = vpow.pop %v808
    %v810 = vsel %vm327, %v807, 0.0
    %811 = vadd.xlane.f32.xlu0 %v810
    %v812 = vpop.xlane.xlu0 %811
    %v813 = vsel %vm327, %v809, 0.0
    %814 = vadd.xlane.f32.xlu0 %v813
    %v815 = vpop.xlane.xlu0 %814
    %v816 = vrcp.pop %v812
    %v817 = vmul.f32 %v812, %v816
    %v818 = vsub.f32 1.0, %v817
    %v819 = vmul.f32 %v816, %v818
    %v820 = vadd.f32 %v816, %v819
    %vm821 = vweird.f32 %v812
    %vm822 = vweird.f32 %v816
    %vm823 = vmor %vm821, %vm822
    %v824 = vsel %vm823, %v816, %v820
    %v825 = vand.u32 2147483647, %v812
    %vm826 = vcmp.eq.f32.partialorder %v825, 8.507059e+37
    %v827 = vand.u32 %v812, 2147483648
    %v828 = vor.u32 1.1754944e-38, %v827
    %v829 = vsel %vm826, %v828, %v824
    %v830 = vmul.f32 %v807, %v829
    %v831 = vrcp.pop %v815
    %v832 = vmul.f32 %v815, %v831
    %v833 = vsub.f32 1.0, %v832
    %v834 = vmul.f32 %v831, %v833
    %v835 = vadd.f32 %v831, %v834
    %vm836 = vweird.f32 %v815
    %vm837 = vweird.f32 %v831
    %vm838 = vmor %vm836, %vm837
    %v839 = vsel %vm838, %v831, %v835
    %v840 = vand.u32 2147483647, %v815
    %vm841 = vcmp.eq.f32.partialorder %v840, 8.507059e+37
    %v842 = vand.u32 %v815, 2147483648
    %v843 = vor.u32 1.1754944e-38, %v842
    %v844 = vsel %vm841, %v843, %v839
    %v845 = vmul.f32 %v809, %v844
    %846 = vrot.lane.b32.xlu0 %v267, 32
    %v847 = vpop.permute.xlu0 %846
    %v850 = vsel %vm327, %v830, 0
    %852 = vmatpush.msra.mxu0 0.0
    %853 = vmatpush.msra.mxu0 0.0
    %854 = vmatpush.msra.mxu0 0.0
    %855 = vmatpush.msra.mxu0 0.0
    %856 = vmatpush.msra.mxu0 0.0
    %857 = vmatpush.msra.mxu0 0.0
    %858 = vmatpush.msra.mxu0 0.0
    %859 = vmatpush.msra.mxu0 0.0
    %860 = vmatpush.msra.mxu0 0.0
    %861 = vmatpush.msra.mxu0 0.0
    %862 = vmatpush.msra.mxu0 0.0
    %863 = vmatpush.msra.mxu0 0.0
    %864 = vmatpush.msra.mxu0 0.0
    %865 = vmatpush.msra.mxu0 0.0
    %866 = vmatpush.msra.mxu0 0.0
    %867 = vmatpush.msra.mxu0 %v847
    %868 = vmatmul.f32.gmra.mxu0 %v850
    %v869 = vpop.f32.mrf.mxu0
    %v870 = vadd.f32 0.0, %v869
    %871 = vdwg.mxu0
    %872 = vrot.lane.b32.xlu0 %v270, 32
    %v873 = vpop.permute.xlu0 %872
    %v876 = vsel %vm327, %v845, 0
    %878 = vmatpush.msra.mxu0 0.0
    %879 = vmatpush.msra.mxu0 0.0
    %880 = vmatpush.msra.mxu0 0.0
    %881 = vmatpush.msra.mxu0 0.0
    %882 = vmatpush.msra.mxu0 0.0
    %883 = vmatpush.msra.mxu0 0.0
    %884 = vmatpush.msra.mxu0 0.0
    %885 = vmatpush.msra.mxu0 0.0
    %886 = vmatpush.msra.mxu0 0.0
    %887 = vmatpush.msra.mxu0 0.0
    %888 = vmatpush.msra.mxu0 0.0
    %889 = vmatpush.msra.mxu0 0.0
    %890 = vmatpush.msra.mxu0 0.0
    %891 = vmatpush.msra.mxu0 0.0
    %892 = vmatpush.msra.mxu0 0.0
    %893 = vmatpush.msra.mxu0 %v873
    %894 = vmatmul.f32.gmra.mxu0 %v876
    %v895 = vpop.f32.mrf.mxu0
    %v896 = vadd.f32 0.0, %v895
    %897 = vdwg.mxu0
    %900 = vrot.lane.b32.xlu0 %v553, 32
    %v901 = vpop.permute.xlu0 %900
    %902 = vrot.lane.b32.xlu0 %v580, 32
    %v903 = vpop.permute.xlu0 %902
    %908 = vrot.lane.b32.xlu0 %v712, 64
    %v909 = vpop.permute.xlu0 %908
    %910 = vrot.lane.b32.xlu0 %v738, 64
    %v911 = vpop.permute.xlu0 %910
    %916 = vrot.lane.b32.xlu0 %v870, 96
    %v917 = vpop.permute.xlu0 %916
    %918 = vrot.lane.b32.xlu0 %v896, 96
    %v919 = vpop.permute.xlu0 %918
    %v922 = vsel %vm272, %v397, %v901
    %v923 = vsel %vm272, %v420, %v903
    %vm924 = vcmask 523264
    %v925 = vsel %vm924, %v922, %v909
    %v926 = vsel %vm924, %v923, %v911
    %vm927 = vcmask 785408
    %v928 = vsel %vm927, %v925, %v917
    %v929 = vsel %vm927, %v926, %v919
    %v930 = vld [vmem:[%s6] sm:$0xff]
    %v931 = vld [vmem:[%s6 + $0x8] sm:$0xff]
    %v932 = vld [vmem:[%s6 + $0x10] sm:$0xff]
    %v933 = vld [vmem:[%s6 + $0x18] sm:$0xff]
    %v934 = vld [vmem:[%s6 + $0x20] sm:$0xff]
    %v935 = vld [vmem:[%s6 + $0x28] sm:$0xff]
    %v936 = vld [vmem:[%s6 + $0x30] sm:$0xff]
    %v937 = vld [vmem:[%s6 + $0x38] sm:$0xff]
    %v938 = vld [vmem:[%s6 + $0x40] sm:$0xff]
    %v939 = vld [vmem:[%s6 + $0x48] sm:$0xff]
    %v940 = vld [vmem:[%s6 + $0x50] sm:$0xff]
    %v941 = vld [vmem:[%s6 + $0x58] sm:$0xff]
    %v942 = vld [vmem:[%s6 + $0x60] sm:$0xff]
    %v943 = vld [vmem:[%s6 + $0x68] sm:$0xff]
    %v944 = vld [vmem:[%s6 + $0x70] sm:$0xff]
    %v945 = vld [vmem:[%s6 + $0x78] sm:$0xff]
    %v946 = vld [vmem:[%s7] sm:$0x1]
    %v948 = vperm.slane %v946, 0
    %950 = vmatpush.msra.mxu0 %v945
    %951 = vmatpush.msra.mxu0 %v944
    %952 = vmatpush.msra.mxu0 %v943
    %953 = vmatpush.msra.mxu0 %v942
    %954 = vmatpush.msra.mxu0 %v941
    %955 = vmatpush.msra.mxu0 %v940
    %956 = vmatpush.msra.mxu0 %v939
    %957 = vmatpush.msra.mxu0 %v938
    %958 = vmatpush.msra.mxu0 %v937
    %959 = vmatpush.msra.mxu0 %v936
    %960 = vmatpush.msra.mxu0 %v935
    %961 = vmatpush.msra.mxu0 %v934
    %962 = vmatpush.msra.mxu0 %v933
    %963 = vmatpush.msra.mxu0 %v932
    %964 = vmatpush.msra.mxu0 %v931
    %965 = vmatpush.msra.mxu0 %v930
    %966 = vmatmul.f32.gmra.mxu0 %v928
    %v967 = vpop.f32.mrf.mxu0
    %v968 = vadd.f32 %v948, %v967
    %969 = vmatmul.f32.gmra.mxu0 %v929
    %v970 = vpop.f32.mrf.mxu0
    %v971 = vadd.f32 %v948, %v970
    %972 = vdwg.mxu0
    %v973 = vadd.f32 %v48, %v968
    %v974 = vadd.f32 %v49, %v971
    %v975 = vld [vmem:[%s8] sm:$0x1]
    %v976 = vld [vmem:[%s9] sm:$0x1]
    %977 = vadd.xlane.f32.xlu0 %v973
    %v978 = vpop.xlane.xlu0 %977
    %979 = vadd.xlane.f32.xlu0 %v974
    %v980 = vpop.xlane.xlu0 %979
    %v981 = vmul.f32 %v978, %v64
    %v982 = vmul.f32 %v980, %v64
    %v983 = vsub.f32 %v973, %v981
    %v984 = vsub.f32 %v974, %v982
    %v985 = vmul.f32 %v983, %v983
    %v986 = vmul.f32 %v984, %v984
    %987 = vadd.xlane.f32.xlu0 %v985
    %v988 = vpop.xlane.xlu0 %987
    %989 = vadd.xlane.f32.xlu0 %v986
    %v990 = vpop.xlane.xlu0 %989
    %v991 = vmul.f32 %v988, %v64
    %v992 = vmul.f32 %v990, %v64
    %v993 = vadd.f32 %v991, 1e-05
    %v994 = vadd.f32 %v992, 1e-05
    %v995 = vrsqrt.pop %v993
    %v996 = vmul.f32 %v995, %v993
    %v997 = vmul.f32 %v996, %v995
    %v998 = vmul.f32 0.5, %v997
    %v999 = vsub.f32 1.5, %v998
    %v1000 = vmul.f32 %v995, %v999
    %vm1001 = vweird.f32 %v993
    %vm1002 = vweird.f32 %v995
    %vm1003 = vmor %vm1001, %vm1002
    %v1004 = vsel %vm1003, %v995, %v1000
    %v1005 = vrsqrt.pop %v994
    %v1006 = vmul.f32 %v1005, %v994
    %v1007 = vmul.f32 %v1006, %v1005
    %v1008 = vmul.f32 0.5, %v1007
    %v1009 = vsub.f32 1.5, %v1008
    %v1010 = vmul.f32 %v1005, %v1009
    %vm1011 = vweird.f32 %v994
    %vm1012 = vweird.f32 %v1005
    %vm1013 = vmor %vm1011, %vm1012
    %v1014 = vsel %vm1013, %v1005, %v1010
    %v1015 = vmul.f32 %v983, %v1004
    %v1016 = vmul.f32 %v984, %v1014
    %v1018 = vperm.slane %v975, 0
    %v1020 = vmul.f32 %v1015, %v1018
    %v1021 = vmul.f32 %v1016, %v1018
    %v1023 = vperm.slane %v976, 0
    %v1025 = vadd.f32 %v1020, %v1023
    %v1026 = vadd.f32 %v1021, %v1023
    %v1027 = vld [vmem:[%s10] sm:$0xff]
    %v1028 = vld [vmem:[%s10 + $0x8] sm:$0xff]
    %v1029 = vld [vmem:[%s10 + $0x10] sm:$0xff]
    %v1030 = vld [vmem:[%s10 + $0x18] sm:$0xff]
    %v1031 = vld [vmem:[%s10 + $0x20] sm:$0xff]
    %v1032 = vld [vmem:[%s10 + $0x28] sm:$0xff]
    %v1033 = vld [vmem:[%s10 + $0x30] sm:$0xff]
    %v1034 = vld [vmem:[%s10 + $0x38] sm:$0xff]
    %v1035 = vld [vmem:[%s10 + $0x40] sm:$0xff]
    %v1036 = vld [vmem:[%s10 + $0x48] sm:$0xff]
    %v1037 = vld [vmem:[%s10 + $0x50] sm:$0xff]
    %v1038 = vld [vmem:[%s10 + $0x58] sm:$0xff]
    %v1039 = vld [vmem:[%s10 + $0x60] sm:$0xff]
    %v1040 = vld [vmem:[%s10 + $0x68] sm:$0xff]
    %v1041 = vld [vmem:[%s10 + $0x70] sm:$0xff]
    %v1042 = vld [vmem:[%s10 + $0x78] sm:$0xff]
    %v1043 = vld [vmem:[%s10 + $0x80] sm:$0xff]
    %v1044 = vld [vmem:[%s10 + $0x88] sm:$0xff]
    %v1045 = vld [vmem:[%s10 + $0x90] sm:$0xff]
    %v1046 = vld [vmem:[%s10 + $0x98] sm:$0xff]
    %v1047 = vld [vmem:[%s10 + $0xa0] sm:$0xff]
    %v1048 = vld [vmem:[%s10 + $0xa8] sm:$0xff]
    %v1049 = vld [vmem:[%s10 + $0xb0] sm:$0xff]
    %v1050 = vld [vmem:[%s10 + $0xb8] sm:$0xff]
    %v1051 = vld [vmem:[%s10 + $0xc0] sm:$0xff]
    %v1052 = vld [vmem:[%s10 + $0xc8] sm:$0xff]
    %v1053 = vld [vmem:[%s10 + $0xd0] sm:$0xff]
    %v1054 = vld [vmem:[%s10 + $0xd8] sm:$0xff]
    %v1055 = vld [vmem:[%s10 + $0xe0] sm:$0xff]
    %v1056 = vld [vmem:[%s10 + $0xe8] sm:$0xff]
    %v1057 = vld [vmem:[%s10 + $0xf0] sm:$0xff]
    %v1058 = vld [vmem:[%s10 + $0xf8] sm:$0xff]
    %v1059 = vld [vmem:[%s11] sm:$0x3]
    %v1061 = vperm.slane %v1059, 0
    %v1062 = vperm.slane %v1059, 1
    %1065 = vmatpush.msra.mxu0 %v1057
    %1066 = vmatpush.msra.mxu0 %v1055
    %1067 = vmatpush.msra.mxu0 %v1053
    %1068 = vmatpush.msra.mxu0 %v1051
    %1069 = vmatpush.msra.mxu0 %v1049
    %1070 = vmatpush.msra.mxu0 %v1047
    %1071 = vmatpush.msra.mxu0 %v1045
    %1072 = vmatpush.msra.mxu0 %v1043
    %1073 = vmatpush.msra.mxu0 %v1041
    %1074 = vmatpush.msra.mxu0 %v1039
    %1075 = vmatpush.msra.mxu0 %v1037
    %1076 = vmatpush.msra.mxu0 %v1035
    %1077 = vmatpush.msra.mxu0 %v1033
    %1078 = vmatpush.msra.mxu0 %v1031
    %1079 = vmatpush.msra.mxu0 %v1029
    %1080 = vmatpush.msra.mxu0 %v1027
    %1081 = vmatmul.f32.gmra.mxu0 %v1025
    %v1082 = vpop.f32.mrf.mxu0
    %v1083 = vadd.f32 %v1061, %v1082
    %1084 = vmatmul.f32.gmra.mxu0 %v1026
    %v1085 = vpop.f32.mrf.mxu0
    %v1086 = vadd.f32 %v1061, %v1085
    %1087 = vdwg.mxu0
    %1088 = vmatpush.msra.mxu0 %v1058
    %1089 = vmatpush.msra.mxu0 %v1056
    %1090 = vmatpush.msra.mxu0 %v1054
    %1091 = vmatpush.msra.mxu0 %v1052
    %1092 = vmatpush.msra.mxu0 %v1050
    %1093 = vmatpush.msra.mxu0 %v1048
    %1094 = vmatpush.msra.mxu0 %v1046
    %1095 = vmatpush.msra.mxu0 %v1044
    %1096 = vmatpush.msra.mxu0 %v1042
    %1097 = vmatpush.msra.mxu0 %v1040
    %1098 = vmatpush.msra.mxu0 %v1038
    %1099 = vmatpush.msra.mxu0 %v1036
    %1100 = vmatpush.msra.mxu0 %v1034
    %1101 = vmatpush.msra.mxu0 %v1032
    %1102 = vmatpush.msra.mxu0 %v1030
    %1103 = vmatpush.msra.mxu0 %v1028
    %1104 = vmatmul.f32.gmra.mxu0 %v1025
    %v1105 = vpop.f32.mrf.mxu0
    %v1106 = vadd.f32 %v1062, %v1105
    %1107 = vmatmul.f32.gmra.mxu0 %v1026
    %v1108 = vpop.f32.mrf.mxu0
    %v1109 = vadd.f32 %v1062, %v1108
    %1110 = vdwg.mxu0
    %v1111 = vmul.f32 %v1083, 0.5
    %v1112 = vmul.f32 %v1106, 0.5
    %v1113 = vmul.f32 %v1086, 0.5
    %v1114 = vmul.f32 %v1109, 0.5
    %v1115 = vmul.f32 %v1083, 0.70710677
    %v1116 = vmul.f32 %v1106, 0.70710677
    %v1117 = vmul.f32 %v1086, 0.70710677
    %v1118 = vmul.f32 %v1109, 0.70710677
    %vm1119 = vcmp.ge.f32.partialorder %v1115, 0.0
    %vm1120 = vcmp.ge.f32.partialorder %v1116, 0.0
    %vm1121 = vcmp.ge.f32.partialorder %v1117, 0.0
    %vm1122 = vcmp.ge.f32.partialorder %v1118, 0.0
    %v1123 = vsel %vm1119, 1.0, -1.0
    %v1124 = vsel %vm1120, 1.0, -1.0
    %v1125 = vsel %vm1121, 1.0, -1.0
    %v1126 = vsel %vm1122, 1.0, -1.0
    %v1127 = vand.u32 2147483647, %v1115
    %v1128 = vand.u32 2147483647, %v1116
    %v1129 = vand.u32 2147483647, %v1117
    %v1130 = vand.u32 2147483647, %v1118
    %v1131 = vmul.f32 %v1127, 0.3275911
    %v1132 = vmul.f32 %v1128, 0.3275911
    %v1133 = vmul.f32 %v1129, 0.3275911
    %v1134 = vmul.f32 %v1130, 0.3275911
    %v1135 = vadd.f32 %v1131, 1.0
    %v1136 = vadd.f32 %v1132, 1.0
    %v1137 = vadd.f32 %v1133, 1.0
    %v1138 = vadd.f32 %v1134, 1.0
    %v1139 = vrcp.pop %v1135
    %v1140 = vmul.f32 %v1135, %v1139
    %v1141 = vsub.f32 1.0, %v1140
    %v1142 = vmul.f32 %v1139, %v1141
    %v1143 = vadd.f32 %v1139, %v1142
    %vm1144 = vweird.f32 %v1135
    %vm1145 = vweird.f32 %v1139
    %vm1146 = vmor %vm1144, %vm1145
    %v1147 = vsel %vm1146, %v1139, %v1143
    %v1148 = vand.u32 2147483647, %v1135
    %vm1149 = vcmp.eq.f32.partialorder %v1148, 8.507059e+37
    %v1150 = vand.u32 %v1135, 2147483648
    %v1151 = vor.u32 1.1754944e-38, %v1150
    %v1152 = vsel %vm1149, %v1151, %v1147
    %v1153 = vmul.f32 1.0, %v1152
    %v1154 = vrcp.pop %v1136
    %v1155 = vmul.f32 %v1136, %v1154
    %v1156 = vsub.f32 1.0, %v1155
    %v1157 = vmul.f32 %v1154, %v1156
    %v1158 = vadd.f32 %v1154, %v1157
    %vm1159 = vweird.f32 %v1136
    %vm1160 = vweird.f32 %v1154
    %vm1161 = vmor %vm1159, %vm1160
    %v1162 = vsel %vm1161, %v1154, %v1158
    %v1163 = vand.u32 2147483647, %v1136
    %vm1164 = vcmp.eq.f32.partialorder %v1163, 8.507059e+37
    %v1165 = vand.u32 %v1136, 2147483648
    %v1166 = vor.u32 1.1754944e-38, %v1165
    %v1167 = vsel %vm1164, %v1166, %v1162
    %v1168 = vmul.f32 1.0, %v1167
    %v1169 = vrcp.pop %v1137
    %v1170 = vmul.f32 %v1137, %v1169
    %v1171 = vsub.f32 1.0, %v1170
    %v1172 = vmul.f32 %v1169, %v1171
    %v1173 = vadd.f32 %v1169, %v1172
    %vm1174 = vweird.f32 %v1137
    %vm1175 = vweird.f32 %v1169
    %vm1176 = vmor %vm1174, %vm1175
    %v1177 = vsel %vm1176, %v1169, %v1173
    %v1178 = vand.u32 2147483647, %v1137
    %vm1179 = vcmp.eq.f32.partialorder %v1178, 8.507059e+37
    %v1180 = vand.u32 %v1137, 2147483648
    %v1181 = vor.u32 1.1754944e-38, %v1180
    %v1182 = vsel %vm1179, %v1181, %v1177
    %v1183 = vmul.f32 1.0, %v1182
    %v1184 = vrcp.pop %v1138
    %v1185 = vmul.f32 %v1138, %v1184
    %v1186 = vsub.f32 1.0, %v1185
    %v1187 = vmul.f32 %v1184, %v1186
    %v1188 = vadd.f32 %v1184, %v1187
    %vm1189 = vweird.f32 %v1138
    %vm1190 = vweird.f32 %v1184
    %vm1191 = vmor %vm1189, %vm1190
    %v1192 = vsel %vm1191, %v1184, %v1188
    %v1193 = vand.u32 2147483647, %v1138
    %vm1194 = vcmp.eq.f32.partialorder %v1193, 8.507059e+37
    %v1195 = vand.u32 %v1138, 2147483648
    %v1196 = vor.u32 1.1754944e-38, %v1195
    %v1197 = vsel %vm1194, %v1196, %v1192
    %v1198 = vmul.f32 1.0, %v1197
    %v1199 = vmul.f32 %v1153, 1.0614054
    %v1200 = vmul.f32 %v1168, 1.0614054
    %v1201 = vmul.f32 %v1183, 1.0614054
    %v1202 = vmul.f32 %v1198, 1.0614054
    %v1203 = vadd.f32 %v1199, -1.4531521
    %v1204 = vadd.f32 %v1200, -1.4531521
    %v1205 = vadd.f32 %v1201, -1.4531521
    %v1206 = vadd.f32 %v1202, -1.4531521
    %v1207 = vmul.f32 %v1203, %v1153
    %v1208 = vmul.f32 %v1204, %v1168
    %v1209 = vmul.f32 %v1205, %v1183
    %v1210 = vmul.f32 %v1206, %v1198
    %v1211 = vadd.f32 %v1207, 1.4214138
    %v1212 = vadd.f32 %v1208, 1.4214138
    %v1213 = vadd.f32 %v1209, 1.4214138
    %v1214 = vadd.f32 %v1210, 1.4214138
    %v1215 = vmul.f32 %v1211, %v1153
    %v1216 = vmul.f32 %v1212, %v1168
    %v1217 = vmul.f32 %v1213, %v1183
    %v1218 = vmul.f32 %v1214, %v1198
    %v1219 = vadd.f32 %v1215, -0.28449672
    %v1220 = vadd.f32 %v1216, -0.28449672
    %v1221 = vadd.f32 %v1217, -0.28449672
    %v1222 = vadd.f32 %v1218, -0.28449672
    %v1223 = vmul.f32 %v1219, %v1153
    %v1224 = vmul.f32 %v1220, %v1168
    %v1225 = vmul.f32 %v1221, %v1183
    %v1226 = vmul.f32 %v1222, %v1198
    %v1227 = vadd.f32 %v1223, 0.2548296
    %v1228 = vadd.f32 %v1224, 0.2548296
    %v1229 = vadd.f32 %v1225, 0.2548296
    %v1230 = vadd.f32 %v1226, 0.2548296
    %v1231 = vmul.f32 %v1227, %v1153
    %v1232 = vmul.f32 %v1228, %v1168
    %v1233 = vmul.f32 %v1229, %v1183
    %v1234 = vmul.f32 %v1230, %v1198
    %v1235 = vsub.f32 0.0, %v1127
    %v1236 = vsub.f32 0.0, %v1128
    %v1237 = vsub.f32 0.0, %v1129
    %v1238 = vsub.f32 0.0, %v1130
    %v1239 = vmul.f32 %v1235, %v1127
    %v1240 = vmul.f32 %v1236, %v1128
    %v1241 = vmul.f32 %v1237, %v1129
    %v1242 = vmul.f32 %v1238, %v1130
    %v1243 = vmul.f32 %v1239, 1.442695
    %v1244 = vpow.pop %v1243
    %v1245 = vmul.f32 %v1240, 1.442695
    %v1246 = vpow.pop %v1245
    %v1247 = vmul.f32 %v1241, 1.442695
    %v1248 = vpow.pop %v1247
    %v1249 = vmul.f32 %v1242, 1.442695
    %v1250 = vpow.pop %v1249
    %v1251 = vmul.f32 %v1231, %v1244
    %v1252 = vmul.f32 %v1232, %v1246
    %v1253 = vmul.f32 %v1233, %v1248
    %v1254 = vmul.f32 %v1234, %v1250
    %v1255 = vsub.f32 1.0, %v1251
    %v1256 = vsub.f32 1.0, %v1252
    %v1257 = vsub.f32 1.0, %v1253
    %v1258 = vsub.f32 1.0, %v1254
    %v1259 = vmul.f32 %v1123, %v1255
    %v1260 = vmul.f32 %v1124, %v1256
    %v1261 = vmul.f32 %v1125, %v1257
    %v1262 = vmul.f32 %v1126, %v1258
    %v1263 = vadd.f32 %v1259, 1.0
    %v1264 = vadd.f32 %v1260, 1.0
    %v1265 = vadd.f32 %v1261, 1.0
    %v1266 = vadd.f32 %v1262, 1.0
    %v1267 = vmul.f32 %v1111, %v1263
    %v1268 = vmul.f32 %v1112, %v1264
    %v1269 = vmul.f32 %v1113, %v1265
    %v1270 = vmul.f32 %v1114, %v1266
    %v1271 = vld [vmem:[%s12] sm:$0xff]
    %v1272 = vld [vmem:[%s12 + $0x8] sm:$0xff]
    %v1273 = vld [vmem:[%s12 + $0x10] sm:$0xff]
    %v1274 = vld [vmem:[%s12 + $0x18] sm:$0xff]
    %v1275 = vld [vmem:[%s12 + $0x20] sm:$0xff]
    %v1276 = vld [vmem:[%s12 + $0x28] sm:$0xff]
    %v1277 = vld [vmem:[%s12 + $0x30] sm:$0xff]
    %v1278 = vld [vmem:[%s12 + $0x38] sm:$0xff]
    %v1279 = vld [vmem:[%s12 + $0x40] sm:$0xff]
    %v1280 = vld [vmem:[%s12 + $0x48] sm:$0xff]
    %v1281 = vld [vmem:[%s12 + $0x50] sm:$0xff]
    %v1282 = vld [vmem:[%s12 + $0x58] sm:$0xff]
    %v1283 = vld [vmem:[%s12 + $0x60] sm:$0xff]
    %v1284 = vld [vmem:[%s12 + $0x68] sm:$0xff]
    %v1285 = vld [vmem:[%s12 + $0x70] sm:$0xff]
    %v1286 = vld [vmem:[%s12 + $0x78] sm:$0xff]
    %v1287 = vld [vmem:[%s12 + $0x80] sm:$0xff]
    %v1288 = vld [vmem:[%s12 + $0x88] sm:$0xff]
    %v1289 = vld [vmem:[%s12 + $0x90] sm:$0xff]
    %v1290 = vld [vmem:[%s12 + $0x98] sm:$0xff]
    %v1291 = vld [vmem:[%s12 + $0xa0] sm:$0xff]
    %v1292 = vld [vmem:[%s12 + $0xa8] sm:$0xff]
    %v1293 = vld [vmem:[%s12 + $0xb0] sm:$0xff]
    %v1294 = vld [vmem:[%s12 + $0xb8] sm:$0xff]
    %v1295 = vld [vmem:[%s12 + $0xc0] sm:$0xff]
    %v1296 = vld [vmem:[%s12 + $0xc8] sm:$0xff]
    %v1297 = vld [vmem:[%s12 + $0xd0] sm:$0xff]
    %v1298 = vld [vmem:[%s12 + $0xd8] sm:$0xff]
    %v1299 = vld [vmem:[%s12 + $0xe0] sm:$0xff]
    %v1300 = vld [vmem:[%s12 + $0xe8] sm:$0xff]
    %v1301 = vld [vmem:[%s12 + $0xf0] sm:$0xff]
    %v1302 = vld [vmem:[%s12 + $0xf8] sm:$0xff]
    %v1303 = vld [vmem:[%s13] sm:$0x1]
    %v1305 = vperm.slane %v1303, 0
    %1307 = vmatpush.msra.mxu0 %v1286
    %1308 = vmatpush.msra.mxu0 %v1285
    %1309 = vmatpush.msra.mxu0 %v1284
    %1310 = vmatpush.msra.mxu0 %v1283
    %1311 = vmatpush.msra.mxu0 %v1282
    %1312 = vmatpush.msra.mxu0 %v1281
    %1313 = vmatpush.msra.mxu0 %v1280
    %1314 = vmatpush.msra.mxu0 %v1279
    %1315 = vmatpush.msra.mxu0 %v1278
    %1316 = vmatpush.msra.mxu0 %v1277
    %1317 = vmatpush.msra.mxu0 %v1276
    %1318 = vmatpush.msra.mxu0 %v1275
    %1319 = vmatpush.msra.mxu0 %v1274
    %1320 = vmatpush.msra.mxu0 %v1273
    %1321 = vmatpush.msra.mxu0 %v1272
    %1322 = vmatpush.msra.mxu0 %v1271
    %1323 = vmatmul.f32.gmra.mxu0 %v1267
    %v1324 = vpop.f32.mrf.mxu0
    %v1325 = vadd.f32 %v1305, %v1324
    %1326 = vmatmul.f32.gmra.mxu0 %v1269
    %v1327 = vpop.f32.mrf.mxu0
    %v1328 = vadd.f32 %v1305, %v1327
    %1329 = vdwg.mxu0
    %1330 = vmatpush.msra.mxu0 %v1302
    %1331 = vmatpush.msra.mxu0 %v1301
    %1332 = vmatpush.msra.mxu0 %v1300
    %1333 = vmatpush.msra.mxu0 %v1299
    %1334 = vmatpush.msra.mxu0 %v1298
    %1335 = vmatpush.msra.mxu0 %v1297
    %1336 = vmatpush.msra.mxu0 %v1296
    %1337 = vmatpush.msra.mxu0 %v1295
    %1338 = vmatpush.msra.mxu0 %v1294
    %1339 = vmatpush.msra.mxu0 %v1293
    %1340 = vmatpush.msra.mxu0 %v1292
    %1341 = vmatpush.msra.mxu0 %v1291
    %1342 = vmatpush.msra.mxu0 %v1290
    %1343 = vmatpush.msra.mxu0 %v1289
    %1344 = vmatpush.msra.mxu0 %v1288
    %1345 = vmatpush.msra.mxu0 %v1287
    %1346 = vmatmul.f32.gmra.mxu0 %v1268
    %v1347 = vpop.f32.mrf.mxu0
    %v1348 = vadd.f32 %v1325, %v1347
    %1349 = vmatmul.f32.gmra.mxu0 %v1270
    %v1350 = vpop.f32.mrf.mxu0
    %v1351 = vadd.f32 %v1328, %v1350
    %1352 = vdwg.mxu0
    %v1353 = vadd.f32 %v973, %v1348
    %v1354 = vadd.f32 %v974, %v1351
    %1355 = vst [vmem:[#allocation2] sm:$0xff] %v1353
    %1356 = vst [vmem:[#allocation2 + $0x8] sm:$0xff] %v1354
    // Predicated region
    $region58: #{transformer_decoder.3} parent=1 // pred_check
      _
    $region59: #{transformer_decoder.3} parent=1 // pred_check_branch
      %1358 = sbr.rel (0) target = $region61
    $region60: #{transformer_decoder.3} parent=1 // pred_region
      %1360 = vsyncadd [#allocation3], 0
      %s1361 = sshll.u32 [#allocation2], 4
      %s1362 = int_to_ptr.vmem [resolvable:$true] %s1361
      %s1363 = sshll.u32 %s14, 4
      %s1364 = int_to_ptr.hbm [resolvable:$true] %s1363
      %1369 = dma.vmem_to_hbm [thread:$0]  %s1362, 256, %s1364, [#allocation3], 128, 128, 8
    $region61: #{transformer_decoder.3} parent=1 // pred_fallthru
      _
    // Predicated region
    $region62: #{transformer_decoder.3} parent=1 // pred_check
      _
    $region63: #{transformer_decoder.3} parent=1 // pred_check_branch
      %1371 = sbr.rel (0) target = $region65
    $region64: #{transformer_decoder.3} parent=1 // pred_region
      %1373 = dma.done [#allocation3], 256
    $region65: #{transformer_decoder.3} parent=1 // pred_fallthru
      _
    %1374 = vsyncpa [#allocation3], 1

</llo_original>
